<compile_context>
chip_gen: v7x
topology: tpu7x:2x2x1
jax: 0.10.0
libtpu: 0.0.40
codegen_flags: <defaults>
</compile_context>

<pallas_src>
import functools

import jax
import jax.numpy as jnp
import numpy as np
from jax import lax
from jax.experimental import pallas as pl
from jax.experimental.pallas import tpu as pltpu

EPS = 1e-5


# ------------------------------- Pallas kernel -------------------------------


def _block_kernel(Bt, C_in, F, Cb, Ks, L,
                  x_ref,
                  wb1_ref, wf1_ref, b1_ref,
                  wb2_ref, wf2_ref, b2_ref,
                  wb3_ref, wf3_ref, b3_ref,
                  wres_ref, bres_ref,
                  out_ref,
                  zb_pad, s_ref, mx_pad):
    """Whole InceptionTime block (3 modules + residual) for Bt batch elements."""
    K1, K2, K3 = Ks
    p3 = K3 // 2
    C4 = 4 * F
    Cmx = mx_pad.shape[0]

    # Halo / edge init once per grid step; interiors are fully overwritten
    # before every read, so no full-buffer clears are needed.
    zb_pad[:, 0:p3] = jnp.zeros((Cb, p3), jnp.float32)
    zb_pad[:, p3 + L:] = jnp.zeros((Cb, p3), jnp.float32)
    mx_pad[:, 0:1] = jnp.full((Cmx, 1), -jnp.inf, jnp.float32)
    mx_pad[:, L + 1:] = jnp.full((Cmx, 1), -jnp.inf, jnp.float32)

    def module(a, wb_ref, wf_ref, bias_ref, c_in):
        # Bottleneck 1x1 conv (no bias).
        zb = jnp.dot(wb_ref[...], a, preferred_element_type=jnp.float32)   # (Cb, L)
        zb_pad[:, p3:p3 + L] = zb

        # im2col stack build: tap j of the widest kernel -> rows [j*Cb,(j+1)*Cb).
        for j in range(K3):                                                # static
            s_ref[j * Cb:(j + 1) * Cb, :] = zb_pad[:, j:j + L]

        # MaxPool1d(kernel=3, stride=1, padding=1) rows -> last c_in rows.
        mx_pad[0:c_in, 1:L + 1] = a
        zmax = jnp.maximum(
            jnp.maximum(mx_pad[0:c_in, 0:L], mx_pad[0:c_in, 1:L + 1]),
            mx_pad[0:c_in, 2:L + 2])
        s_ref[K3 * Cb:K3 * Cb + c_in, :] = zmax

        # One fused MXU matmul for all four branches; BatchNorm scale/shift are
        # already folded into wf / bias on the host.
        rows = K3 * Cb + c_in
        z = jnp.dot(wf_ref[...], s_ref[0:rows, :],
                    preferred_element_type=jnp.float32)                    # (4F, L)
        return jnp.maximum(z + bias_ref[...], 0.0)                         # ReLU

    for b in range(Bt):                                                    # static
        x = x_ref[b].astype(jnp.float32)                                   # (C_in, L)
        a1 = module(x, wb1_ref, wf1_ref, b1_ref, C_in)
        a2 = module(a1, wb2_ref, wf2_ref, b2_ref, C4)
        a3 = module(a2, wb3_ref, wf3_ref, b3_ref, C4)
        # Residual 1x1 conv with folded bias+BN, reusing the resident x block.
        r = jnp.dot(wres_ref[...], x, preferred_element_type=jnp.float32)
        out_ref[b] = jnp.maximum(a3 + r + bres_ref[...], 0.0).astype(out_ref.dtype)


# --------------------------- host-side weight folding ------------------------


def _bn_scale_shift(bn):
    gamma, beta, mean, var = bn
    scale = gamma / jnp.sqrt(var + EPS)
    shift = beta - mean * scale
    return scale, shift


def _fold_module(m, F, Cb, Ks, c_in):
    """Fold one inception module into (bottleneck_w, fused_branch_w, bias).

    Fused weight layout (4F, K3*Cb + c_in):
      column j*Cb + c  <->  tap j (of the widest kernel) of bottleneck chan c
      columns K3*Cb + c <-> maxpool branch, input channel c
    BN scale is folded into the rows, BN shift becomes the bias.
    """
    K1, K2, K3 = Ks
    p3 = K3 // 2
    scale, shift = _bn_scale_shift(m["bn"])
    W = jnp.zeros((4 * F, K3 * Cb + c_in), jnp.float32)
    for i, (w, K) in enumerate(((m["w1"], K1), (m["w2"], K2), (m["w3"], K3))):
        # (F, Cb, K) -> (F, K*Cb) tap-major, centred inside the K3 tap window.
        blk = jnp.transpose(w, (0, 2, 1)).reshape(F, K * Cb)
        col = (p3 - K // 2) * Cb
        W = W.at[i * F:(i + 1) * F, col:col + K * Cb].set(blk)
    W = W.at[3 * F:, K3 * Cb:].set(m["wmp"][:, :, 0])
    W = W * scale[:, None]                        # fold BN scale
    return m["wb"][:, :, 0], W, shift[:, None]    # BN shift -> per-channel bias


# ---------------------------------- wrapper -----------------------------------


def inception_block_forward(x, p, n_filters, bottleneck_channels, kernel_sizes):
    B, C_in, L = x.shape
    F, Cb = n_filters, bottleneck_channels
    Ks = tuple(kernel_sizes)
    K3 = Ks[2]
    assert K3 == max(Ks) and all(k % 2 == 1 for k in Ks), "odd kernels, largest last"
    p3 = K3 // 2
    C4 = 4 * F

    # All layout plumbing / BN folding happens on the host, never in-kernel.
    wb1, wf1, b1 = _fold_module(p["m1"], F, Cb, Ks, C_in)
    wb2, wf2, b2 = _fold_module(p["m2"], F, Cb, Ks, C4)
    wb3, wf3, b3 = _fold_module(p["m3"], F, Cb, Ks, C4)
    scale_r, shift_r = _bn_scale_shift(p["res_bn"])
    wres = p["res_w"][:, :, 0] * scale_r[:, None]
    bres = (p["res_b"] * scale_r + shift_r)[:, None]

    # Batch tile: amortize per-grid-step overhead, but keep >= 2 grid steps
    # when possible so both TensorCores of a v7x chip get work.
    Bt = 1
    for cand in (8, 4, 2):
        if B % cand == 0 and B // cand >= 2:
            Bt = cand
            break

    rows_s = K3 * Cb + max(C_in, C4)
    c_mx = max(C_in, C4)
    kernel = functools.partial(_block_kernel, Bt, C_in, F, Cb, Ks, L)

    def w_spec(arr):
        return pl.BlockSpec(arr.shape, lambda g: (0, 0))

    return pl.pallas_call(
        kernel,
        out_shape=jax.ShapeDtypeStruct((B, C4, L), x.dtype),
        grid=(B // Bt,),
        in_specs=[
            pl.BlockSpec((Bt, C_in, L), lambda g: (g, 0, 0)),   # x
            w_spec(wb1), w_spec(wf1), w_spec(b1),               # module 1
            w_spec(wb2), w_spec(wf2), w_spec(b2),               # module 2
            w_spec(wb3), w_spec(wf3), w_spec(b3),               # module 3
            w_spec(wres), w_spec(bres),                         # residual
        ],
        out_specs=pl.BlockSpec((Bt, C4, L), lambda g: (g, 0, 0)),
        scratch_shapes=[
            pltpu.VMEM((Cb, L + 2 * p3), jnp.float32),   # zero-padded bottleneck out
            pltpu.VMEM((rows_s, L), jnp.float32),        # im2col + maxpool stack
            pltpu.VMEM((c_mx, L + 2), jnp.float32),      # -inf padded maxpool input
        ],
        compiler_params=pltpu.CompilerParams(
            dimension_semantics=("parallel",),
            vmem_limit_bytes=32 * 1024 * 1024,           # explicit, plenty of headroom
        ),
    )(x, wb1, wf1, b1, wb2, wf2, b2, wb3, wf3, b3, wres, bres)


# --------------------------- parameters (synthetic) ---------------------------


def init_params(key, in_channels, n_filters, kernel_sizes, bottleneck_channels):
    F, Cb = n_filters, bottleneck_channels
    keys = iter(jax.random.split(key, 64))

    def conv_w(o, i, k):
        return jax.random.normal(next(keys), (o, i, k), jnp.float32) * 0.1

    def bn(c):
        gamma = jax.random.uniform(next(keys), (c,), jnp.float32, 0.5, 1.5)
        beta = jax.random.normal(next(keys), (c,), jnp.float32) * 0.1
        mean = jax.random.normal(next(keys), (c,), jnp.float32) * 0.1
        var = jax.random.uniform(next(keys), (c,), jnp.float32, 0.5, 1.5)
        return gamma, beta, mean, var

    def module(cin):
        return dict(
            wb=conv_w(Cb, cin, 1),
            w1=conv_w(F, Cb, kernel_sizes[0]),
            w2=conv_w(F, Cb, kernel_sizes[1]),
            w3=conv_w(F, Cb, kernel_sizes[2]),
            wmp=conv_w(F, cin, 1),
            bn=bn(4 * F),
        )

    return dict(
        m1=module(in_channels),
        m2=module(4 * F),
        m3=module(4 * F),
        res_w=conv_w(4 * F, in_channels, 1),
        res_b=jax.random.normal(next(keys), (4 * F,), jnp.float32) * 0.1,
        res_bn=bn(4 * F),
    )


# ------------------------------ pure-JAX reference ----------------------------


def _conv1d_ref(x, w, pad):
    return lax.conv_general_dilated(
        x, w, (1,), [(pad, pad)], dimension_numbers=("NCH", "OIH", "NCH"),
        precision=lax.Precision.HIGHEST)


def _maxpool3_ref(x):
    return lax.reduce_window(x, -jnp.inf, lax.max, (1, 1, 3), (1, 1, 1),
                             [(0, 0), (0, 0), (1, 1)])


def _bn_ref(x, bn):
    gamma, beta, mean, var = bn
    return ((x - mean[None, :, None]) / jnp.sqrt(var[None, :, None] + EPS)
            * gamma[None, :, None] + beta[None, :, None])


def _inception_module_ref(x, m, ks):
    zb = _conv1d_ref(x, m["wb"], 0)
    zmax = _maxpool3_ref(x)
    z1 = _conv1d_ref(zb, m["w1"], ks[0] // 2)
    z2 = _conv1d_ref(zb, m["w2"], ks[1] // 2)
    z3 = _conv1d_ref(zb, m["w3"], ks[2] // 2)
    z4 = _conv1d_ref(zmax, m["wmp"], 0)
    z = jnp.concatenate([z1, z2, z3, z4], axis=1)
    return jax.nn.relu(_bn_ref(z, m["bn"]))


def _block_ref(x, p, ks):
    z = _inception_module_ref(x, p["m1"], ks)
    z = _inception_module_ref(z, p["m2"], ks)
    z = _inception_module_ref(z, p["m3"], ks)
    r = _conv1d_ref(x, p["res_w"], 0) + p["res_b"][None, :, None]
    r = _bn_ref(r, p["res_bn"])
    return jax.nn.relu(z + r)


# ------------------------------------ main ------------------------------------


if __name__ == "__main__":
    B, C_in, L = 2, 8, 128
    n_filters = 8            # small demo size; out channels = 4 * n_filters = 32
    bottleneck_channels = 8
    kernel_sizes = [9, 19, 39]

    key = jax.random.PRNGKey(0)
    kx, kp = jax.random.split(key)
    x = jax.random.normal(kx, (B, C_in, L), jnp.float32)
    params = init_params(kp, C_in, n_filters, kernel_sizes, bottleneck_channels)

    out = inception_block_forward(x, params, n_filters, bottleneck_channels,
                                  kernel_sizes)
    out = jax.block_until_ready(out)

    ref = _block_ref(x, params, kernel_sizes)
    np.testing.assert_allclose(np.asarray(out), np.asarray(ref),
                               atol=5e-2, rtol=5e-2)
    print("KERNEL_OK")
</pallas_src>

<mosaic_0001>
module attributes {stable_mosaic.version = 11 : i64} {
  func.func @_block_kernel(%arg0: i32, %arg1: memref<1x8x128xf32, #tpu.memory_space<vmem>>, %arg2: memref<8x8xf32, #tpu.memory_space<vmem>>, %arg3: memref<32x320xf32, #tpu.memory_space<vmem>>, %arg4: memref<32x1xf32, #tpu.memory_space<vmem>>, %arg5: memref<8x32xf32, #tpu.memory_space<vmem>>, %arg6: memref<32x344xf32, #tpu.memory_space<vmem>>, %arg7: memref<32x1xf32, #tpu.memory_space<vmem>>, %arg8: memref<8x32xf32, #tpu.memory_space<vmem>>, %arg9: memref<32x344xf32, #tpu.memory_space<vmem>>, %arg10: memref<32x1xf32, #tpu.memory_space<vmem>>, %arg11: memref<32x8xf32, #tpu.memory_space<vmem>>, %arg12: memref<32x1xf32, #tpu.memory_space<vmem>>, %arg13: memref<1x32x128xf32, #tpu.memory_space<vmem>>, %arg14: memref<8x166xf32, #tpu.memory_space<vmem>>, %arg15: memref<344x128xf32, #tpu.memory_space<vmem>>, %arg16: memref<32x130xf32, #tpu.memory_space<vmem>>) attributes {dimension_semantics = [#tpu.dimension_semantics<parallel>], iteration_bounds = array<i64: 2>, scalar_prefetch = 0 : i64, scratch_operands = 3 : i64, tpu.core_type = #tpu.core_type<tc>, window_params = [{transform_indices = @transform_0, window_bounds = array<i64: 1, 8, 128>}, {pipeline_mode = #tpu.pipeline_mode<synchronous>, transform_indices = @transform_1, window_bounds = array<i64: 8, 8>}, {pipeline_mode = #tpu.pipeline_mode<synchronous>, transform_indices = @transform_2, window_bounds = array<i64: 32, 320>}, {pipeline_mode = #tpu.pipeline_mode<synchronous>, transform_indices = @transform_3, window_bounds = array<i64: 32, 1>}, {pipeline_mode = #tpu.pipeline_mode<synchronous>, transform_indices = @transform_4, window_bounds = array<i64: 8, 32>}, {pipeline_mode = #tpu.pipeline_mode<synchronous>, transform_indices = @transform_5, window_bounds = array<i64: 32, 344>}, {pipeline_mode = #tpu.pipeline_mode<synchronous>, transform_indices = @transform_6, window_bounds = array<i64: 32, 1>}, {pipeline_mode = #tpu.pipeline_mode<synchronous>, transform_indices = @transform_7, window_bounds = array<i64: 8, 32>}, {pipeline_mode = #tpu.pipeline_mode<synchronous>, transform_indices = @transform_8, window_bounds = array<i64: 32, 344>}, {pipeline_mode = #tpu.pipeline_mode<synchronous>, transform_indices = @transform_9, window_bounds = array<i64: 32, 1>}, {pipeline_mode = #tpu.pipeline_mode<synchronous>, transform_indices = @transform_10, window_bounds = array<i64: 32, 8>}, {pipeline_mode = #tpu.pipeline_mode<synchronous>, transform_indices = @transform_11, window_bounds = array<i64: 32, 1>}, {transform_indices = @transform_12, window_bounds = array<i64: 1, 32, 128>}]} {
    %cst = arith.constant 0.000000e+00 : f32
    %0 = vector.broadcast %cst : f32 to vector<8x19xf32>
    %c0 = arith.constant 0 : index
    %c0_0 = arith.constant 0 : index
    %1 = vector.load %arg14[%c0, %c0_0] : memref<8x166xf32, #tpu.memory_space<vmem>>, vector<8x19xf32>
    tpu.vector_store %arg14[%c0, %c0_0], %0 {strides = array<i32>} : memref<8x166xf32, #tpu.memory_space<vmem>>, vector<8x19xf32>,
    %cst_1 = arith.constant 0.000000e+00 : f32
    %2 = vector.broadcast %cst_1 : f32 to vector<8x19xf32>
    %c0_2 = arith.constant 0 : index
    %c147 = arith.constant 147 : index
    %3 = vector.load %arg14[%c0_2, %c147] : memref<8x166xf32, #tpu.memory_space<vmem>>, vector<8x19xf32>
    tpu.vector_store %arg14[%c0_2, %c147], %2 {strides = array<i32>} : memref<8x166xf32, #tpu.memory_space<vmem>>, vector<8x19xf32>,
    %cst_3 = arith.constant 0xFF800000 : f32
    %4 = vector.broadcast %cst_3 : f32 to vector<32x1xf32>
    %c0_4 = arith.constant 0 : index
    %c0_5 = arith.constant 0 : index
    %5 = vector.load %arg16[%c0_4, %c0_5] : memref<32x130xf32, #tpu.memory_space<vmem>>, vector<32x1xf32>
    tpu.vector_store %arg16[%c0_4, %c0_5], %4 {strides = array<i32>} : memref<32x130xf32, #tpu.memory_space<vmem>>, vector<32x1xf32>,
    %cst_6 = arith.constant 0xFF800000 : f32
    %6 = vector.broadcast %cst_6 : f32 to vector<32x1xf32>
    %c0_7 = arith.constant 0 : index
    %c129 = arith.constant 129 : index
    %7 = vector.load %arg16[%c0_7, %c129] : memref<32x130xf32, #tpu.memory_space<vmem>>, vector<32x1xf32>
    tpu.vector_store %arg16[%c0_7, %c129], %6 {strides = array<i32>} : memref<32x130xf32, #tpu.memory_space<vmem>>, vector<32x1xf32>,
    %c0_8 = arith.constant 0 : index
    %c0_9 = arith.constant 0 : index
    %c0_10 = arith.constant 0 : index
    %8 = vector.load %arg1[%c0_8, %c0_9, %c0_10] : memref<1x8x128xf32, #tpu.memory_space<vmem>>, vector<1x8x128xf32>
    %9 = vector.shape_cast %8 : vector<1x8x128xf32> to vector<8x128xf32>
    %c0_11 = arith.constant 0 : index
    %c0_12 = arith.constant 0 : index
    %10 = vector.load %arg2[%c0_11, %c0_12] : memref<8x8xf32, #tpu.memory_space<vmem>>, vector<8x8xf32>
    %cst_13 = arith.constant dense<0.000000e+00> : vector<8x128xf32>
    %11 = tpu.matmul %10, %9, %cst_13 {dimension_numbers = #tpu.dot_dimension_numbers<[1], [0], [0], [1], [0, 0, 1, 1], [], []>} : vector<8x8xf32>, vector<8x128xf32>, vector<8x128xf32> -> vector<8x128xf32>
    %c0_14 = arith.constant 0 : index
    %c19 = arith.constant 19 : index
    %12 = vector.load %arg14[%c0_14, %c19] : memref<8x166xf32, #tpu.memory_space<vmem>>, vector<8x128xf32>
    tpu.vector_store %arg14[%c0_14, %c19], %11 {strides = array<i32>} : memref<8x166xf32, #tpu.memory_space<vmem>>, vector<8x128xf32>,
    %c0_15 = arith.constant 0 : index
    %c0_16 = arith.constant 0 : index
    %13 = vector.load %arg14[%c0_15, %c0_16] : memref<8x166xf32, #tpu.memory_space<vmem>>, vector<8x128xf32>
    %c0_17 = arith.constant 0 : index
    %c0_18 = arith.constant 0 : index
    %14 = vector.load %arg15[%c0_17, %c0_18] : memref<344x128xf32, #tpu.memory_space<vmem>>, vector<8x128xf32>
    tpu.vector_store %arg15[%c0_17, %c0_18], %13 {strides = array<i32>} : memref<344x128xf32, #tpu.memory_space<vmem>>, vector<8x128xf32>,
    %c0_19 = arith.constant 0 : index
    %c1 = arith.constant 1 : index
    %15 = vector.load %arg14[%c0_19, %c1] : memref<8x166xf32, #tpu.memory_space<vmem>>, vector<8x128xf32>
    %c8 = arith.constant 8 : index
    %c0_20 = arith.constant 0 : index
    %16 = vector.load %arg15[%c8, %c0_20] : memref<344x128xf32, #tpu.memory_space<vmem>>, vector<8x128xf32>
    tpu.vector_store %arg15[%c8, %c0_20], %15 {strides = array<i32>} : memref<344x128xf32, #tpu.memory_space<vmem>>, vector<8x128xf32>,
    %c0_21 = arith.constant 0 : index
    %c2 = arith.constant 2 : index
    %17 = vector.load %arg14[%c0_21, %c2] : memref<8x166xf32, #tpu.memory_space<vmem>>, vector<8x128xf32>
    %c16 = arith.constant 16 : index
    %c0_22 = arith.constant 0 : index
    %18 = vector.load %arg15[%c16, %c0_22] : memref<344x128xf32, #tpu.memory_space<vmem>>, vector<8x128xf32>
    tpu.vector_store %arg15[%c16, %c0_22], %17 {strides = array<i32>} : memref<344x128xf32, #tpu.memory_space<vmem>>, vector<8x128xf32>,
    %c0_23 = arith.constant 0 : index
    %c3 = arith.constant 3 : index
    %19 = vector.load %arg14[%c0_23, %c3] : memref<8x166xf32, #tpu.memory_space<vmem>>, vector<8x128xf32>
    %c24 = arith.constant 24 : index
    %c0_24 = arith.constant 0 : index
    %20 = vector.load %arg15[%c24, %c0_24] : memref<344x128xf32, #tpu.memory_space<vmem>>, vector<8x128xf32>
    tpu.vector_store %arg15[%c24, %c0_24], %19 {strides = array<i32>} : memref<344x128xf32, #tpu.memory_space<vmem>>, vector<8x128xf32>,
    %c0_25 = arith.constant 0 : index
    %c4 = arith.constant 4 : index
    %21 = vector.load %arg14[%c0_25, %c4] : memref<8x166xf32, #tpu.memory_space<vmem>>, vector<8x128xf32>
    %c32 = arith.constant 32 : index
    %c0_26 = arith.constant 0 : index
    %22 = vector.load %arg15[%c32, %c0_26] : memref<344x128xf32, #tpu.memory_space<vmem>>, vector<8x128xf32>
    tpu.vector_store %arg15[%c32, %c0_26], %21 {strides = array<i32>} : memref<344x128xf32, #tpu.memory_space<vmem>>, vector<8x128xf32>,
    %c0_27 = arith.constant 0 : index
    %c5 = arith.constant 5 : index
    %23 = vector.load %arg14[%c0_27, %c5] : memref<8x166xf32, #tpu.memory_space<vmem>>, vector<8x128xf32>
    %c40 = arith.constant 40 : index
    %c0_28 = arith.constant 0 : index
    %24 = vector.load %arg15[%c40, %c0_28] : memref<344x128xf32, #tpu.memory_space<vmem>>, vector<8x128xf32>
    tpu.vector_store %arg15[%c40, %c0_28], %23 {strides = array<i32>} : memref<344x128xf32, #tpu.memory_space<vmem>>, vector<8x128xf32>,
    %c0_29 = arith.constant 0 : index
    %c6 = arith.constant 6 : index
    %25 = vector.load %arg14[%c0_29, %c6] : memref<8x166xf32, #tpu.memory_space<vmem>>, vector<8x128xf32>
    %c48 = arith.constant 48 : index
    %c0_30 = arith.constant 0 : index
    %26 = vector.load %arg15[%c48, %c0_30] : memref<344x128xf32, #tpu.memory_space<vmem>>, vector<8x128xf32>
    tpu.vector_store %arg15[%c48, %c0_30], %25 {strides = array<i32>} : memref<344x128xf32, #tpu.memory_space<vmem>>, vector<8x128xf32>,
    %c0_31 = arith.constant 0 : index
    %c7 = arith.constant 7 : index
    %27 = vector.load %arg14[%c0_31, %c7] : memref<8x166xf32, #tpu.memory_space<vmem>>, vector<8x128xf32>
    %c56 = arith.constant 56 : index
    %c0_32 = arith.constant 0 : index
    %28 = vector.load %arg15[%c56, %c0_32] : memref<344x128xf32, #tpu.memory_space<vmem>>, vector<8x128xf32>
    tpu.vector_store %arg15[%c56, %c0_32], %27 {strides = array<i32>} : memref<344x128xf32, #tpu.memory_space<vmem>>, vector<8x128xf32>,
    %c0_33 = arith.constant 0 : index
    %c8_34 = arith.constant 8 : index
    %29 = vector.load %arg14[%c0_33, %c8_34] : memref<8x166xf32, #tpu.memory_space<vmem>>, vector<8x128xf32>
    %c64 = arith.constant 64 : index
    %c0_35 = arith.constant 0 : index
    %30 = vector.load %arg15[%c64, %c0_35] : memref<344x128xf32, #tpu.memory_space<vmem>>, vector<8x128xf32>
    tpu.vector_store %arg15[%c64, %c0_35], %29 {strides = array<i32>} : memref<344x128xf32, #tpu.memory_space<vmem>>, vector<8x128xf32>,
    %c0_36 = arith.constant 0 : index
    %c9 = arith.constant 9 : index
    %31 = vector.load %arg14[%c0_36, %c9] : memref<8x166xf32, #tpu.memory_space<vmem>>, vector<8x128xf32>
    %c72 = arith.constant 72 : index
    %c0_37 = arith.constant 0 : index
    %32 = vector.load %arg15[%c72, %c0_37] : memref<344x128xf32, #tpu.memory_space<vmem>>, vector<8x128xf32>
    tpu.vector_store %arg15[%c72, %c0_37], %31 {strides = array<i32>} : memref<344x128xf32, #tpu.memory_space<vmem>>, vector<8x128xf32>,
    %c0_38 = arith.constant 0 : index
    %c10 = arith.constant 10 : index
    %33 = vector.load %arg14[%c0_38, %c10] : memref<8x166xf32, #tpu.memory_space<vmem>>, vector<8x128xf32>
    %c80 = arith.constant 80 : index
    %c0_39 = arith.constant 0 : index
    %34 = vector.load %arg15[%c80, %c0_39] : memref<344x128xf32, #tpu.memory_space<vmem>>, vector<8x128xf32>
    tpu.vector_store %arg15[%c80, %c0_39], %33 {strides = array<i32>} : memref<344x128xf32, #tpu.memory_space<vmem>>, vector<8x128xf32>,
    %c0_40 = arith.constant 0 : index
    %c11 = arith.constant 11 : index
    %35 = vector.load %arg14[%c0_40, %c11] : memref<8x166xf32, #tpu.memory_space<vmem>>, vector<8x128xf32>
    %c88 = arith.constant 88 : index
    %c0_41 = arith.constant 0 : index
    %36 = vector.load %arg15[%c88, %c0_41] : memref<344x128xf32, #tpu.memory_space<vmem>>, vector<8x128xf32>
    tpu.vector_store %arg15[%c88, %c0_41], %35 {strides = array<i32>} : memref<344x128xf32, #tpu.memory_space<vmem>>, vector<8x128xf32>,
    %c0_42 = arith.constant 0 : index
    %c12 = arith.constant 12 : index
    %37 = vector.load %arg14[%c0_42, %c12] : memref<8x166xf32, #tpu.memory_space<vmem>>, vector<8x128xf32>
    %c96 = arith.constant 96 : index
    %c0_43 = arith.constant 0 : index
    %38 = vector.load %arg15[%c96, %c0_43] : memref<344x128xf32, #tpu.memory_space<vmem>>, vector<8x128xf32>
    tpu.vector_store %arg15[%c96, %c0_43], %37 {strides = array<i32>} : memref<344x128xf32, #tpu.memory_space<vmem>>, vector<8x128xf32>,
    %c0_44 = arith.constant 0 : index
    %c13 = arith.constant 13 : index
    %39 = vector.load %arg14[%c0_44, %c13] : memref<8x166xf32, #tpu.memory_space<vmem>>, vector<8x128xf32>
    %c104 = arith.constant 104 : index
    %c0_45 = arith.constant 0 : index
    %40 = vector.load %arg15[%c104, %c0_45] : memref<344x128xf32, #tpu.memory_space<vmem>>, vector<8x128xf32>
    tpu.vector_store %arg15[%c104, %c0_45], %39 {strides = array<i32>} : memref<344x128xf32, #tpu.memory_space<vmem>>, vector<8x128xf32>,
    %c0_46 = arith.constant 0 : index
    %c14 = arith.constant 14 : index
    %41 = vector.load %arg14[%c0_46, %c14] : memref<8x166xf32, #tpu.memory_space<vmem>>, vector<8x128xf32>
    %c112 = arith.constant 112 : index
    %c0_47 = arith.constant 0 : index
    %42 = vector.load %arg15[%c112, %c0_47] : memref<344x128xf32, #tpu.memory_space<vmem>>, vector<8x128xf32>
    tpu.vector_store %arg15[%c112, %c0_47], %41 {strides = array<i32>} : memref<344x128xf32, #tpu.memory_space<vmem>>, vector<8x128xf32>,
    %c0_48 = arith.constant 0 : index
    %c15 = arith.constant 15 : index
    %43 = vector.load %arg14[%c0_48, %c15] : memref<8x166xf32, #tpu.memory_space<vmem>>, vector<8x128xf32>
    %c120 = arith.constant 120 : index
    %c0_49 = arith.constant 0 : index
    %44 = vector.load %arg15[%c120, %c0_49] : memref<344x128xf32, #tpu.memory_space<vmem>>, vector<8x128xf32>
    tpu.vector_store %arg15[%c120, %c0_49], %43 {strides = array<i32>} : memref<344x128xf32, #tpu.memory_space<vmem>>, vector<8x128xf32>,
    %c0_50 = arith.constant 0 : index
    %c16_51 = arith.constant 16 : index
    %45 = vector.load %arg14[%c0_50, %c16_51] : memref<8x166xf32, #tpu.memory_space<vmem>>, vector<8x128xf32>
    %c128 = arith.constant 128 : index
    %c0_52 = arith.constant 0 : index
    %46 = vector.load %arg15[%c128, %c0_52] : memref<344x128xf32, #tpu.memory_space<vmem>>, vector<8x128xf32>
    tpu.vector_store %arg15[%c128, %c0_52], %45 {strides = array<i32>} : memref<344x128xf32, #tpu.memory_space<vmem>>, vector<8x128xf32>,
    %c0_53 = arith.constant 0 : index
    %c17 = arith.constant 17 : index
    %47 = vector.load %arg14[%c0_53, %c17] : memref<8x166xf32, #tpu.memory_space<vmem>>, vector<8x128xf32>
    %c136 = arith.constant 136 : index
    %c0_54 = arith.constant 0 : index
    %48 = vector.load %arg15[%c136, %c0_54] : memref<344x128xf32, #tpu.memory_space<vmem>>, vector<8x128xf32>
    tpu.vector_store %arg15[%c136, %c0_54], %47 {strides = array<i32>} : memref<344x128xf32, #tpu.memory_space<vmem>>, vector<8x128xf32>,
    %c0_55 = arith.constant 0 : index
    %c18 = arith.constant 18 : index
    %49 = vector.load %arg14[%c0_55, %c18] : memref<8x166xf32, #tpu.memory_space<vmem>>, vector<8x128xf32>
    %c144 = arith.constant 144 : index
    %c0_56 = arith.constant 0 : index
    %50 = vector.load %arg15[%c144, %c0_56] : memref<344x128xf32, #tpu.memory_space<vmem>>, vector<8x128xf32>
    tpu.vector_store %arg15[%c144, %c0_56], %49 {strides = array<i32>} : memref<344x128xf32, #tpu.memory_space<vmem>>, vector<8x128xf32>,
    %c0_57 = arith.constant 0 : index
    %c19_58 = arith.constant 19 : index
    %51 = vector.load %arg14[%c0_57, %c19_58] : memref<8x166xf32, #tpu.memory_space<vmem>>, vector<8x128xf32>
    %c152 = arith.constant 152 : index
    %c0_59 = arith.constant 0 : index
    %52 = vector.load %arg15[%c152, %c0_59] : memref<344x128xf32, #tpu.memory_space<vmem>>, vector<8x128xf32>
    tpu.vector_store %arg15[%c152, %c0_59], %51 {strides = array<i32>} : memref<344x128xf32, #tpu.memory_space<vmem>>, vector<8x128xf32>,
    %c0_60 = arith.constant 0 : index
    %c20 = arith.constant 20 : index
    %53 = vector.load %arg14[%c0_60, %c20] : memref<8x166xf32, #tpu.memory_space<vmem>>, vector<8x128xf32>
    %c160 = arith.constant 160 : index
    %c0_61 = arith.constant 0 : index
    %54 = vector.load %arg15[%c160, %c0_61] : memref<344x128xf32, #tpu.memory_space<vmem>>, vector<8x128xf32>
    tpu.vector_store %arg15[%c160, %c0_61], %53 {strides = array<i32>} : memref<344x128xf32, #tpu.memory_space<vmem>>, vector<8x128xf32>,
    %c0_62 = arith.constant 0 : index
    %c21 = arith.constant 21 : index
    %55 = vector.load %arg14[%c0_62, %c21] : memref<8x166xf32, #tpu.memory_space<vmem>>, vector<8x128xf32>
    %c168 = arith.constant 168 : index
    %c0_63 = arith.constant 0 : index
    %56 = vector.load %arg15[%c168, %c0_63] : memref<344x128xf32, #tpu.memory_space<vmem>>, vector<8x128xf32>
    tpu.vector_store %arg15[%c168, %c0_63], %55 {strides = array<i32>} : memref<344x128xf32, #tpu.memory_space<vmem>>, vector<8x128xf32>,
    %c0_64 = arith.constant 0 : index
    %c22 = arith.constant 22 : index
    %57 = vector.load %arg14[%c0_64, %c22] : memref<8x166xf32, #tpu.memory_space<vmem>>, vector<8x128xf32>
    %c176 = arith.constant 176 : index
    %c0_65 = arith.constant 0 : index
    %58 = vector.load %arg15[%c176, %c0_65] : memref<344x128xf32, #tpu.memory_space<vmem>>, vector<8x128xf32>
    tpu.vector_store %arg15[%c176, %c0_65], %57 {strides = array<i32>} : memref<344x128xf32, #tpu.memory_space<vmem>>, vector<8x128xf32>,
    %c0_66 = arith.constant 0 : index
    %c23 = arith.constant 23 : index
    %59 = vector.load %arg14[%c0_66, %c23] : memref<8x166xf32, #tpu.memory_space<vmem>>, vector<8x128xf32>
    %c184 = arith.constant 184 : index
    %c0_67 = arith.constant 0 : index
    %60 = vector.load %arg15[%c184, %c0_67] : memref<344x128xf32, #tpu.memory_space<vmem>>, vector<8x128xf32>
    tpu.vector_store %arg15[%c184, %c0_67], %59 {strides = array<i32>} : memref<344x128xf32, #tpu.memory_space<vmem>>, vector<8x128xf32>,
    %c0_68 = arith.constant 0 : index
    %c24_69 = arith.constant 24 : index
    %61 = vector.load %arg14[%c0_68, %c24_69] : memref<8x166xf32, #tpu.memory_space<vmem>>, vector<8x128xf32>
    %c192 = arith.constant 192 : index
    %c0_70 = arith.constant 0 : index
    %62 = vector.load %arg15[%c192, %c0_70] : memref<344x128xf32, #tpu.memory_space<vmem>>, vector<8x128xf32>
    tpu.vector_store %arg15[%c192, %c0_70], %61 {strides = array<i32>} : memref<344x128xf32, #tpu.memory_space<vmem>>, vector<8x128xf32>,
    %c0_71 = arith.constant 0 : index
    %c25 = arith.constant 25 : index
    %63 = vector.load %arg14[%c0_71, %c25] : memref<8x166xf32, #tpu.memory_space<vmem>>, vector<8x128xf32>
    %c200 = arith.constant 200 : index
    %c0_72 = arith.constant 0 : index
    %64 = vector.load %arg15[%c200, %c0_72] : memref<344x128xf32, #tpu.memory_space<vmem>>, vector<8x128xf32>
    tpu.vector_store %arg15[%c200, %c0_72], %63 {strides = array<i32>} : memref<344x128xf32, #tpu.memory_space<vmem>>, vector<8x128xf32>,
    %c0_73 = arith.constant 0 : index
    %c26 = arith.constant 26 : index
    %65 = vector.load %arg14[%c0_73, %c26] : memref<8x166xf32, #tpu.memory_space<vmem>>, vector<8x128xf32>
    %c208 = arith.constant 208 : index
    %c0_74 = arith.constant 0 : index
    %66 = vector.load %arg15[%c208, %c0_74] : memref<344x128xf32, #tpu.memory_space<vmem>>, vector<8x128xf32>
    tpu.vector_store %arg15[%c208, %c0_74], %65 {strides = array<i32>} : memref<344x128xf32, #tpu.memory_space<vmem>>, vector<8x128xf32>,
    %c0_75 = arith.constant 0 : index
    %c27 = arith.constant 27 : index
    %67 = vector.load %arg14[%c0_75, %c27] : memref<8x166xf32, #tpu.memory_space<vmem>>, vector<8x128xf32>
    %c216 = arith.constant 216 : index
    %c0_76 = arith.constant 0 : index
    %68 = vector.load %arg15[%c216, %c0_76] : memref<344x128xf32, #tpu.memory_space<vmem>>, vector<8x128xf32>
    tpu.vector_store %arg15[%c216, %c0_76], %67 {strides = array<i32>} : memref<344x128xf32, #tpu.memory_space<vmem>>, vector<8x128xf32>,
    %c0_77 = arith.constant 0 : index
    %c28 = arith.constant 28 : index
    %69 = vector.load %arg14[%c0_77, %c28] : memref<8x166xf32, #tpu.memory_space<vmem>>, vector<8x128xf32>
    %c224 = arith.constant 224 : index
    %c0_78 = arith.constant 0 : index
    %70 = vector.load %arg15[%c224, %c0_78] : memref<344x128xf32, #tpu.memory_space<vmem>>, vector<8x128xf32>
    tpu.vector_store %arg15[%c224, %c0_78], %69 {strides = array<i32>} : memref<344x128xf32, #tpu.memory_space<vmem>>, vector<8x128xf32>,
    %c0_79 = arith.constant 0 : index
    %c29 = arith.constant 29 : index
    %71 = vector.load %arg14[%c0_79, %c29] : memref<8x166xf32, #tpu.memory_space<vmem>>, vector<8x128xf32>
    %c232 = arith.constant 232 : index
    %c0_80 = arith.constant 0 : index
    %72 = vector.load %arg15[%c232, %c0_80] : memref<344x128xf32, #tpu.memory_space<vmem>>, vector<8x128xf32>
    tpu.vector_store %arg15[%c232, %c0_80], %71 {strides = array<i32>} : memref<344x128xf32, #tpu.memory_space<vmem>>, vector<8x128xf32>,
    %c0_81 = arith.constant 0 : index
    %c30 = arith.constant 30 : index
    %73 = vector.load %arg14[%c0_81, %c30] : memref<8x166xf32, #tpu.memory_space<vmem>>, vector<8x128xf32>
    %c240 = arith.constant 240 : index
    %c0_82 = arith.constant 0 : index
    %74 = vector.load %arg15[%c240, %c0_82] : memref<344x128xf32, #tpu.memory_space<vmem>>, vector<8x128xf32>
    tpu.vector_store %arg15[%c240, %c0_82], %73 {strides = array<i32>} : memref<344x128xf32, #tpu.memory_space<vmem>>, vector<8x128xf32>,
    %c0_83 = arith.constant 0 : index
    %c31 = arith.constant 31 : index
    %75 = vector.load %arg14[%c0_83, %c31] : memref<8x166xf32, #tpu.memory_space<vmem>>, vector<8x128xf32>
    %c248 = arith.constant 248 : index
    %c0_84 = arith.constant 0 : index
    %76 = vector.load %arg15[%c248, %c0_84] : memref<344x128xf32, #tpu.memory_space<vmem>>, vector<8x128xf32>
    tpu.vector_store %arg15[%c248, %c0_84], %75 {strides = array<i32>} : memref<344x128xf32, #tpu.memory_space<vmem>>, vector<8x128xf32>,
    %c0_85 = arith.constant 0 : index
    %c32_86 = arith.constant 32 : index
    %77 = vector.load %arg14[%c0_85, %c32_86] : memref<8x166xf32, #tpu.memory_space<vmem>>, vector<8x128xf32>
    %c256 = arith.constant 256 : index
    %c0_87 = arith.constant 0 : index
    %78 = vector.load %arg15[%c256, %c0_87] : memref<344x128xf32, #tpu.memory_space<vmem>>, vector<8x128xf32>
    tpu.vector_store %arg15[%c256, %c0_87], %77 {strides = array<i32>} : memref<344x128xf32, #tpu.memory_space<vmem>>, vector<8x128xf32>,
    %c0_88 = arith.constant 0 : index
    %c33 = arith.constant 33 : index
    %79 = vector.load %arg14[%c0_88, %c33] : memref<8x166xf32, #tpu.memory_space<vmem>>, vector<8x128xf32>
    %c264 = arith.constant 264 : index
    %c0_89 = arith.constant 0 : index
    %80 = vector.load %arg15[%c264, %c0_89] : memref<344x128xf32, #tpu.memory_space<vmem>>, vector<8x128xf32>
    tpu.vector_store %arg15[%c264, %c0_89], %79 {strides = array<i32>} : memref<344x128xf32, #tpu.memory_space<vmem>>, vector<8x128xf32>,
    %c0_90 = arith.constant 0 : index
    %c34 = arith.constant 34 : index
    %81 = vector.load %arg14[%c0_90, %c34] : memref<8x166xf32, #tpu.memory_space<vmem>>, vector<8x128xf32>
    %c272 = arith.constant 272 : index
    %c0_91 = arith.constant 0 : index
    %82 = vector.load %arg15[%c272, %c0_91] : memref<344x128xf32, #tpu.memory_space<vmem>>, vector<8x128xf32>
    tpu.vector_store %arg15[%c272, %c0_91], %81 {strides = array<i32>} : memref<344x128xf32, #tpu.memory_space<vmem>>, vector<8x128xf32>,
    %c0_92 = arith.constant 0 : index
    %c35 = arith.constant 35 : index
    %83 = vector.load %arg14[%c0_92, %c35] : memref<8x166xf32, #tpu.memory_space<vmem>>, vector<8x128xf32>
    %c280 = arith.constant 280 : index
    %c0_93 = arith.constant 0 : index
    %84 = vector.load %arg15[%c280, %c0_93] : memref<344x128xf32, #tpu.memory_space<vmem>>, vector<8x128xf32>
    tpu.vector_store %arg15[%c280, %c0_93], %83 {strides = array<i32>} : memref<344x128xf32, #tpu.memory_space<vmem>>, vector<8x128xf32>,
    %c0_94 = arith.constant 0 : index
    %c36 = arith.constant 36 : index
    %85 = vector.load %arg14[%c0_94, %c36] : memref<8x166xf32, #tpu.memory_space<vmem>>, vector<8x128xf32>
    %c288 = arith.constant 288 : index
    %c0_95 = arith.constant 0 : index
    %86 = vector.load %arg15[%c288, %c0_95] : memref<344x128xf32, #tpu.memory_space<vmem>>, vector<8x128xf32>
    tpu.vector_store %arg15[%c288, %c0_95], %85 {strides = array<i32>} : memref<344x128xf32, #tpu.memory_space<vmem>>, vector<8x128xf32>,
    %c0_96 = arith.constant 0 : index
    %c37 = arith.constant 37 : index
    %87 = vector.load %arg14[%c0_96, %c37] : memref<8x166xf32, #tpu.memory_space<vmem>>, vector<8x128xf32>
    %c296 = arith.constant 296 : index
    %c0_97 = arith.constant 0 : index
    %88 = vector.load %arg15[%c296, %c0_97] : memref<344x128xf32, #tpu.memory_space<vmem>>, vector<8x128xf32>
    tpu.vector_store %arg15[%c296, %c0_97], %87 {strides = array<i32>} : memref<344x128xf32, #tpu.memory_space<vmem>>, vector<8x128xf32>,
    %c0_98 = arith.constant 0 : index
    %c38 = arith.constant 38 : index
    %89 = vector.load %arg14[%c0_98, %c38] : memref<8x166xf32, #tpu.memory_space<vmem>>, vector<8x128xf32>
    %c304 = arith.constant 304 : index
    %c0_99 = arith.constant 0 : index
    %90 = vector.load %arg15[%c304, %c0_99] : memref<344x128xf32, #tpu.memory_space<vmem>>, vector<8x128xf32>
    tpu.vector_store %arg15[%c304, %c0_99], %89 {strides = array<i32>} : memref<344x128xf32, #tpu.memory_space<vmem>>, vector<8x128xf32>,
    %c0_100 = arith.constant 0 : index
    %c1_101 = arith.constant 1 : index
    %91 = vector.load %arg16[%c0_100, %c1_101] : memref<32x130xf32, #tpu.memory_space<vmem>>, vector<8x128xf32>
    tpu.vector_store %arg16[%c0_100, %c1_101], %9 {strides = array<i32>} : memref<32x130xf32, #tpu.memory_space<vmem>>, vector<8x128xf32>,
    %c0_102 = arith.constant 0 : index
    %c0_103 = arith.constant 0 : index
    %92 = vector.load %arg16[%c0_102, %c0_103] : memref<32x130xf32, #tpu.memory_space<vmem>>, vector<8x128xf32>
    %c0_104 = arith.constant 0 : index
    %c1_105 = arith.constant 1 : index
    %93 = vector.load %arg16[%c0_104, %c1_105] : memref<32x130xf32, #tpu.memory_space<vmem>>, vector<8x128xf32>
    %94 = arith.maximumf %92, %93 : vector<8x128xf32>
    %c0_106 = arith.constant 0 : index
    %c2_107 = arith.constant 2 : index
    %95 = vector.load %arg16[%c0_106, %c2_107] : memref<32x130xf32, #tpu.memory_space<vmem>>, vector<8x128xf32>
    %96 = arith.maximumf %94, %95 : vector<8x128xf32>
    %c312 = arith.constant 312 : index
    %c0_108 = arith.constant 0 : index
    %97 = vector.load %arg15[%c312, %c0_108] : memref<344x128xf32, #tpu.memory_space<vmem>>, vector<8x128xf32>
    tpu.vector_store %arg15[%c312, %c0_108], %96 {strides = array<i32>} : memref<344x128xf32, #tpu.memory_space<vmem>>, vector<8x128xf32>,
    %c0_109 = arith.constant 0 : index
    %c0_110 = arith.constant 0 : index
    %98 = vector.load %arg3[%c0_109, %c0_110] : memref<32x320xf32, #tpu.memory_space<vmem>>, vector<32x320xf32>
    %c0_111 = arith.constant 0 : index
    %c0_112 = arith.constant 0 : index
    %99 = vector.load %arg15[%c0_111, %c0_112] : memref<344x128xf32, #tpu.memory_space<vmem>>, vector<320x128xf32>
    %cst_113 = arith.constant dense<0.000000e+00> : vector<32x128xf32>
    %100 = tpu.matmul %98, %99, %cst_113 {dimension_numbers = #tpu.dot_dimension_numbers<[1], [0], [0], [1], [0, 0, 1, 1], [], []>} : vector<32x320xf32>, vector<320x128xf32>, vector<32x128xf32> -> vector<32x128xf32>
    %c0_114 = arith.constant 0 : index
    %c0_115 = arith.constant 0 : index
    %101 = vector.load %arg4[%c0_114, %c0_115] : memref<32x1xf32, #tpu.memory_space<vmem>>, vector<32x1xf32>
    %102 = vector.broadcast %101 : vector<32x1xf32> to vector<32x128xf32>
    %103 = arith.addf %100, %102 : vector<32x128xf32>
    %cst_116 = arith.constant 0.000000e+00 : f32
    %104 = vector.broadcast %cst_116 : f32 to vector<32x128xf32>
    %105 = arith.maximumf %103, %104 : vector<32x128xf32>
    %c0_117 = arith.constant 0 : index
    %c0_118 = arith.constant 0 : index
    %106 = vector.load %arg5[%c0_117, %c0_118] : memref<8x32xf32, #tpu.memory_space<vmem>>, vector<8x32xf32>
    %cst_119 = arith.constant dense<0.000000e+00> : vector<8x128xf32>
    %107 = tpu.matmul %106, %105, %cst_119 {dimension_numbers = #tpu.dot_dimension_numbers<[1], [0], [0], [1], [0, 0, 1, 1], [], []>} : vector<8x32xf32>, vector<32x128xf32>, vector<8x128xf32> -> vector<8x128xf32>
    %c0_120 = arith.constant 0 : index
    %c19_121 = arith.constant 19 : index
    %108 = vector.load %arg14[%c0_120, %c19_121] : memref<8x166xf32, #tpu.memory_space<vmem>>, vector<8x128xf32>
    tpu.vector_store %arg14[%c0_120, %c19_121], %107 {strides = array<i32>} : memref<8x166xf32, #tpu.memory_space<vmem>>, vector<8x128xf32>,
    %c0_122 = arith.constant 0 : index
    %c0_123 = arith.constant 0 : index
    %109 = vector.load %arg14[%c0_122, %c0_123] : memref<8x166xf32, #tpu.memory_space<vmem>>, vector<8x128xf32>
    %c0_124 = arith.constant 0 : index
    %c0_125 = arith.constant 0 : index
    %110 = vector.load %arg15[%c0_124, %c0_125] : memref<344x128xf32, #tpu.memory_space<vmem>>, vector<8x128xf32>
    tpu.vector_store %arg15[%c0_124, %c0_125], %109 {strides = array<i32>} : memref<344x128xf32, #tpu.memory_space<vmem>>, vector<8x128xf32>,
    %c0_126 = arith.constant 0 : index
    %c1_127 = arith.constant 1 : index
    %111 = vector.load %arg14[%c0_126, %c1_127] : memref<8x166xf32, #tpu.memory_space<vmem>>, vector<8x128xf32>
    %c8_128 = arith.constant 8 : index
    %c0_129 = arith.constant 0 : index
    %112 = vector.load %arg15[%c8_128, %c0_129] : memref<344x128xf32, #tpu.memory_space<vmem>>, vector<8x128xf32>
    tpu.vector_store %arg15[%c8_128, %c0_129], %111 {strides = array<i32>} : memref<344x128xf32, #tpu.memory_space<vmem>>, vector<8x128xf32>,
    %c0_130 = arith.constant 0 : index
    %c2_131 = arith.constant 2 : index
    %113 = vector.load %arg14[%c0_130, %c2_131] : memref<8x166xf32, #tpu.memory_space<vmem>>, vector<8x128xf32>
    %c16_132 = arith.constant 16 : index
    %c0_133 = arith.constant 0 : index
    %114 = vector.load %arg15[%c16_132, %c0_133] : memref<344x128xf32, #tpu.memory_space<vmem>>, vector<8x128xf32>
    tpu.vector_store %arg15[%c16_132, %c0_133], %113 {strides = array<i32>} : memref<344x128xf32, #tpu.memory_space<vmem>>, vector<8x128xf32>,
    %c0_134 = arith.constant 0 : index
    %c3_135 = arith.constant 3 : index
    %115 = vector.load %arg14[%c0_134, %c3_135] : memref<8x166xf32, #tpu.memory_space<vmem>>, vector<8x128xf32>
    %c24_136 = arith.constant 24 : index
    %c0_137 = arith.constant 0 : index
    %116 = vector.load %arg15[%c24_136, %c0_137] : memref<344x128xf32, #tpu.memory_space<vmem>>, vector<8x128xf32>
    tpu.vector_store %arg15[%c24_136, %c0_137], %115 {strides = array<i32>} : memref<344x128xf32, #tpu.memory_space<vmem>>, vector<8x128xf32>,
    %c0_138 = arith.constant 0 : index
    %c4_139 = arith.constant 4 : index
    %117 = vector.load %arg14[%c0_138, %c4_139] : memref<8x166xf32, #tpu.memory_space<vmem>>, vector<8x128xf32>
    %c32_140 = arith.constant 32 : index
    %c0_141 = arith.constant 0 : index
    %118 = vector.load %arg15[%c32_140, %c0_141] : memref<344x128xf32, #tpu.memory_space<vmem>>, vector<8x128xf32>
    tpu.vector_store %arg15[%c32_140, %c0_141], %117 {strides = array<i32>} : memref<344x128xf32, #tpu.memory_space<vmem>>, vector<8x128xf32>,
    %c0_142 = arith.constant 0 : index
    %c5_143 = arith.constant 5 : index
    %119 = vector.load %arg14[%c0_142, %c5_143] : memref<8x166xf32, #tpu.memory_space<vmem>>, vector<8x128xf32>
    %c40_144 = arith.constant 40 : index
    %c0_145 = arith.constant 0 : index
    %120 = vector.load %arg15[%c40_144, %c0_145] : memref<344x128xf32, #tpu.memory_space<vmem>>, vector<8x128xf32>
    tpu.vector_store %arg15[%c40_144, %c0_145], %119 {strides = array<i32>} : memref<344x128xf32, #tpu.memory_space<vmem>>, vector<8x128xf32>,
    %c0_146 = arith.constant 0 : index
    %c6_147 = arith.constant 6 : index
    %121 = vector.load %arg14[%c0_146, %c6_147] : memref<8x166xf32, #tpu.memory_space<vmem>>, vector<8x128xf32>
    %c48_148 = arith.constant 48 : index
    %c0_149 = arith.constant 0 : index
    %122 = vector.load %arg15[%c48_148, %c0_149] : memref<344x128xf32, #tpu.memory_space<vmem>>, vector<8x128xf32>
    tpu.vector_store %arg15[%c48_148, %c0_149], %121 {strides = array<i32>} : memref<344x128xf32, #tpu.memory_space<vmem>>, vector<8x128xf32>,
    %c0_150 = arith.constant 0 : index
    %c7_151 = arith.constant 7 : index
    %123 = vector.load %arg14[%c0_150, %c7_151] : memref<8x166xf32, #tpu.memory_space<vmem>>, vector<8x128xf32>
    %c56_152 = arith.constant 56 : index
    %c0_153 = arith.constant 0 : index
    %124 = vector.load %arg15[%c56_152, %c0_153] : memref<344x128xf32, #tpu.memory_space<vmem>>, vector<8x128xf32>
    tpu.vector_store %arg15[%c56_152, %c0_153], %123 {strides = array<i32>} : memref<344x128xf32, #tpu.memory_space<vmem>>, vector<8x128xf32>,
    %c0_154 = arith.constant 0 : index
    %c8_155 = arith.constant 8 : index
    %125 = vector.load %arg14[%c0_154, %c8_155] : memref<8x166xf32, #tpu.memory_space<vmem>>, vector<8x128xf32>
    %c64_156 = arith.constant 64 : index
    %c0_157 = arith.constant 0 : index
    %126 = vector.load %arg15[%c64_156, %c0_157] : memref<344x128xf32, #tpu.memory_space<vmem>>, vector<8x128xf32>
    tpu.vector_store %arg15[%c64_156, %c0_157], %125 {strides = array<i32>} : memref<344x128xf32, #tpu.memory_space<vmem>>, vector<8x128xf32>,
    %c0_158 = arith.constant 0 : index
    %c9_159 = arith.constant 9 : index
    %127 = vector.load %arg14[%c0_158, %c9_159] : memref<8x166xf32, #tpu.memory_space<vmem>>, vector<8x128xf32>
    %c72_160 = arith.constant 72 : index
    %c0_161 = arith.constant 0 : index
    %128 = vector.load %arg15[%c72_160, %c0_161] : memref<344x128xf32, #tpu.memory_space<vmem>>, vector<8x128xf32>
    tpu.vector_store %arg15[%c72_160, %c0_161], %127 {strides = array<i32>} : memref<344x128xf32, #tpu.memory_space<vmem>>, vector<8x128xf32>,
    %c0_162 = arith.constant 0 : index
    %c10_163 = arith.constant 10 : index
    %129 = vector.load %arg14[%c0_162, %c10_163] : memref<8x166xf32, #tpu.memory_space<vmem>>, vector<8x128xf32>
    %c80_164 = arith.constant 80 : index
    %c0_165 = arith.constant 0 : index
    %130 = vector.load %arg15[%c80_164, %c0_165] : memref<344x128xf32, #tpu.memory_space<vmem>>, vector<8x128xf32>
    tpu.vector_store %arg15[%c80_164, %c0_165], %129 {strides = array<i32>} : memref<344x128xf32, #tpu.memory_space<vmem>>, vector<8x128xf32>,
    %c0_166 = arith.constant 0 : index
    %c11_167 = arith.constant 11 : index
    %131 = vector.load %arg14[%c0_166, %c11_167] : memref<8x166xf32, #tpu.memory_space<vmem>>, vector<8x128xf32>
    %c88_168 = arith.constant 88 : index
    %c0_169 = arith.constant 0 : index
    %132 = vector.load %arg15[%c88_168, %c0_169] : memref<344x128xf32, #tpu.memory_space<vmem>>, vector<8x128xf32>
    tpu.vector_store %arg15[%c88_168, %c0_169], %131 {strides = array<i32>} : memref<344x128xf32, #tpu.memory_space<vmem>>, vector<8x128xf32>,
    %c0_170 = arith.constant 0 : index
    %c12_171 = arith.constant 12 : index
    %133 = vector.load %arg14[%c0_170, %c12_171] : memref<8x166xf32, #tpu.memory_space<vmem>>, vector<8x128xf32>
    %c96_172 = arith.constant 96 : index
    %c0_173 = arith.constant 0 : index
    %134 = vector.load %arg15[%c96_172, %c0_173] : memref<344x128xf32, #tpu.memory_space<vmem>>, vector<8x128xf32>
    tpu.vector_store %arg15[%c96_172, %c0_173], %133 {strides = array<i32>} : memref<344x128xf32, #tpu.memory_space<vmem>>, vector<8x128xf32>,
    %c0_174 = arith.constant 0 : index
    %c13_175 = arith.constant 13 : index
    %135 = vector.load %arg14[%c0_174, %c13_175] : memref<8x166xf32, #tpu.memory_space<vmem>>, vector<8x128xf32>
    %c104_176 = arith.constant 104 : index
    %c0_177 = arith.constant 0 : index
    %136 = vector.load %arg15[%c104_176, %c0_177] : memref<344x128xf32, #tpu.memory_space<vmem>>, vector<8x128xf32>
    tpu.vector_store %arg15[%c104_176, %c0_177], %135 {strides = array<i32>} : memref<344x128xf32, #tpu.memory_space<vmem>>, vector<8x128xf32>,
    %c0_178 = arith.constant 0 : index
    %c14_179 = arith.constant 14 : index
    %137 = vector.load %arg14[%c0_178, %c14_179] : memref<8x166xf32, #tpu.memory_space<vmem>>, vector<8x128xf32>
    %c112_180 = arith.constant 112 : index
    %c0_181 = arith.constant 0 : index
    %138 = vector.load %arg15[%c112_180, %c0_181] : memref<344x128xf32, #tpu.memory_space<vmem>>, vector<8x128xf32>
    tpu.vector_store %arg15[%c112_180, %c0_181], %137 {strides = array<i32>} : memref<344x128xf32, #tpu.memory_space<vmem>>, vector<8x128xf32>,
    %c0_182 = arith.constant 0 : index
    %c15_183 = arith.constant 15 : index
    %139 = vector.load %arg14[%c0_182, %c15_183] : memref<8x166xf32, #tpu.memory_space<vmem>>, vector<8x128xf32>
    %c120_184 = arith.constant 120 : index
    %c0_185 = arith.constant 0 : index
    %140 = vector.load %arg15[%c120_184, %c0_185] : memref<344x128xf32, #tpu.memory_space<vmem>>, vector<8x128xf32>
    tpu.vector_store %arg15[%c120_184, %c0_185], %139 {strides = array<i32>} : memref<344x128xf32, #tpu.memory_space<vmem>>, vector<8x128xf32>,
    %c0_186 = arith.constant 0 : index
    %c16_187 = arith.constant 16 : index
    %141 = vector.load %arg14[%c0_186, %c16_187] : memref<8x166xf32, #tpu.memory_space<vmem>>, vector<8x128xf32>
    %c128_188 = arith.constant 128 : index
    %c0_189 = arith.constant 0 : index
    %142 = vector.load %arg15[%c128_188, %c0_189] : memref<344x128xf32, #tpu.memory_space<vmem>>, vector<8x128xf32>
    tpu.vector_store %arg15[%c128_188, %c0_189], %141 {strides = array<i32>} : memref<344x128xf32, #tpu.memory_space<vmem>>, vector<8x128xf32>,
    %c0_190 = arith.constant 0 : index
    %c17_191 = arith.constant 17 : index
    %143 = vector.load %arg14[%c0_190, %c17_191] : memref<8x166xf32, #tpu.memory_space<vmem>>, vector<8x128xf32>
    %c136_192 = arith.constant 136 : index
    %c0_193 = arith.constant 0 : index
    %144 = vector.load %arg15[%c136_192, %c0_193] : memref<344x128xf32, #tpu.memory_space<vmem>>, vector<8x128xf32>
    tpu.vector_store %arg15[%c136_192, %c0_193], %143 {strides = array<i32>} : memref<344x128xf32, #tpu.memory_space<vmem>>, vector<8x128xf32>,
    %c0_194 = arith.constant 0 : index
    %c18_195 = arith.constant 18 : index
    %145 = vector.load %arg14[%c0_194, %c18_195] : memref<8x166xf32, #tpu.memory_space<vmem>>, vector<8x128xf32>
    %c144_196 = arith.constant 144 : index
    %c0_197 = arith.constant 0 : index
    %146 = vector.load %arg15[%c144_196, %c0_197] : memref<344x128xf32, #tpu.memory_space<vmem>>, vector<8x128xf32>
    tpu.vector_store %arg15[%c144_196, %c0_197], %145 {strides = array<i32>} : memref<344x128xf32, #tpu.memory_space<vmem>>, vector<8x128xf32>,
    %c0_198 = arith.constant 0 : index
    %c19_199 = arith.constant 19 : index
    %147 = vector.load %arg14[%c0_198, %c19_199] : memref<8x166xf32, #tpu.memory_space<vmem>>, vector<8x128xf32>
    %c152_200 = arith.constant 152 : index
    %c0_201 = arith.constant 0 : index
    %148 = vector.load %arg15[%c152_200, %c0_201] : memref<344x128xf32, #tpu.memory_space<vmem>>, vector<8x128xf32>
    tpu.vector_store %arg15[%c152_200, %c0_201], %147 {strides = array<i32>} : memref<344x128xf32, #tpu.memory_space<vmem>>, vector<8x128xf32>,
    %c0_202 = arith.constant 0 : index
    %c20_203 = arith.constant 20 : index
    %149 = vector.load %arg14[%c0_202, %c20_203] : memref<8x166xf32, #tpu.memory_space<vmem>>, vector<8x128xf32>
    %c160_204 = arith.constant 160 : index
    %c0_205 = arith.constant 0 : index
    %150 = vector.load %arg15[%c160_204, %c0_205] : memref<344x128xf32, #tpu.memory_space<vmem>>, vector<8x128xf32>
    tpu.vector_store %arg15[%c160_204, %c0_205], %149 {strides = array<i32>} : memref<344x128xf32, #tpu.memory_space<vmem>>, vector<8x128xf32>,
    %c0_206 = arith.constant 0 : index
    %c21_207 = arith.constant 21 : index
    %151 = vector.load %arg14[%c0_206, %c21_207] : memref<8x166xf32, #tpu.memory_space<vmem>>, vector<8x128xf32>
    %c168_208 = arith.constant 168 : index
    %c0_209 = arith.constant 0 : index
    %152 = vector.load %arg15[%c168_208, %c0_209] : memref<344x128xf32, #tpu.memory_space<vmem>>, vector<8x128xf32>
    tpu.vector_store %arg15[%c168_208, %c0_209], %151 {strides = array<i32>} : memref<344x128xf32, #tpu.memory_space<vmem>>, vector<8x128xf32>,
    %c0_210 = arith.constant 0 : index
    %c22_211 = arith.constant 22 : index
    %153 = vector.load %arg14[%c0_210, %c22_211] : memref<8x166xf32, #tpu.memory_space<vmem>>, vector<8x128xf32>
    %c176_212 = arith.constant 176 : index
    %c0_213 = arith.constant 0 : index
    %154 = vector.load %arg15[%c176_212, %c0_213] : memref<344x128xf32, #tpu.memory_space<vmem>>, vector<8x128xf32>
    tpu.vector_store %arg15[%c176_212, %c0_213], %153 {strides = array<i32>} : memref<344x128xf32, #tpu.memory_space<vmem>>, vector<8x128xf32>,
    %c0_214 = arith.constant 0 : index
    %c23_215 = arith.constant 23 : index
    %155 = vector.load %arg14[%c0_214, %c23_215] : memref<8x166xf32, #tpu.memory_space<vmem>>, vector<8x128xf32>
    %c184_216 = arith.constant 184 : index
    %c0_217 = arith.constant 0 : index
    %156 = vector.load %arg15[%c184_216, %c0_217] : memref<344x128xf32, #tpu.memory_space<vmem>>, vector<8x128xf32>
    tpu.vector_store %arg15[%c184_216, %c0_217], %155 {strides = array<i32>} : memref<344x128xf32, #tpu.memory_space<vmem>>, vector<8x128xf32>,
    %c0_218 = arith.constant 0 : index
    %c24_219 = arith.constant 24 : index
    %157 = vector.load %arg14[%c0_218, %c24_219] : memref<8x166xf32, #tpu.memory_space<vmem>>, vector<8x128xf32>
    %c192_220 = arith.constant 192 : index
    %c0_221 = arith.constant 0 : index
    %158 = vector.load %arg15[%c192_220, %c0_221] : memref<344x128xf32, #tpu.memory_space<vmem>>, vector<8x128xf32>
    tpu.vector_store %arg15[%c192_220, %c0_221], %157 {strides = array<i32>} : memref<344x128xf32, #tpu.memory_space<vmem>>, vector<8x128xf32>,
    %c0_222 = arith.constant 0 : index
    %c25_223 = arith.constant 25 : index
    %159 = vector.load %arg14[%c0_222, %c25_223] : memref<8x166xf32, #tpu.memory_space<vmem>>, vector<8x128xf32>
    %c200_224 = arith.constant 200 : index
    %c0_225 = arith.constant 0 : index
    %160 = vector.load %arg15[%c200_224, %c0_225] : memref<344x128xf32, #tpu.memory_space<vmem>>, vector<8x128xf32>
    tpu.vector_store %arg15[%c200_224, %c0_225], %159 {strides = array<i32>} : memref<344x128xf32, #tpu.memory_space<vmem>>, vector<8x128xf32>,
    %c0_226 = arith.constant 0 : index
    %c26_227 = arith.constant 26 : index
    %161 = vector.load %arg14[%c0_226, %c26_227] : memref<8x166xf32, #tpu.memory_space<vmem>>, vector<8x128xf32>
    %c208_228 = arith.constant 208 : index
    %c0_229 = arith.constant 0 : index
    %162 = vector.load %arg15[%c208_228, %c0_229] : memref<344x128xf32, #tpu.memory_space<vmem>>, vector<8x128xf32>
    tpu.vector_store %arg15[%c208_228, %c0_229], %161 {strides = array<i32>} : memref<344x128xf32, #tpu.memory_space<vmem>>, vector<8x128xf32>,
    %c0_230 = arith.constant 0 : index
    %c27_231 = arith.constant 27 : index
    %163 = vector.load %arg14[%c0_230, %c27_231] : memref<8x166xf32, #tpu.memory_space<vmem>>, vector<8x128xf32>
    %c216_232 = arith.constant 216 : index
    %c0_233 = arith.constant 0 : index
    %164 = vector.load %arg15[%c216_232, %c0_233] : memref<344x128xf32, #tpu.memory_space<vmem>>, vector<8x128xf32>
    tpu.vector_store %arg15[%c216_232, %c0_233], %163 {strides = array<i32>} : memref<344x128xf32, #tpu.memory_space<vmem>>, vector<8x128xf32>,
    %c0_234 = arith.constant 0 : index
    %c28_235 = arith.constant 28 : index
    %165 = vector.load %arg14[%c0_234, %c28_235] : memref<8x166xf32, #tpu.memory_space<vmem>>, vector<8x128xf32>
    %c224_236 = arith.constant 224 : index
    %c0_237 = arith.constant 0 : index
    %166 = vector.load %arg15[%c224_236, %c0_237] : memref<344x128xf32, #tpu.memory_space<vmem>>, vector<8x128xf32>
    tpu.vector_store %arg15[%c224_236, %c0_237], %165 {strides = array<i32>} : memref<344x128xf32, #tpu.memory_space<vmem>>, vector<8x128xf32>,
    %c0_238 = arith.constant 0 : index
    %c29_239 = arith.constant 29 : index
    %167 = vector.load %arg14[%c0_238, %c29_239] : memref<8x166xf32, #tpu.memory_space<vmem>>, vector<8x128xf32>
    %c232_240 = arith.constant 232 : index
    %c0_241 = arith.constant 0 : index
    %168 = vector.load %arg15[%c232_240, %c0_241] : memref<344x128xf32, #tpu.memory_space<vmem>>, vector<8x128xf32>
    tpu.vector_store %arg15[%c232_240, %c0_241], %167 {strides = array<i32>} : memref<344x128xf32, #tpu.memory_space<vmem>>, vector<8x128xf32>,
    %c0_242 = arith.constant 0 : index
    %c30_243 = arith.constant 30 : index
    %169 = vector.load %arg14[%c0_242, %c30_243] : memref<8x166xf32, #tpu.memory_space<vmem>>, vector<8x128xf32>
    %c240_244 = arith.constant 240 : index
    %c0_245 = arith.constant 0 : index
    %170 = vector.load %arg15[%c240_244, %c0_245] : memref<344x128xf32, #tpu.memory_space<vmem>>, vector<8x128xf32>
    tpu.vector_store %arg15[%c240_244, %c0_245], %169 {strides = array<i32>} : memref<344x128xf32, #tpu.memory_space<vmem>>, vector<8x128xf32>,
    %c0_246 = arith.constant 0 : index
    %c31_247 = arith.constant 31 : index
    %171 = vector.load %arg14[%c0_246, %c31_247] : memref<8x166xf32, #tpu.memory_space<vmem>>, vector<8x128xf32>
    %c248_248 = arith.constant 248 : index
    %c0_249 = arith.constant 0 : index
    %172 = vector.load %arg15[%c248_248, %c0_249] : memref<344x128xf32, #tpu.memory_space<vmem>>, vector<8x128xf32>
    tpu.vector_store %arg15[%c248_248, %c0_249], %171 {strides = array<i32>} : memref<344x128xf32, #tpu.memory_space<vmem>>, vector<8x128xf32>,
    %c0_250 = arith.constant 0 : index
    %c32_251 = arith.constant 32 : index
    %173 = vector.load %arg14[%c0_250, %c32_251] : memref<8x166xf32, #tpu.memory_space<vmem>>, vector<8x128xf32>
    %c256_252 = arith.constant 256 : index
    %c0_253 = arith.constant 0 : index
    %174 = vector.load %arg15[%c256_252, %c0_253] : memref<344x128xf32, #tpu.memory_space<vmem>>, vector<8x128xf32>
    tpu.vector_store %arg15[%c256_252, %c0_253], %173 {strides = array<i32>} : memref<344x128xf32, #tpu.memory_space<vmem>>, vector<8x128xf32>,
    %c0_254 = arith.constant 0 : index
    %c33_255 = arith.constant 33 : index
    %175 = vector.load %arg14[%c0_254, %c33_255] : memref<8x166xf32, #tpu.memory_space<vmem>>, vector<8x128xf32>
    %c264_256 = arith.constant 264 : index
    %c0_257 = arith.constant 0 : index
    %176 = vector.load %arg15[%c264_256, %c0_257] : memref<344x128xf32, #tpu.memory_space<vmem>>, vector<8x128xf32>
    tpu.vector_store %arg15[%c264_256, %c0_257], %175 {strides = array<i32>} : memref<344x128xf32, #tpu.memory_space<vmem>>, vector<8x128xf32>,
    %c0_258 = arith.constant 0 : index
    %c34_259 = arith.constant 34 : index
    %177 = vector.load %arg14[%c0_258, %c34_259] : memref<8x166xf32, #tpu.memory_space<vmem>>, vector<8x128xf32>
    %c272_260 = arith.constant 272 : index
    %c0_261 = arith.constant 0 : index
    %178 = vector.load %arg15[%c272_260, %c0_261] : memref<344x128xf32, #tpu.memory_space<vmem>>, vector<8x128xf32>
    tpu.vector_store %arg15[%c272_260, %c0_261], %177 {strides = array<i32>} : memref<344x128xf32, #tpu.memory_space<vmem>>, vector<8x128xf32>,
    %c0_262 = arith.constant 0 : index
    %c35_263 = arith.constant 35 : index
    %179 = vector.load %arg14[%c0_262, %c35_263] : memref<8x166xf32, #tpu.memory_space<vmem>>, vector<8x128xf32>
    %c280_264 = arith.constant 280 : index
    %c0_265 = arith.constant 0 : index
    %180 = vector.load %arg15[%c280_264, %c0_265] : memref<344x128xf32, #tpu.memory_space<vmem>>, vector<8x128xf32>
    tpu.vector_store %arg15[%c280_264, %c0_265], %179 {strides = array<i32>} : memref<344x128xf32, #tpu.memory_space<vmem>>, vector<8x128xf32>,
    %c0_266 = arith.constant 0 : index
    %c36_267 = arith.constant 36 : index
    %181 = vector.load %arg14[%c0_266, %c36_267] : memref<8x166xf32, #tpu.memory_space<vmem>>, vector<8x128xf32>
    %c288_268 = arith.constant 288 : index
    %c0_269 = arith.constant 0 : index
    %182 = vector.load %arg15[%c288_268, %c0_269] : memref<344x128xf32, #tpu.memory_space<vmem>>, vector<8x128xf32>
    tpu.vector_store %arg15[%c288_268, %c0_269], %181 {strides = array<i32>} : memref<344x128xf32, #tpu.memory_space<vmem>>, vector<8x128xf32>,
    %c0_270 = arith.constant 0 : index
    %c37_271 = arith.constant 37 : index
    %183 = vector.load %arg14[%c0_270, %c37_271] : memref<8x166xf32, #tpu.memory_space<vmem>>, vector<8x128xf32>
    %c296_272 = arith.constant 296 : index
    %c0_273 = arith.constant 0 : index
    %184 = vector.load %arg15[%c296_272, %c0_273] : memref<344x128xf32, #tpu.memory_space<vmem>>, vector<8x128xf32>
    tpu.vector_store %arg15[%c296_272, %c0_273], %183 {strides = array<i32>} : memref<344x128xf32, #tpu.memory_space<vmem>>, vector<8x128xf32>,
    %c0_274 = arith.constant 0 : index
    %c38_275 = arith.constant 38 : index
    %185 = vector.load %arg14[%c0_274, %c38_275] : memref<8x166xf32, #tpu.memory_space<vmem>>, vector<8x128xf32>
    %c304_276 = arith.constant 304 : index
    %c0_277 = arith.constant 0 : index
    %186 = vector.load %arg15[%c304_276, %c0_277] : memref<344x128xf32, #tpu.memory_space<vmem>>, vector<8x128xf32>
    tpu.vector_store %arg15[%c304_276, %c0_277], %185 {strides = array<i32>} : memref<344x128xf32, #tpu.memory_space<vmem>>, vector<8x128xf32>,
    %c0_278 = arith.constant 0 : index
    %c1_279 = arith.constant 1 : index
    %187 = vector.load %arg16[%c0_278, %c1_279] : memref<32x130xf32, #tpu.memory_space<vmem>>, vector<32x128xf32>
    tpu.vector_store %arg16[%c0_278, %c1_279], %105 {strides = array<i32>} : memref<32x130xf32, #tpu.memory_space<vmem>>, vector<32x128xf32>,
    %c0_280 = arith.constant 0 : index
    %c0_281 = arith.constant 0 : index
    %188 = vector.load %arg16[%c0_280, %c0_281] : memref<32x130xf32, #tpu.memory_space<vmem>>, vector<32x128xf32>
    %c0_282 = arith.constant 0 : index
    %c1_283 = arith.constant 1 : index
    %189 = vector.load %arg16[%c0_282, %c1_283] : memref<32x130xf32, #tpu.memory_space<vmem>>, vector<32x128xf32>
    %190 = arith.maximumf %188, %189 : vector<32x128xf32>
    %c0_284 = arith.constant 0 : index
    %c2_285 = arith.constant 2 : index
    %191 = vector.load %arg16[%c0_284, %c2_285] : memref<32x130xf32, #tpu.memory_space<vmem>>, vector<32x128xf32>
    %192 = arith.maximumf %190, %191 : vector<32x128xf32>
    %c312_286 = arith.constant 312 : index
    %c0_287 = arith.constant 0 : index
    %193 = vector.load %arg15[%c312_286, %c0_287] : memref<344x128xf32, #tpu.memory_space<vmem>>, vector<32x128xf32>
    tpu.vector_store %arg15[%c312_286, %c0_287], %192 {strides = array<i32>} : memref<344x128xf32, #tpu.memory_space<vmem>>, vector<32x128xf32>,
    %c0_288 = arith.constant 0 : index
    %c0_289 = arith.constant 0 : index
    %194 = vector.load %arg6[%c0_288, %c0_289] : memref<32x344xf32, #tpu.memory_space<vmem>>, vector<32x344xf32>
    %c0_290 = arith.constant 0 : index
    %c0_291 = arith.constant 0 : index
    %195 = vector.load %arg15[%c0_290, %c0_291] : memref<344x128xf32, #tpu.memory_space<vmem>>, vector<344x128xf32>
    %cst_292 = arith.constant dense<0.000000e+00> : vector<32x128xf32>
    %196 = tpu.matmul %194, %195, %cst_292 {dimension_numbers = #tpu.dot_dimension_numbers<[1], [0], [0], [1], [0, 0, 1, 1], [], []>} : vector<32x344xf32>, vector<344x128xf32>, vector<32x128xf32> -> vector<32x128xf32>
    %c0_293 = arith.constant 0 : index
    %c0_294 = arith.constant 0 : index
    %197 = vector.load %arg7[%c0_293, %c0_294] : memref<32x1xf32, #tpu.memory_space<vmem>>, vector<32x1xf32>
    %198 = vector.broadcast %197 : vector<32x1xf32> to vector<32x128xf32>
    %199 = arith.addf %196, %198 : vector<32x128xf32>
    %cst_295 = arith.constant 0.000000e+00 : f32
    %200 = vector.broadcast %cst_295 : f32 to vector<32x128xf32>
    %201 = arith.maximumf %199, %200 : vector<32x128xf32>
    %c0_296 = arith.constant 0 : index
    %c0_297 = arith.constant 0 : index
    %202 = vector.load %arg8[%c0_296, %c0_297] : memref<8x32xf32, #tpu.memory_space<vmem>>, vector<8x32xf32>
    %cst_298 = arith.constant dense<0.000000e+00> : vector<8x128xf32>
    %203 = tpu.matmul %202, %201, %cst_298 {dimension_numbers = #tpu.dot_dimension_numbers<[1], [0], [0], [1], [0, 0, 1, 1], [], []>} : vector<8x32xf32>, vector<32x128xf32>, vector<8x128xf32> -> vector<8x128xf32>
    %c0_299 = arith.constant 0 : index
    %c19_300 = arith.constant 19 : index
    %204 = vector.load %arg14[%c0_299, %c19_300] : memref<8x166xf32, #tpu.memory_space<vmem>>, vector<8x128xf32>
    tpu.vector_store %arg14[%c0_299, %c19_300], %203 {strides = array<i32>} : memref<8x166xf32, #tpu.memory_space<vmem>>, vector<8x128xf32>,
    %c0_301 = arith.constant 0 : index
    %c0_302 = arith.constant 0 : index
    %205 = vector.load %arg14[%c0_301, %c0_302] : memref<8x166xf32, #tpu.memory_space<vmem>>, vector<8x128xf32>
    %c0_303 = arith.constant 0 : index
    %c0_304 = arith.constant 0 : index
    %206 = vector.load %arg15[%c0_303, %c0_304] : memref<344x128xf32, #tpu.memory_space<vmem>>, vector<8x128xf32>
    tpu.vector_store %arg15[%c0_303, %c0_304], %205 {strides = array<i32>} : memref<344x128xf32, #tpu.memory_space<vmem>>, vector<8x128xf32>,
    %c0_305 = arith.constant 0 : index
    %c1_306 = arith.constant 1 : index
    %207 = vector.load %arg14[%c0_305, %c1_306] : memref<8x166xf32, #tpu.memory_space<vmem>>, vector<8x128xf32>
    %c8_307 = arith.constant 8 : index
    %c0_308 = arith.constant 0 : index
    %208 = vector.load %arg15[%c8_307, %c0_308] : memref<344x128xf32, #tpu.memory_space<vmem>>, vector<8x128xf32>
    tpu.vector_store %arg15[%c8_307, %c0_308], %207 {strides = array<i32>} : memref<344x128xf32, #tpu.memory_space<vmem>>, vector<8x128xf32>,
    %c0_309 = arith.constant 0 : index
    %c2_310 = arith.constant 2 : index
    %209 = vector.load %arg14[%c0_309, %c2_310] : memref<8x166xf32, #tpu.memory_space<vmem>>, vector<8x128xf32>
    %c16_311 = arith.constant 16 : index
    %c0_312 = arith.constant 0 : index
    %210 = vector.load %arg15[%c16_311, %c0_312] : memref<344x128xf32, #tpu.memory_space<vmem>>, vector<8x128xf32>
    tpu.vector_store %arg15[%c16_311, %c0_312], %209 {strides = array<i32>} : memref<344x128xf32, #tpu.memory_space<vmem>>, vector<8x128xf32>,
    %c0_313 = arith.constant 0 : index
    %c3_314 = arith.constant 3 : index
    %211 = vector.load %arg14[%c0_313, %c3_314] : memref<8x166xf32, #tpu.memory_space<vmem>>, vector<8x128xf32>
    %c24_315 = arith.constant 24 : index
    %c0_316 = arith.constant 0 : index
    %212 = vector.load %arg15[%c24_315, %c0_316] : memref<344x128xf32, #tpu.memory_space<vmem>>, vector<8x128xf32>
    tpu.vector_store %arg15[%c24_315, %c0_316], %211 {strides = array<i32>} : memref<344x128xf32, #tpu.memory_space<vmem>>, vector<8x128xf32>,
    %c0_317 = arith.constant 0 : index
    %c4_318 = arith.constant 4 : index
    %213 = vector.load %arg14[%c0_317, %c4_318] : memref<8x166xf32, #tpu.memory_space<vmem>>, vector<8x128xf32>
    %c32_319 = arith.constant 32 : index
    %c0_320 = arith.constant 0 : index
    %214 = vector.load %arg15[%c32_319, %c0_320] : memref<344x128xf32, #tpu.memory_space<vmem>>, vector<8x128xf32>
    tpu.vector_store %arg15[%c32_319, %c0_320], %213 {strides = array<i32>} : memref<344x128xf32, #tpu.memory_space<vmem>>, vector<8x128xf32>,
    %c0_321 = arith.constant 0 : index
    %c5_322 = arith.constant 5 : index
    %215 = vector.load %arg14[%c0_321, %c5_322] : memref<8x166xf32, #tpu.memory_space<vmem>>, vector<8x128xf32>
    %c40_323 = arith.constant 40 : index
    %c0_324 = arith.constant 0 : index
    %216 = vector.load %arg15[%c40_323, %c0_324] : memref<344x128xf32, #tpu.memory_space<vmem>>, vector<8x128xf32>
    tpu.vector_store %arg15[%c40_323, %c0_324], %215 {strides = array<i32>} : memref<344x128xf32, #tpu.memory_space<vmem>>, vector<8x128xf32>,
    %c0_325 = arith.constant 0 : index
    %c6_326 = arith.constant 6 : index
    %217 = vector.load %arg14[%c0_325, %c6_326] : memref<8x166xf32, #tpu.memory_space<vmem>>, vector<8x128xf32>
    %c48_327 = arith.constant 48 : index
    %c0_328 = arith.constant 0 : index
    %218 = vector.load %arg15[%c48_327, %c0_328] : memref<344x128xf32, #tpu.memory_space<vmem>>, vector<8x128xf32>
    tpu.vector_store %arg15[%c48_327, %c0_328], %217 {strides = array<i32>} : memref<344x128xf32, #tpu.memory_space<vmem>>, vector<8x128xf32>,
    %c0_329 = arith.constant 0 : index
    %c7_330 = arith.constant 7 : index
    %219 = vector.load %arg14[%c0_329, %c7_330] : memref<8x166xf32, #tpu.memory_space<vmem>>, vector<8x128xf32>
    %c56_331 = arith.constant 56 : index
    %c0_332 = arith.constant 0 : index
    %220 = vector.load %arg15[%c56_331, %c0_332] : memref<344x128xf32, #tpu.memory_space<vmem>>, vector<8x128xf32>
    tpu.vector_store %arg15[%c56_331, %c0_332], %219 {strides = array<i32>} : memref<344x128xf32, #tpu.memory_space<vmem>>, vector<8x128xf32>,
    %c0_333 = arith.constant 0 : index
    %c8_334 = arith.constant 8 : index
    %221 = vector.load %arg14[%c0_333, %c8_334] : memref<8x166xf32, #tpu.memory_space<vmem>>, vector<8x128xf32>
    %c64_335 = arith.constant 64 : index
    %c0_336 = arith.constant 0 : index
    %222 = vector.load %arg15[%c64_335, %c0_336] : memref<344x128xf32, #tpu.memory_space<vmem>>, vector<8x128xf32>
    tpu.vector_store %arg15[%c64_335, %c0_336], %221 {strides = array<i32>} : memref<344x128xf32, #tpu.memory_space<vmem>>, vector<8x128xf32>,
    %c0_337 = arith.constant 0 : index
    %c9_338 = arith.constant 9 : index
    %223 = vector.load %arg14[%c0_337, %c9_338] : memref<8x166xf32, #tpu.memory_space<vmem>>, vector<8x128xf32>
    %c72_339 = arith.constant 72 : index
    %c0_340 = arith.constant 0 : index
    %224 = vector.load %arg15[%c72_339, %c0_340] : memref<344x128xf32, #tpu.memory_space<vmem>>, vector<8x128xf32>
    tpu.vector_store %arg15[%c72_339, %c0_340], %223 {strides = array<i32>} : memref<344x128xf32, #tpu.memory_space<vmem>>, vector<8x128xf32>,
    %c0_341 = arith.constant 0 : index
    %c10_342 = arith.constant 10 : index
    %225 = vector.load %arg14[%c0_341, %c10_342] : memref<8x166xf32, #tpu.memory_space<vmem>>, vector<8x128xf32>
    %c80_343 = arith.constant 80 : index
    %c0_344 = arith.constant 0 : index
    %226 = vector.load %arg15[%c80_343, %c0_344] : memref<344x128xf32, #tpu.memory_space<vmem>>, vector<8x128xf32>
    tpu.vector_store %arg15[%c80_343, %c0_344], %225 {strides = array<i32>} : memref<344x128xf32, #tpu.memory_space<vmem>>, vector<8x128xf32>,
    %c0_345 = arith.constant 0 : index
    %c11_346 = arith.constant 11 : index
    %227 = vector.load %arg14[%c0_345, %c11_346] : memref<8x166xf32, #tpu.memory_space<vmem>>, vector<8x128xf32>
    %c88_347 = arith.constant 88 : index
    %c0_348 = arith.constant 0 : index
    %228 = vector.load %arg15[%c88_347, %c0_348] : memref<344x128xf32, #tpu.memory_space<vmem>>, vector<8x128xf32>
    tpu.vector_store %arg15[%c88_347, %c0_348], %227 {strides = array<i32>} : memref<344x128xf32, #tpu.memory_space<vmem>>, vector<8x128xf32>,
    %c0_349 = arith.constant 0 : index
    %c12_350 = arith.constant 12 : index
    %229 = vector.load %arg14[%c0_349, %c12_350] : memref<8x166xf32, #tpu.memory_space<vmem>>, vector<8x128xf32>
    %c96_351 = arith.constant 96 : index
    %c0_352 = arith.constant 0 : index
    %230 = vector.load %arg15[%c96_351, %c0_352] : memref<344x128xf32, #tpu.memory_space<vmem>>, vector<8x128xf32>
    tpu.vector_store %arg15[%c96_351, %c0_352], %229 {strides = array<i32>} : memref<344x128xf32, #tpu.memory_space<vmem>>, vector<8x128xf32>,
    %c0_353 = arith.constant 0 : index
    %c13_354 = arith.constant 13 : index
    %231 = vector.load %arg14[%c0_353, %c13_354] : memref<8x166xf32, #tpu.memory_space<vmem>>, vector<8x128xf32>
    %c104_355 = arith.constant 104 : index
    %c0_356 = arith.constant 0 : index
    %232 = vector.load %arg15[%c104_355, %c0_356] : memref<344x128xf32, #tpu.memory_space<vmem>>, vector<8x128xf32>
    tpu.vector_store %arg15[%c104_355, %c0_356], %231 {strides = array<i32>} : memref<344x128xf32, #tpu.memory_space<vmem>>, vector<8x128xf32>,
    %c0_357 = arith.constant 0 : index
    %c14_358 = arith.constant 14 : index
    %233 = vector.load %arg14[%c0_357, %c14_358] : memref<8x166xf32, #tpu.memory_space<vmem>>, vector<8x128xf32>
    %c112_359 = arith.constant 112 : index
    %c0_360 = arith.constant 0 : index
    %234 = vector.load %arg15[%c112_359, %c0_360] : memref<344x128xf32, #tpu.memory_space<vmem>>, vector<8x128xf32>
    tpu.vector_store %arg15[%c112_359, %c0_360], %233 {strides = array<i32>} : memref<344x128xf32, #tpu.memory_space<vmem>>, vector<8x128xf32>,
    %c0_361 = arith.constant 0 : index
    %c15_362 = arith.constant 15 : index
    %235 = vector.load %arg14[%c0_361, %c15_362] : memref<8x166xf32, #tpu.memory_space<vmem>>, vector<8x128xf32>
    %c120_363 = arith.constant 120 : index
    %c0_364 = arith.constant 0 : index
    %236 = vector.load %arg15[%c120_363, %c0_364] : memref<344x128xf32, #tpu.memory_space<vmem>>, vector<8x128xf32>
    tpu.vector_store %arg15[%c120_363, %c0_364], %235 {strides = array<i32>} : memref<344x128xf32, #tpu.memory_space<vmem>>, vector<8x128xf32>,
    %c0_365 = arith.constant 0 : index
    %c16_366 = arith.constant 16 : index
    %237 = vector.load %arg14[%c0_365, %c16_366] : memref<8x166xf32, #tpu.memory_space<vmem>>, vector<8x128xf32>
    %c128_367 = arith.constant 128 : index
    %c0_368 = arith.constant 0 : index
    %238 = vector.load %arg15[%c128_367, %c0_368] : memref<344x128xf32, #tpu.memory_space<vmem>>, vector<8x128xf32>
    tpu.vector_store %arg15[%c128_367, %c0_368], %237 {strides = array<i32>} : memref<344x128xf32, #tpu.memory_space<vmem>>, vector<8x128xf32>,
    %c0_369 = arith.constant 0 : index
    %c17_370 = arith.constant 17 : index
    %239 = vector.load %arg14[%c0_369, %c17_370] : memref<8x166xf32, #tpu.memory_space<vmem>>, vector<8x128xf32>
    %c136_371 = arith.constant 136 : index
    %c0_372 = arith.constant 0 : index
    %240 = vector.load %arg15[%c136_371, %c0_372] : memref<344x128xf32, #tpu.memory_space<vmem>>, vector<8x128xf32>
    tpu.vector_store %arg15[%c136_371, %c0_372], %239 {strides = array<i32>} : memref<344x128xf32, #tpu.memory_space<vmem>>, vector<8x128xf32>,
    %c0_373 = arith.constant 0 : index
    %c18_374 = arith.constant 18 : index
    %241 = vector.load %arg14[%c0_373, %c18_374] : memref<8x166xf32, #tpu.memory_space<vmem>>, vector<8x128xf32>
    %c144_375 = arith.constant 144 : index
    %c0_376 = arith.constant 0 : index
    %242 = vector.load %arg15[%c144_375, %c0_376] : memref<344x128xf32, #tpu.memory_space<vmem>>, vector<8x128xf32>
    tpu.vector_store %arg15[%c144_375, %c0_376], %241 {strides = array<i32>} : memref<344x128xf32, #tpu.memory_space<vmem>>, vector<8x128xf32>,
    %c0_377 = arith.constant 0 : index
    %c19_378 = arith.constant 19 : index
    %243 = vector.load %arg14[%c0_377, %c19_378] : memref<8x166xf32, #tpu.memory_space<vmem>>, vector<8x128xf32>
    %c152_379 = arith.constant 152 : index
    %c0_380 = arith.constant 0 : index
    %244 = vector.load %arg15[%c152_379, %c0_380] : memref<344x128xf32, #tpu.memory_space<vmem>>, vector<8x128xf32>
    tpu.vector_store %arg15[%c152_379, %c0_380], %243 {strides = array<i32>} : memref<344x128xf32, #tpu.memory_space<vmem>>, vector<8x128xf32>,
    %c0_381 = arith.constant 0 : index
    %c20_382 = arith.constant 20 : index
    %245 = vector.load %arg14[%c0_381, %c20_382] : memref<8x166xf32, #tpu.memory_space<vmem>>, vector<8x128xf32>
    %c160_383 = arith.constant 160 : index
    %c0_384 = arith.constant 0 : index
    %246 = vector.load %arg15[%c160_383, %c0_384] : memref<344x128xf32, #tpu.memory_space<vmem>>, vector<8x128xf32>
    tpu.vector_store %arg15[%c160_383, %c0_384], %245 {strides = array<i32>} : memref<344x128xf32, #tpu.memory_space<vmem>>, vector<8x128xf32>,
    %c0_385 = arith.constant 0 : index
    %c21_386 = arith.constant 21 : index
    %247 = vector.load %arg14[%c0_385, %c21_386] : memref<8x166xf32, #tpu.memory_space<vmem>>, vector<8x128xf32>
    %c168_387 = arith.constant 168 : index
    %c0_388 = arith.constant 0 : index
    %248 = vector.load %arg15[%c168_387, %c0_388] : memref<344x128xf32, #tpu.memory_space<vmem>>, vector<8x128xf32>
    tpu.vector_store %arg15[%c168_387, %c0_388], %247 {strides = array<i32>} : memref<344x128xf32, #tpu.memory_space<vmem>>, vector<8x128xf32>,
    %c0_389 = arith.constant 0 : index
    %c22_390 = arith.constant 22 : index
    %249 = vector.load %arg14[%c0_389, %c22_390] : memref<8x166xf32, #tpu.memory_space<vmem>>, vector<8x128xf32>
    %c176_391 = arith.constant 176 : index
    %c0_392 = arith.constant 0 : index
    %250 = vector.load %arg15[%c176_391, %c0_392] : memref<344x128xf32, #tpu.memory_space<vmem>>, vector<8x128xf32>
    tpu.vector_store %arg15[%c176_391, %c0_392], %249 {strides = array<i32>} : memref<344x128xf32, #tpu.memory_space<vmem>>, vector<8x128xf32>,
    %c0_393 = arith.constant 0 : index
    %c23_394 = arith.constant 23 : index
    %251 = vector.load %arg14[%c0_393, %c23_394] : memref<8x166xf32, #tpu.memory_space<vmem>>, vector<8x128xf32>
    %c184_395 = arith.constant 184 : index
    %c0_396 = arith.constant 0 : index
    %252 = vector.load %arg15[%c184_395, %c0_396] : memref<344x128xf32, #tpu.memory_space<vmem>>, vector<8x128xf32>
    tpu.vector_store %arg15[%c184_395, %c0_396], %251 {strides = array<i32>} : memref<344x128xf32, #tpu.memory_space<vmem>>, vector<8x128xf32>,
    %c0_397 = arith.constant 0 : index
    %c24_398 = arith.constant 24 : index
    %253 = vector.load %arg14[%c0_397, %c24_398] : memref<8x166xf32, #tpu.memory_space<vmem>>, vector<8x128xf32>
    %c192_399 = arith.constant 192 : index
    %c0_400 = arith.constant 0 : index
    %254 = vector.load %arg15[%c192_399, %c0_400] : memref<344x128xf32, #tpu.memory_space<vmem>>, vector<8x128xf32>
    tpu.vector_store %arg15[%c192_399, %c0_400], %253 {strides = array<i32>} : memref<344x128xf32, #tpu.memory_space<vmem>>, vector<8x128xf32>,
    %c0_401 = arith.constant 0 : index
    %c25_402 = arith.constant 25 : index
    %255 = vector.load %arg14[%c0_401, %c25_402] : memref<8x166xf32, #tpu.memory_space<vmem>>, vector<8x128xf32>
    %c200_403 = arith.constant 200 : index
    %c0_404 = arith.constant 0 : index
    %256 = vector.load %arg15[%c200_403, %c0_404] : memref<344x128xf32, #tpu.memory_space<vmem>>, vector<8x128xf32>
    tpu.vector_store %arg15[%c200_403, %c0_404], %255 {strides = array<i32>} : memref<344x128xf32, #tpu.memory_space<vmem>>, vector<8x128xf32>,
    %c0_405 = arith.constant 0 : index
    %c26_406 = arith.constant 26 : index
    %257 = vector.load %arg14[%c0_405, %c26_406] : memref<8x166xf32, #tpu.memory_space<vmem>>, vector<8x128xf32>
    %c208_407 = arith.constant 208 : index
    %c0_408 = arith.constant 0 : index
    %258 = vector.load %arg15[%c208_407, %c0_408] : memref<344x128xf32, #tpu.memory_space<vmem>>, vector<8x128xf32>
    tpu.vector_store %arg15[%c208_407, %c0_408], %257 {strides = array<i32>} : memref<344x128xf32, #tpu.memory_space<vmem>>, vector<8x128xf32>,
    %c0_409 = arith.constant 0 : index
    %c27_410 = arith.constant 27 : index
    %259 = vector.load %arg14[%c0_409, %c27_410] : memref<8x166xf32, #tpu.memory_space<vmem>>, vector<8x128xf32>
    %c216_411 = arith.constant 216 : index
    %c0_412 = arith.constant 0 : index
    %260 = vector.load %arg15[%c216_411, %c0_412] : memref<344x128xf32, #tpu.memory_space<vmem>>, vector<8x128xf32>
    tpu.vector_store %arg15[%c216_411, %c0_412], %259 {strides = array<i32>} : memref<344x128xf32, #tpu.memory_space<vmem>>, vector<8x128xf32>,
    %c0_413 = arith.constant 0 : index
    %c28_414 = arith.constant 28 : index
    %261 = vector.load %arg14[%c0_413, %c28_414] : memref<8x166xf32, #tpu.memory_space<vmem>>, vector<8x128xf32>
    %c224_415 = arith.constant 224 : index
    %c0_416 = arith.constant 0 : index
    %262 = vector.load %arg15[%c224_415, %c0_416] : memref<344x128xf32, #tpu.memory_space<vmem>>, vector<8x128xf32>
    tpu.vector_store %arg15[%c224_415, %c0_416], %261 {strides = array<i32>} : memref<344x128xf32, #tpu.memory_space<vmem>>, vector<8x128xf32>,
    %c0_417 = arith.constant 0 : index
    %c29_418 = arith.constant 29 : index
    %263 = vector.load %arg14[%c0_417, %c29_418] : memref<8x166xf32, #tpu.memory_space<vmem>>, vector<8x128xf32>
    %c232_419 = arith.constant 232 : index
    %c0_420 = arith.constant 0 : index
    %264 = vector.load %arg15[%c232_419, %c0_420] : memref<344x128xf32, #tpu.memory_space<vmem>>, vector<8x128xf32>
    tpu.vector_store %arg15[%c232_419, %c0_420], %263 {strides = array<i32>} : memref<344x128xf32, #tpu.memory_space<vmem>>, vector<8x128xf32>,
    %c0_421 = arith.constant 0 : index
    %c30_422 = arith.constant 30 : index
    %265 = vector.load %arg14[%c0_421, %c30_422] : memref<8x166xf32, #tpu.memory_space<vmem>>, vector<8x128xf32>
    %c240_423 = arith.constant 240 : index
    %c0_424 = arith.constant 0 : index
    %266 = vector.load %arg15[%c240_423, %c0_424] : memref<344x128xf32, #tpu.memory_space<vmem>>, vector<8x128xf32>
    tpu.vector_store %arg15[%c240_423, %c0_424], %265 {strides = array<i32>} : memref<344x128xf32, #tpu.memory_space<vmem>>, vector<8x128xf32>,
    %c0_425 = arith.constant 0 : index
    %c31_426 = arith.constant 31 : index
    %267 = vector.load %arg14[%c0_425, %c31_426] : memref<8x166xf32, #tpu.memory_space<vmem>>, vector<8x128xf32>
    %c248_427 = arith.constant 248 : index
    %c0_428 = arith.constant 0 : index
    %268 = vector.load %arg15[%c248_427, %c0_428] : memref<344x128xf32, #tpu.memory_space<vmem>>, vector<8x128xf32>
    tpu.vector_store %arg15[%c248_427, %c0_428], %267 {strides = array<i32>} : memref<344x128xf32, #tpu.memory_space<vmem>>, vector<8x128xf32>,
    %c0_429 = arith.constant 0 : index
    %c32_430 = arith.constant 32 : index
    %269 = vector.load %arg14[%c0_429, %c32_430] : memref<8x166xf32, #tpu.memory_space<vmem>>, vector<8x128xf32>
    %c256_431 = arith.constant 256 : index
    %c0_432 = arith.constant 0 : index
    %270 = vector.load %arg15[%c256_431, %c0_432] : memref<344x128xf32, #tpu.memory_space<vmem>>, vector<8x128xf32>
    tpu.vector_store %arg15[%c256_431, %c0_432], %269 {strides = array<i32>} : memref<344x128xf32, #tpu.memory_space<vmem>>, vector<8x128xf32>,
    %c0_433 = arith.constant 0 : index
    %c33_434 = arith.constant 33 : index
    %271 = vector.load %arg14[%c0_433, %c33_434] : memref<8x166xf32, #tpu.memory_space<vmem>>, vector<8x128xf32>
    %c264_435 = arith.constant 264 : index
    %c0_436 = arith.constant 0 : index
    %272 = vector.load %arg15[%c264_435, %c0_436] : memref<344x128xf32, #tpu.memory_space<vmem>>, vector<8x128xf32>
    tpu.vector_store %arg15[%c264_435, %c0_436], %271 {strides = array<i32>} : memref<344x128xf32, #tpu.memory_space<vmem>>, vector<8x128xf32>,
    %c0_437 = arith.constant 0 : index
    %c34_438 = arith.constant 34 : index
    %273 = vector.load %arg14[%c0_437, %c34_438] : memref<8x166xf32, #tpu.memory_space<vmem>>, vector<8x128xf32>
    %c272_439 = arith.constant 272 : index
    %c0_440 = arith.constant 0 : index
    %274 = vector.load %arg15[%c272_439, %c0_440] : memref<344x128xf32, #tpu.memory_space<vmem>>, vector<8x128xf32>
    tpu.vector_store %arg15[%c272_439, %c0_440], %273 {strides = array<i32>} : memref<344x128xf32, #tpu.memory_space<vmem>>, vector<8x128xf32>,
    %c0_441 = arith.constant 0 : index
    %c35_442 = arith.constant 35 : index
    %275 = vector.load %arg14[%c0_441, %c35_442] : memref<8x166xf32, #tpu.memory_space<vmem>>, vector<8x128xf32>
    %c280_443 = arith.constant 280 : index
    %c0_444 = arith.constant 0 : index
    %276 = vector.load %arg15[%c280_443, %c0_444] : memref<344x128xf32, #tpu.memory_space<vmem>>, vector<8x128xf32>
    tpu.vector_store %arg15[%c280_443, %c0_444], %275 {strides = array<i32>} : memref<344x128xf32, #tpu.memory_space<vmem>>, vector<8x128xf32>,
    %c0_445 = arith.constant 0 : index
    %c36_446 = arith.constant 36 : index
    %277 = vector.load %arg14[%c0_445, %c36_446] : memref<8x166xf32, #tpu.memory_space<vmem>>, vector<8x128xf32>
    %c288_447 = arith.constant 288 : index
    %c0_448 = arith.constant 0 : index
    %278 = vector.load %arg15[%c288_447, %c0_448] : memref<344x128xf32, #tpu.memory_space<vmem>>, vector<8x128xf32>
    tpu.vector_store %arg15[%c288_447, %c0_448], %277 {strides = array<i32>} : memref<344x128xf32, #tpu.memory_space<vmem>>, vector<8x128xf32>,
    %c0_449 = arith.constant 0 : index
    %c37_450 = arith.constant 37 : index
    %279 = vector.load %arg14[%c0_449, %c37_450] : memref<8x166xf32, #tpu.memory_space<vmem>>, vector<8x128xf32>
    %c296_451 = arith.constant 296 : index
    %c0_452 = arith.constant 0 : index
    %280 = vector.load %arg15[%c296_451, %c0_452] : memref<344x128xf32, #tpu.memory_space<vmem>>, vector<8x128xf32>
    tpu.vector_store %arg15[%c296_451, %c0_452], %279 {strides = array<i32>} : memref<344x128xf32, #tpu.memory_space<vmem>>, vector<8x128xf32>,
    %c0_453 = arith.constant 0 : index
    %c38_454 = arith.constant 38 : index
    %281 = vector.load %arg14[%c0_453, %c38_454] : memref<8x166xf32, #tpu.memory_space<vmem>>, vector<8x128xf32>
    %c304_455 = arith.constant 304 : index
    %c0_456 = arith.constant 0 : index
    %282 = vector.load %arg15[%c304_455, %c0_456] : memref<344x128xf32, #tpu.memory_space<vmem>>, vector<8x128xf32>
    tpu.vector_store %arg15[%c304_455, %c0_456], %281 {strides = array<i32>} : memref<344x128xf32, #tpu.memory_space<vmem>>, vector<8x128xf32>,
    %c0_457 = arith.constant 0 : index
    %c1_458 = arith.constant 1 : index
    %283 = vector.load %arg16[%c0_457, %c1_458] : memref<32x130xf32, #tpu.memory_space<vmem>>, vector<32x128xf32>
    tpu.vector_store %arg16[%c0_457, %c1_458], %201 {strides = array<i32>} : memref<32x130xf32, #tpu.memory_space<vmem>>, vector<32x128xf32>,
    %c0_459 = arith.constant 0 : index
    %c0_460 = arith.constant 0 : index
    %284 = vector.load %arg16[%c0_459, %c0_460] : memref<32x130xf32, #tpu.memory_space<vmem>>, vector<32x128xf32>
    %c0_461 = arith.constant 0 : index
    %c1_462 = arith.constant 1 : index
    %285 = vector.load %arg16[%c0_461, %c1_462] : memref<32x130xf32, #tpu.memory_space<vmem>>, vector<32x128xf32>
    %286 = arith.maximumf %284, %285 : vector<32x128xf32>
    %c0_463 = arith.constant 0 : index
    %c2_464 = arith.constant 2 : index
    %287 = vector.load %arg16[%c0_463, %c2_464] : memref<32x130xf32, #tpu.memory_space<vmem>>, vector<32x128xf32>
    %288 = arith.maximumf %286, %287 : vector<32x128xf32>
    %c312_465 = arith.constant 312 : index
    %c0_466 = arith.constant 0 : index
    %289 = vector.load %arg15[%c312_465, %c0_466] : memref<344x128xf32, #tpu.memory_space<vmem>>, vector<32x128xf32>
    tpu.vector_store %arg15[%c312_465, %c0_466], %288 {strides = array<i32>} : memref<344x128xf32, #tpu.memory_space<vmem>>, vector<32x128xf32>,
    %c0_467 = arith.constant 0 : index
    %c0_468 = arith.constant 0 : index
    %290 = vector.load %arg9[%c0_467, %c0_468] : memref<32x344xf32, #tpu.memory_space<vmem>>, vector<32x344xf32>
    %c0_469 = arith.constant 0 : index
    %c0_470 = arith.constant 0 : index
    %291 = vector.load %arg15[%c0_469, %c0_470] : memref<344x128xf32, #tpu.memory_space<vmem>>, vector<344x128xf32>
    %cst_471 = arith.constant dense<0.000000e+00> : vector<32x128xf32>
    %292 = tpu.matmul %290, %291, %cst_471 {dimension_numbers = #tpu.dot_dimension_numbers<[1], [0], [0], [1], [0, 0, 1, 1], [], []>} : vector<32x344xf32>, vector<344x128xf32>, vector<32x128xf32> -> vector<32x128xf32>
    %c0_472 = arith.constant 0 : index
    %c0_473 = arith.constant 0 : index
    %293 = vector.load %arg10[%c0_472, %c0_473] : memref<32x1xf32, #tpu.memory_space<vmem>>, vector<32x1xf32>
    %294 = vector.broadcast %293 : vector<32x1xf32> to vector<32x128xf32>
    %295 = arith.addf %292, %294 : vector<32x128xf32>
    %cst_474 = arith.constant 0.000000e+00 : f32
    %296 = vector.broadcast %cst_474 : f32 to vector<32x128xf32>
    %297 = arith.maximumf %295, %296 : vector<32x128xf32>
    %c0_475 = arith.constant 0 : index
    %c0_476 = arith.constant 0 : index
    %298 = vector.load %arg11[%c0_475, %c0_476] : memref<32x8xf32, #tpu.memory_space<vmem>>, vector<32x8xf32>
    %cst_477 = arith.constant dense<0.000000e+00> : vector<32x128xf32>
    %299 = tpu.matmul %298, %9, %cst_477 {dimension_numbers = #tpu.dot_dimension_numbers<[1], [0], [0], [1], [0, 0, 1, 1], [], []>} : vector<32x8xf32>, vector<8x128xf32>, vector<32x128xf32> -> vector<32x128xf32>
    %300 = arith.addf %297, %299 : vector<32x128xf32>
    %c0_478 = arith.constant 0 : index
    %c0_479 = arith.constant 0 : index
    %301 = vector.load %arg12[%c0_478, %c0_479] : memref<32x1xf32, #tpu.memory_space<vmem>>, vector<32x1xf32>
    %302 = vector.broadcast %301 : vector<32x1xf32> to vector<32x128xf32>
    %303 = arith.addf %300, %302 : vector<32x128xf32>
    %cst_480 = arith.constant 0.000000e+00 : f32
    %304 = vector.broadcast %cst_480 : f32 to vector<32x128xf32>
    %305 = arith.maximumf %303, %304 : vector<32x128xf32>
    %c0_481 = arith.constant 0 : index
    %c0_482 = arith.constant 0 : index
    %c0_483 = arith.constant 0 : index
    %306 = vector.load %arg13[%c0_481, %c0_482, %c0_483] : memref<1x32x128xf32, #tpu.memory_space<vmem>>, vector<1x32x128xf32>
    %307 = vector.shape_cast %306 : vector<1x32x128xf32> to vector<32x128xf32>
    %308 = vector.shape_cast %305 : vector<32x128xf32> to vector<1x32x128xf32>
    tpu.vector_store %arg13[%c0_481, %c0_482, %c0_483], %308 {strides = array<i32>} : memref<1x32x128xf32, #tpu.memory_space<vmem>>, vector<1x32x128xf32>,
    return
  }
  func.func @transform_0(%arg0: i32) -> (i32, i32, i32) {
    %c0_i32 = arith.constant 0 : i32
    %c0_i32_0 = arith.constant 0 : i32
    %c0_i32_1 = arith.constant 0 : i32
    return %arg0, %c0_i32, %c0_i32_0 : i32, i32, i32
  }
  func.func @transform_1(%arg0: i32) -> (i32, i32) {
    %c0_i32 = arith.constant 0 : i32
    %c0_i32_0 = arith.constant 0 : i32
    %c0_i32_1 = arith.constant 0 : i32
    return %c0_i32, %c0_i32_0 : i32, i32
  }
  func.func @transform_2(%arg0: i32) -> (i32, i32) {
    %c0_i32 = arith.constant 0 : i32
    %c0_i32_0 = arith.constant 0 : i32
    %c0_i32_1 = arith.constant 0 : i32
    return %c0_i32, %c0_i32_0 : i32, i32
  }
  func.func @transform_3(%arg0: i32) -> (i32, i32) {
    %c0_i32 = arith.constant 0 : i32
    %c0_i32_0 = arith.constant 0 : i32
    %c0_i32_1 = arith.constant 0 : i32
    return %c0_i32, %c0_i32_0 : i32, i32
  }
  func.func @transform_4(%arg0: i32) -> (i32, i32) {
    %c0_i32 = arith.constant 0 : i32
    %c0_i32_0 = arith.constant 0 : i32
    %c0_i32_1 = arith.constant 0 : i32
    return %c0_i32, %c0_i32_0 : i32, i32
  }
  func.func @transform_5(%arg0: i32) -> (i32, i32) {
    %c0_i32 = arith.constant 0 : i32
    %c0_i32_0 = arith.constant 0 : i32
    %c0_i32_1 = arith.constant 0 : i32
    return %c0_i32, %c0_i32_0 : i32, i32
  }
  func.func @transform_6(%arg0: i32) -> (i32, i32) {
    %c0_i32 = arith.constant 0 : i32
    %c0_i32_0 = arith.constant 0 : i32
    %c0_i32_1 = arith.constant 0 : i32
    return %c0_i32, %c0_i32_0 : i32, i32
  }
  func.func @transform_7(%arg0: i32) -> (i32, i32) {
    %c0_i32 = arith.constant 0 : i32
    %c0_i32_0 = arith.constant 0 : i32
    %c0_i32_1 = arith.constant 0 : i32
    return %c0_i32, %c0_i32_0 : i32, i32
  }
  func.func @transform_8(%arg0: i32) -> (i32, i32) {
    %c0_i32 = arith.constant 0 : i32
    %c0_i32_0 = arith.constant 0 : i32
    %c0_i32_1 = arith.constant 0 : i32
    return %c0_i32, %c0_i32_0 : i32, i32
  }
  func.func @transform_9(%arg0: i32) -> (i32, i32) {
    %c0_i32 = arith.constant 0 : i32
    %c0_i32_0 = arith.constant 0 : i32
    %c0_i32_1 = arith.constant 0 : i32
    return %c0_i32, %c0_i32_0 : i32, i32
  }
  func.func @transform_10(%arg0: i32) -> (i32, i32) {
    %c0_i32 = arith.constant 0 : i32
    %c0_i32_0 = arith.constant 0 : i32
    %c0_i32_1 = arith.constant 0 : i32
    return %c0_i32, %c0_i32_0 : i32, i32
  }
  func.func @transform_11(%arg0: i32) -> (i32, i32) {
    %c0_i32 = arith.constant 0 : i32
    %c0_i32_0 = arith.constant 0 : i32
    %c0_i32_1 = arith.constant 0 : i32
    return %c0_i32, %c0_i32_0 : i32, i32
  }
  func.func @transform_12(%arg0: i32) -> (i32, i32, i32) {
    %c0_i32 = arith.constant 0 : i32
    %c0_i32_0 = arith.constant 0 : i32
    %c0_i32_1 = arith.constant 0 : i32
    return %arg0, %c0_i32, %c0_i32_0 : i32, i32, i32
  }
}

</mosaic_0001>

<llo_original>
// kernel: tpu_custom_call.1
$region0: #{tpu_custom_call.1}
  #allocation0 [shape = 'u32[]', space=smem, size = 0x4, offset = 0x4, fixed_abs, tag = 'smem constant byte address 0x4 - core index']
  #allocation1 [shape = 'u32[144,128]{1,0:T(1,128)}', space=vmem, size = 0x12000, scoped, tag = 'internal scratch']
  #allocation2 [shape = 'f32[8,166]{1,0:T(8,128)}', space=vmem, size = 0x2000, scoped, tag = 'scratch operand']
  #allocation3 [shape = 'f32[344,128]{1,0:T(8,128)}', space=vmem, size = 0x2b000, scoped, tag = 'scratch operand']
  #allocation4 [shape = 'f32[32,130]{1,0:T(8,128)}', space=vmem, size = 0x8000, scoped, tag = 'scratch operand']
  %s0 = inlined_call_operand.hbm [shape: f32[2,8,128], index: 0, kind: input, shape index: {}]
  %s1 = inlined_call_operand.hbm [shape: f32[8,8], index: 1, kind: input, shape index: {}]
  %s2 = inlined_call_operand.vmem [shape: f32[32,320], index: 2, kind: input, shape index: {}]
  %s3 = inlined_call_operand.vmem [shape: f32[32,1], index: 3, kind: input, shape index: {}]
  %s4 = inlined_call_operand.hbm [shape: f32[8,32], index: 4, kind: input, shape index: {}]
  %s5 = inlined_call_operand.hbm [shape: f32[32,344], index: 5, kind: input, shape index: {}]
  %s6 = inlined_call_operand.vmem [shape: f32[32,1], index: 6, kind: input, shape index: {}]
  %s7 = inlined_call_operand.hbm [shape: f32[8,32], index: 7, kind: input, shape index: {}]
  %s8 = inlined_call_operand.vmem [shape: f32[32,344], index: 8, kind: input, shape index: {}]
  %s9 = inlined_call_operand.vmem [shape: f32[32,1], index: 9, kind: input, shape index: {}]
  %s10 = inlined_call_operand.vmem [shape: f32[32,8], index: 10, kind: input, shape index: {}]
  %s11 = inlined_call_operand.vmem [shape: f32[32,1], index: 11, kind: input, shape index: {}]
  %s12 = inlined_call_operand.hbm [shape: f32[2,32,128], index: 12, kind: output, shape index: {}]
  %s13 = sld [smem:[#allocation0]]
  $region101: #{tpu_custom_call.1} parent=0
    _
  %s15 = ssub.s32 1, %s13
  %s16 = scalar_select 0, %s15, %s13
  $region1: #{tpu_custom_call.1} parent=0
    #allocation5 [shape = 'u8[8192]{0}', space=vmem, size = 0x2000, scoped, tag = 'input window, operand 0']
    #allocation6 [shape = 's32[2]{0}', space=sflag, size = 0x8, scoped, tag = 'scoped memory for tpu_custom_call.1']
    #allocation7 [shape = 's32[2]{0}', space=sflag, size = 0x8, scoped, tag = 'scoped memory for tpu_custom_call.1']
    #allocation8 [shape = 'u8[4096]{0}', space=vmem, size = 0x1000, scoped, tag = 'input window, operand 1, single buffered']
    #allocation9 [shape = 's32[1]{0}', space=sflag, size = 0x4, scoped, tag = 'scoped memory for tpu_custom_call.1']
    #allocation10 [shape = 'u8[4096]{0}', space=vmem, size = 0x1000, scoped, tag = 'input window, operand 4, single buffered']
    #allocation11 [shape = 'u8[49152]{0}', space=vmem, size = 0xc000, scoped, tag = 'input window, operand 5, single buffered']
    #allocation12 [shape = 's32[1]{0}', space=sflag, size = 0x4, scoped, tag = 'scoped memory for tpu_custom_call.1']
    #allocation13 [shape = 'u8[4096]{0}', space=vmem, size = 0x1000, scoped, tag = 'input window, operand 7, single buffered']
    #allocation14 [shape = 'u8[32768]{0}', space=vmem, size = 0x8000, scoped, tag = 'output window, operand 0']
    %17 = vsyncpa [#allocation6], 0
    %s18 = scalar_lea.sflag [#allocation6], 1
    %19 = vsyncpa %s18, 0
    %20 = vsyncpa [#allocation9], 0
    %21 = vsyncpa [#allocation12], 0
    %22 = vsyncpa [#allocation7], 0
    %s23 = scalar_lea.sflag [#allocation7], 1
    %24 = vsyncpa %s23, 0
    loop: start=0, step=1, limit=4
    $region2: #{tpu_custom_call.1} parent=1 // loop_pre_header
      _
    $region3: #{tpu_custom_call.1} parent=1 // loop_header
      %s26 = sphi 0, %s30
      %p27 = scmp.ge.s32.totalorder %s26, 4
      %s36 = sphi 0, %s38
      %s39 = sphi 0, %s36
      %s40 = sphi 0, %s39
      %s56 = sphi 0, %s40
      %s60 = sphi 0, %s60
      %s62 = sphi 0, %s60
      %s63 = sphi 0, %s62
      %s77 = sphi 0, %s63
      %s81 = sphi 0, %s81
      %s83 = sphi 0, %s81
      %s84 = sphi 0, %s83
      %s98 = sphi 0, %s84
      %s102 = sphi 0, %s102
      %s104 = sphi 0, %s102
      %s105 = sphi 0, %s104
      %s119 = sphi 0, %s105
      %s123 = sphi 0, %s123
      %s125 = sphi 0, %s123
      %s126 = sphi 0, %s125
      %s140 = sphi 0, %s126
      %s144 = sphi 0, %s144
      %s146 = sphi 0, %s144
      %s147 = sphi 0, %s146
      %s161 = sphi 0, %s147
      %s165 = sphi 0, %s165
      %s167 = sphi 0, %s165
      %s168 = sphi 0, %s167
      %s182 = sphi 0, %s168
      %s186 = sphi 0, %s186
      %s188 = sphi 0, %s186
      %s189 = sphi 0, %s188
      %s203 = sphi 0, %s189
      %s207 = sphi 0, %s207
      %s209 = sphi 0, %s207
      %s210 = sphi 0, %s209
      %s224 = sphi 0, %s210
      %s228 = sphi 0, %s228
      %s230 = sphi 0, %s228
      %s231 = sphi 0, %s230
      %s245 = sphi 0, %s231
      %s249 = sphi 0, %s249
      %s251 = sphi 0, %s249
      %s252 = sphi 0, %s251
      %s266 = sphi 0, %s252
      %s270 = sphi 0, %s270
      %s272 = sphi 0, %s270
      %s273 = sphi 0, %s272
      %s287 = sphi 0, %s273
      %s293 = sphi 0, %s295
      %s296 = sphi 0, %s293
      %s297 = sphi 0, %s296
      %s313 = sphi 0, %s297
    $region4: #{tpu_custom_call.1} parent=1 // loop_header_branch
      %29 = sbr.rel (%p27) target = $region8
    $region5: #{tpu_custom_call.1} parent=1 // loop_body
      %s31 = ssub.s32 %s26, 1
      %s32 = ssub.s32 %s26, 2
      %s33 = sadd.s32 %s26, 1
      %s34 = ssub.s32 %s26, %s33
      %p35 = scmp.eq.s32.totalorder %s34, 0
      %s37 = sadd.s32 %s36, 1
      %s38 = scalar_select %p35, %s36, %s37
      %p41 = pneg %p35
      %p42 = scmp.eq.s32.totalorder %s26, 1
      %p43 = por %p41, %p42
      %p44 = scmp.ne.s32.totalorder %s36, %s39
      %p45 = scmp.eq.s32.totalorder %s26, 0
      %p46 = por %p44, %p45
      %p47 = scmp.ne.s32.totalorder %s36, %s39
      %p48 = scmp.eq.s32.totalorder %s31, 1
      %p49 = por %p47, %p48
      %p50 = scmp.ne.s32.totalorder %s39, %s40
      %p51 = scmp.eq.s32.totalorder %s31, 0
      %p52 = por %p50, %p51
      %p53 = scmp.ne.s32.totalorder %s39, %s40
      %p54 = scmp.eq.s32.totalorder %s32, 1
      %p55 = por %p53, %p54
      %p57 = scmp.ne.s32.totalorder %s40, %s56
      %p58 = scmp.eq.s32.totalorder %s32, 0
      %p59 = por %p57, %p58
      %s61 = sadd.s32 %s60, 1
      %p64 = scmp.eq.s32.totalorder %s26, 1
      %p65 = scmp.ne.s32.totalorder %s60, %s62
      %p66 = scmp.eq.s32.totalorder %s26, 0
      %p67 = por %p65, %p66
      %p68 = scmp.ne.s32.totalorder %s60, %s62
      %p69 = scmp.eq.s32.totalorder %s31, 1
      %p70 = por %p68, %p69
      %p71 = scmp.ne.s32.totalorder %s62, %s63
      %p72 = scmp.eq.s32.totalorder %s31, 0
      %p73 = por %p71, %p72
      %p74 = scmp.ne.s32.totalorder %s62, %s63
      %p75 = scmp.eq.s32.totalorder %s32, 1
      %p76 = por %p74, %p75
      %p78 = scmp.ne.s32.totalorder %s63, %s77
      %p79 = scmp.eq.s32.totalorder %s32, 0
      %p80 = por %p78, %p79
      %s82 = sadd.s32 %s81, 1
      %p85 = scmp.eq.s32.totalorder %s26, 1
      %p86 = scmp.ne.s32.totalorder %s81, %s83
      %p87 = scmp.eq.s32.totalorder %s26, 0
      %p88 = por %p86, %p87
      %p89 = scmp.ne.s32.totalorder %s81, %s83
      %p90 = scmp.eq.s32.totalorder %s31, 1
      %p91 = por %p89, %p90
      %p92 = scmp.ne.s32.totalorder %s83, %s84
      %p93 = scmp.eq.s32.totalorder %s31, 0
      %p94 = por %p92, %p93
      %p95 = scmp.ne.s32.totalorder %s83, %s84
      %p96 = scmp.eq.s32.totalorder %s32, 1
      %p97 = por %p95, %p96
      %p99 = scmp.ne.s32.totalorder %s84, %s98
      %p100 = scmp.eq.s32.totalorder %s32, 0
      %p101 = por %p99, %p100
      %s103 = sadd.s32 %s102, 1
      %p106 = scmp.eq.s32.totalorder %s26, 1
      %p107 = scmp.ne.s32.totalorder %s102, %s104
      %p108 = scmp.eq.s32.totalorder %s26, 0
      %p109 = por %p107, %p108
      %p110 = scmp.ne.s32.totalorder %s102, %s104
      %p111 = scmp.eq.s32.totalorder %s31, 1
      %p112 = por %p110, %p111
      %p113 = scmp.ne.s32.totalorder %s104, %s105
      %p114 = scmp.eq.s32.totalorder %s31, 0
      %p115 = por %p113, %p114
      %p116 = scmp.ne.s32.totalorder %s104, %s105
      %p117 = scmp.eq.s32.totalorder %s32, 1
      %p118 = por %p116, %p117
      %p120 = scmp.ne.s32.totalorder %s105, %s119
      %p121 = scmp.eq.s32.totalorder %s32, 0
      %p122 = por %p120, %p121
      %s124 = sadd.s32 %s123, 1
      %p127 = scmp.eq.s32.totalorder %s26, 1
      %p128 = scmp.ne.s32.totalorder %s123, %s125
      %p129 = scmp.eq.s32.totalorder %s26, 0
      %p130 = por %p128, %p129
      %p131 = scmp.ne.s32.totalorder %s123, %s125
      %p132 = scmp.eq.s32.totalorder %s31, 1
      %p133 = por %p131, %p132
      %p134 = scmp.ne.s32.totalorder %s125, %s126
      %p135 = scmp.eq.s32.totalorder %s31, 0
      %p136 = por %p134, %p135
      %p137 = scmp.ne.s32.totalorder %s125, %s126
      %p138 = scmp.eq.s32.totalorder %s32, 1
      %p139 = por %p137, %p138
      %p141 = scmp.ne.s32.totalorder %s126, %s140
      %p142 = scmp.eq.s32.totalorder %s32, 0
      %p143 = por %p141, %p142
      %s145 = sadd.s32 %s144, 1
      %p148 = scmp.eq.s32.totalorder %s26, 1
      %p149 = scmp.ne.s32.totalorder %s144, %s146
      %p150 = scmp.eq.s32.totalorder %s26, 0
      %p151 = por %p149, %p150
      %p152 = scmp.ne.s32.totalorder %s144, %s146
      %p153 = scmp.eq.s32.totalorder %s31, 1
      %p154 = por %p152, %p153
      %p155 = scmp.ne.s32.totalorder %s146, %s147
      %p156 = scmp.eq.s32.totalorder %s31, 0
      %p157 = por %p155, %p156
      %p158 = scmp.ne.s32.totalorder %s146, %s147
      %p159 = scmp.eq.s32.totalorder %s32, 1
      %p160 = por %p158, %p159
      %p162 = scmp.ne.s32.totalorder %s147, %s161
      %p163 = scmp.eq.s32.totalorder %s32, 0
      %p164 = por %p162, %p163
      %s166 = sadd.s32 %s165, 1
      %p169 = scmp.eq.s32.totalorder %s26, 1
      %p170 = scmp.ne.s32.totalorder %s165, %s167
      %p171 = scmp.eq.s32.totalorder %s26, 0
      %p172 = por %p170, %p171
      %p173 = scmp.ne.s32.totalorder %s165, %s167
      %p174 = scmp.eq.s32.totalorder %s31, 1
      %p175 = por %p173, %p174
      %p176 = scmp.ne.s32.totalorder %s167, %s168
      %p177 = scmp.eq.s32.totalorder %s31, 0
      %p178 = por %p176, %p177
      %p179 = scmp.ne.s32.totalorder %s167, %s168
      %p180 = scmp.eq.s32.totalorder %s32, 1
      %p181 = por %p179, %p180
      %p183 = scmp.ne.s32.totalorder %s168, %s182
      %p184 = scmp.eq.s32.totalorder %s32, 0
      %p185 = por %p183, %p184
      %s187 = sadd.s32 %s186, 1
      %p190 = scmp.eq.s32.totalorder %s26, 1
      %p191 = scmp.ne.s32.totalorder %s186, %s188
      %p192 = scmp.eq.s32.totalorder %s26, 0
      %p193 = por %p191, %p192
      %p194 = scmp.ne.s32.totalorder %s186, %s188
      %p195 = scmp.eq.s32.totalorder %s31, 1
      %p196 = por %p194, %p195
      %p197 = scmp.ne.s32.totalorder %s188, %s189
      %p198 = scmp.eq.s32.totalorder %s31, 0
      %p199 = por %p197, %p198
      %p200 = scmp.ne.s32.totalorder %s188, %s189
      %p201 = scmp.eq.s32.totalorder %s32, 1
      %p202 = por %p200, %p201
      %p204 = scmp.ne.s32.totalorder %s189, %s203
      %p205 = scmp.eq.s32.totalorder %s32, 0
      %p206 = por %p204, %p205
      %s208 = sadd.s32 %s207, 1
      %p211 = scmp.eq.s32.totalorder %s26, 1
      %p212 = scmp.ne.s32.totalorder %s207, %s209
      %p213 = scmp.eq.s32.totalorder %s26, 0
      %p214 = por %p212, %p213
      %p215 = scmp.ne.s32.totalorder %s207, %s209
      %p216 = scmp.eq.s32.totalorder %s31, 1
      %p217 = por %p215, %p216
      %p218 = scmp.ne.s32.totalorder %s209, %s210
      %p219 = scmp.eq.s32.totalorder %s31, 0
      %p220 = por %p218, %p219
      %p221 = scmp.ne.s32.totalorder %s209, %s210
      %p222 = scmp.eq.s32.totalorder %s32, 1
      %p223 = por %p221, %p222
      %p225 = scmp.ne.s32.totalorder %s210, %s224
      %p226 = scmp.eq.s32.totalorder %s32, 0
      %p227 = por %p225, %p226
      %s229 = sadd.s32 %s228, 1
      %p232 = scmp.eq.s32.totalorder %s26, 1
      %p233 = scmp.ne.s32.totalorder %s228, %s230
      %p234 = scmp.eq.s32.totalorder %s26, 0
      %p235 = por %p233, %p234
      %p236 = scmp.ne.s32.totalorder %s228, %s230
      %p237 = scmp.eq.s32.totalorder %s31, 1
      %p238 = por %p236, %p237
      %p239 = scmp.ne.s32.totalorder %s230, %s231
      %p240 = scmp.eq.s32.totalorder %s31, 0
      %p241 = por %p239, %p240
      %p242 = scmp.ne.s32.totalorder %s230, %s231
      %p243 = scmp.eq.s32.totalorder %s32, 1
      %p244 = por %p242, %p243
      %p246 = scmp.ne.s32.totalorder %s231, %s245
      %p247 = scmp.eq.s32.totalorder %s32, 0
      %p248 = por %p246, %p247
      %s250 = sadd.s32 %s249, 1
      %p253 = scmp.eq.s32.totalorder %s26, 1
      %p254 = scmp.ne.s32.totalorder %s249, %s251
      %p255 = scmp.eq.s32.totalorder %s26, 0
      %p256 = por %p254, %p255
      %p257 = scmp.ne.s32.totalorder %s249, %s251
      %p258 = scmp.eq.s32.totalorder %s31, 1
      %p259 = por %p257, %p258
      %p260 = scmp.ne.s32.totalorder %s251, %s252
      %p261 = scmp.eq.s32.totalorder %s31, 0
      %p262 = por %p260, %p261
      %p263 = scmp.ne.s32.totalorder %s251, %s252
      %p264 = scmp.eq.s32.totalorder %s32, 1
      %p265 = por %p263, %p264
      %p267 = scmp.ne.s32.totalorder %s252, %s266
      %p268 = scmp.eq.s32.totalorder %s32, 0
      %p269 = por %p267, %p268
      %s271 = sadd.s32 %s270, 1
      %p274 = scmp.eq.s32.totalorder %s26, 1
      %p275 = scmp.ne.s32.totalorder %s270, %s272
      %p276 = scmp.eq.s32.totalorder %s26, 0
      %p277 = por %p275, %p276
      %p278 = scmp.ne.s32.totalorder %s270, %s272
      %p279 = scmp.eq.s32.totalorder %s31, 1
      %p280 = por %p278, %p279
      %p281 = scmp.ne.s32.totalorder %s272, %s273
      %p282 = scmp.eq.s32.totalorder %s31, 0
      %p283 = por %p281, %p282
      %p284 = scmp.ne.s32.totalorder %s272, %s273
      %p285 = scmp.eq.s32.totalorder %s32, 1
      %p286 = por %p284, %p285
      %p288 = scmp.ne.s32.totalorder %s273, %s287
      %p289 = scmp.eq.s32.totalorder %s32, 0
      %p290 = por %p288, %p289
      %s291 = ssub.s32 %s26, %s33
      %p292 = scmp.eq.s32.totalorder %s291, 0
      %s294 = sadd.s32 %s293, 1
      %s295 = scalar_select %p292, %s293, %s294
      %p298 = pneg %p292
      %p299 = scmp.eq.s32.totalorder %s26, 1
      %p300 = por %p298, %p299
      %p301 = scmp.ne.s32.totalorder %s293, %s296
      %p302 = scmp.eq.s32.totalorder %s26, 0
      %p303 = por %p301, %p302
      %p304 = scmp.ne.s32.totalorder %s293, %s296
      %p305 = scmp.eq.s32.totalorder %s31, 1
      %p306 = por %p304, %p305
      %p307 = scmp.ne.s32.totalorder %s296, %s297
      %p308 = scmp.eq.s32.totalorder %s31, 0
      %p309 = por %p307, %p308
      %p310 = scmp.ne.s32.totalorder %s296, %s297
      %p311 = scmp.eq.s32.totalorder %s32, 1
      %p312 = por %p310, %p311
      %p314 = scmp.ne.s32.totalorder %s297, %s313
      %p315 = scmp.eq.s32.totalorder %s32, 0
      %p316 = por %p314, %p315
      %p317 = scmp.le.s32.totalorder 1, %s26
      %p318 = scmp.lt.s32.totalorder %s26, 3
      %p319 = pnand %p317, %p318
      %p320 = pneg %p319
      // Predicated region
      $region9: #{tpu_custom_call.1} parent=5 // pred_check
        _
      $region10: #{tpu_custom_call.1} parent=5 // pred_check_branch
        %322 = sbr.rel (%p319) target = $region12
      $region11: #{tpu_custom_call.1} parent=5 // pred_region
        %s323 = ssub.s32 %s26, 1
        // Predicated region
        $region13: #{tpu_custom_call.1} parent=11 // pred_check
          %p324 = pneg %p73
        $region14: #{tpu_custom_call.1} parent=11 // pred_check_branch
          %326 = sbr.rel (%p324) target = $region16
        $region15: #{tpu_custom_call.1} parent=11 // pred_region
          %s328 = ssub.s32 128, 128
          %329 = vsyncadd [#allocation9], %s328
          %s331 = sshll.u32 [#allocation8], 4
          %s332 = int_to_ptr.vmem [resolvable:$true] %s331
          %334 = dma.hbm_to_vmem [thread:$0]  %s1, 128, %s332, [#allocation9]
        $region16: #{tpu_custom_call.1} parent=11 // pred_fallthru
          _
        // Predicated region
        $region17: #{tpu_custom_call.1} parent=11 // pred_check
          %p335 = pneg %p94
        $region18: #{tpu_custom_call.1} parent=11 // pred_check_branch
          %337 = sbr.rel (%p335) target = $region20
        $region19: #{tpu_custom_call.1} parent=11 // pred_region
          _
        $region20: #{tpu_custom_call.1} parent=11 // pred_fallthru
          _
        // Predicated region
        $region21: #{tpu_custom_call.1} parent=11 // pred_check
          %p338 = pneg %p115
        $region22: #{tpu_custom_call.1} parent=11 // pred_check_branch
          %340 = sbr.rel (%p338) target = $region24
        $region23: #{tpu_custom_call.1} parent=11 // pred_region
          _
        $region24: #{tpu_custom_call.1} parent=11 // pred_fallthru
          _
        // Predicated region
        $region25: #{tpu_custom_call.1} parent=11 // pred_check
          %p341 = pneg %p136
        $region26: #{tpu_custom_call.1} parent=11 // pred_check_branch
          %343 = sbr.rel (%p341) target = $region28
        $region27: #{tpu_custom_call.1} parent=11 // pred_region
          %s345 = ssub.s32 128, 128
          %346 = vsyncadd [#allocation9], %s345
          %s348 = sshll.u32 [#allocation10], 4
          %s349 = int_to_ptr.vmem [resolvable:$true] %s348
          %351 = dma.hbm_to_vmem [thread:$0]  %s4, 128, %s349, [#allocation9]
        $region28: #{tpu_custom_call.1} parent=11 // pred_fallthru
          _
        // Predicated region
        $region29: #{tpu_custom_call.1} parent=11 // pred_check
          %p352 = pneg %p157
        $region30: #{tpu_custom_call.1} parent=11 // pred_check_branch
          %354 = sbr.rel (%p352) target = $region32
        $region31: #{tpu_custom_call.1} parent=11 // pred_region
          %s356 = ssub.s32 1536, 1536
          %357 = vsyncadd [#allocation12], %s356
          %s358 = sshll.u32 [#allocation11], 4
          %s359 = int_to_ptr.vmem [resolvable:$true] %s358
          %364 = dma.hbm_to_vmem [thread:$0]  %s5, 1536, %s359, [#allocation12], 384, 384, 24
        $region32: #{tpu_custom_call.1} parent=11 // pred_fallthru
          _
        // Predicated region
        $region33: #{tpu_custom_call.1} parent=11 // pred_check
          %p365 = pneg %p178
        $region34: #{tpu_custom_call.1} parent=11 // pred_check_branch
          %367 = sbr.rel (%p365) target = $region36
        $region35: #{tpu_custom_call.1} parent=11 // pred_region
          _
        $region36: #{tpu_custom_call.1} parent=11 // pred_fallthru
          _
        // Predicated region
        $region37: #{tpu_custom_call.1} parent=11 // pred_check
          %p368 = pneg %p199
        $region38: #{tpu_custom_call.1} parent=11 // pred_check_branch
          %370 = sbr.rel (%p368) target = $region40
        $region39: #{tpu_custom_call.1} parent=11 // pred_region
          %s372 = ssub.s32 128, 128
          %373 = vsyncadd [#allocation12], %s372
          %s375 = sshll.u32 [#allocation13], 4
          %s376 = int_to_ptr.vmem [resolvable:$true] %s375
          %378 = dma.hbm_to_vmem [thread:$0]  %s7, 128, %s376, [#allocation12]
        $region40: #{tpu_custom_call.1} parent=11 // pred_fallthru
          _
        // Predicated region
        $region41: #{tpu_custom_call.1} parent=11 // pred_check
          %p379 = pneg %p220
        $region42: #{tpu_custom_call.1} parent=11 // pred_check_branch
          %381 = sbr.rel (%p379) target = $region44
        $region43: #{tpu_custom_call.1} parent=11 // pred_region
          _
        $region44: #{tpu_custom_call.1} parent=11 // pred_fallthru
          _
        // Predicated region
        $region45: #{tpu_custom_call.1} parent=11 // pred_check
          %p382 = pneg %p241
        $region46: #{tpu_custom_call.1} parent=11 // pred_check_branch
          %384 = sbr.rel (%p382) target = $region48
        $region47: #{tpu_custom_call.1} parent=11 // pred_region
          _
        $region48: #{tpu_custom_call.1} parent=11 // pred_fallthru
          _
        // Predicated region
        $region49: #{tpu_custom_call.1} parent=11 // pred_check
          %p385 = pneg %p262
        $region50: #{tpu_custom_call.1} parent=11 // pred_check_branch
          %387 = sbr.rel (%p385) target = $region52
        $region51: #{tpu_custom_call.1} parent=11 // pred_region
          _
        $region52: #{tpu_custom_call.1} parent=11 // pred_fallthru
          _
        // Predicated region
        $region53: #{tpu_custom_call.1} parent=11 // pred_check
          %p388 = pneg %p283
        $region54: #{tpu_custom_call.1} parent=11 // pred_check_branch
          %390 = sbr.rel (%p388) target = $region56
        $region55: #{tpu_custom_call.1} parent=11 // pred_region
          _
        $region56: #{tpu_custom_call.1} parent=11 // pred_fallthru
          _
      $region12: #{tpu_custom_call.1} parent=5 // pred_fallthru
        _
      %p391 = scmp.lt.s32.totalorder %s26, 2
      // Predicated region
      $region57: #{tpu_custom_call.1} parent=5 // pred_check
        %p392 = pneg %p391
      $region58: #{tpu_custom_call.1} parent=5 // pred_check_branch
        %394 = sbr.rel (%p392) target = $region60
      $region59: #{tpu_custom_call.1} parent=5 // pred_region
        // Predicated region
        $region61: #{tpu_custom_call.1} parent=59 // pred_check
          %p395 = pneg %p46
        $region62: #{tpu_custom_call.1} parent=59 // pred_check_branch
          %397 = sbr.rel (%p395) target = $region64
        $region63: #{tpu_custom_call.1} parent=59 // pred_region
          %s398 = sand.u32 %s36, 1
          %s399 = scalar_lea.sflag [#allocation6], %s398
          %s400 = sand.u32 %s36, 1
          %s401 = smul.addr %s400, 8
          %s402 = scalar_lea.vmem [#allocation5], %s401
          %s404 = ssub.s32 128, 128
          %405 = vsyncadd %s399, %s404
          %s406 = smul.addr %s26, 128
          %s407 = scalar_lea.hbm %s0, %s406
          %s409 = sshll.u32 %s402, 4
          %s410 = int_to_ptr.vmem [resolvable:$true] %s409
          %412 = dma.hbm_to_vmem [thread:$0]  %s407, 128, %s410, %s399
        $region64: #{tpu_custom_call.1} parent=59 // pred_fallthru
          _
      $region60: #{tpu_custom_call.1} parent=5 // pred_fallthru
        _
      %p413 = scmp.le.s32.totalorder 1, %s26
      %p414 = scmp.lt.s32.totalorder %s26, 3
      %p415 = pnand %p413, %p414
      %p416 = pneg %p415
      // Predicated region
      $region65: #{tpu_custom_call.1} parent=5 // pred_check
        _
      $region66: #{tpu_custom_call.1} parent=5 // pred_check_branch
        %418 = sbr.rel (%p415) target = $region68
      $region67: #{tpu_custom_call.1} parent=5 // pred_region
        %s419 = ssub.s32 %s26, 1
        %s420 = sand.u32 %s39, 1
        %s421 = scalar_lea.sflag [#allocation6], %s420
        %s422 = sand.u32 %s39, 1
        %s423 = smul.addr %s422, 8
        %s424 = scalar_lea.vmem [#allocation5], %s423
        // Predicated region
        $region69: #{tpu_custom_call.1} parent=67 // pred_check
          %p425 = pneg %p52
        $region70: #{tpu_custom_call.1} parent=67 // pred_check_branch
          %427 = sbr.rel (%p425) target = $region72
        $region71: #{tpu_custom_call.1} parent=67 // pred_region
          %428 = dma.done %s421, 128
        $region72: #{tpu_custom_call.1} parent=67 // pred_fallthru
          _
        // Predicated region
        $region73: #{tpu_custom_call.1} parent=67 // pred_check
          %p429 = pneg %p73
        $region74: #{tpu_custom_call.1} parent=67 // pred_check_branch
          %431 = sbr.rel (%p429) target = $region76
        $region75: #{tpu_custom_call.1} parent=67 // pred_region
          %432 = dma.done [#allocation9], 128
        $region76: #{tpu_custom_call.1} parent=67 // pred_fallthru
          _
        // Predicated region
        $region77: #{tpu_custom_call.1} parent=67 // pred_check
          %p433 = pneg %p136
        $region78: #{tpu_custom_call.1} parent=67 // pred_check_branch
          %435 = sbr.rel (%p433) target = $region80
        $region79: #{tpu_custom_call.1} parent=67 // pred_region
          %436 = dma.done [#allocation9], 128
        $region80: #{tpu_custom_call.1} parent=67 // pred_fallthru
          _
        // Predicated region
        $region81: #{tpu_custom_call.1} parent=67 // pred_check
          %p437 = pneg %p157
        $region82: #{tpu_custom_call.1} parent=67 // pred_check_branch
          %439 = sbr.rel (%p437) target = $region84
        $region83: #{tpu_custom_call.1} parent=67 // pred_region
          %440 = dma.done [#allocation12], 1536
        $region84: #{tpu_custom_call.1} parent=67 // pred_fallthru
          _
        // Predicated region
        $region85: #{tpu_custom_call.1} parent=67 // pred_check
          %p441 = pneg %p199
        $region86: #{tpu_custom_call.1} parent=67 // pred_check_branch
          %443 = sbr.rel (%p441) target = $region88
        $region87: #{tpu_custom_call.1} parent=67 // pred_region
          %444 = dma.done [#allocation12], 128
        $region88: #{tpu_custom_call.1} parent=67 // pred_fallthru
          _
        %s445 = sand.u32 %s39, 1
        %s446 = scalar_lea.sflag [#allocation6], %s445
        %s447 = sand.u32 %s39, 1
        %s448 = smul.addr %s447, 8
        %s449 = scalar_lea.vmem [#allocation5], %s448
        %p450 = pneg %p52
        %p451 = pneg %p49
        %p452 = pneg %p73
        %p453 = pneg %p70
        %p454 = pneg %p94
        %p455 = pneg %p91
        %p456 = pneg %p115
        %p457 = pneg %p112
        %p458 = pneg %p136
        %p459 = pneg %p133
        %p460 = pneg %p157
        %p461 = pneg %p154
        %p462 = pneg %p178
        %p463 = pneg %p175
        %p464 = pneg %p199
        %p465 = pneg %p196
        %p466 = pneg %p220
        %p467 = pneg %p217
        %p468 = pneg %p241
        %p469 = pneg %p238
        %p470 = pneg %p262
        %p471 = pneg %p259
        %p472 = pneg %p283
        %p473 = pneg %p280
        %p474 = pneg %p309
        %p475 = pneg %p306
        %s476 = sand.u32 %s296, 1
        %s477 = scalar_lea.sflag [#allocation7], %s476
        %s478 = sand.u32 %s296, 1
        %s479 = smul.addr %s478, 32
        %s480 = scalar_lea.vmem [#allocation14], %s479
        %vm481 = vcmask 154624
        %482 = vst.msk [vmem:[#allocation2] sm:$0xff] %vm481, 0.0
        %vm483 = vcmask 310424
        %484 = vst.msk [vmem:[#allocation2 + $0x8] sm:$0xff] %vm483, 0.0
        %vm485 = vcmask 7168
        %486 = vst.msk [vmem:[#allocation4] sm:$0xff] %vm485, -inf
        %487 = vst.msk [vmem:[#allocation4 + $0x10] sm:$0xff] %vm485, -inf
        %488 = vst.msk [vmem:[#allocation4 + $0x20] sm:$0xff] %vm485, -inf
        %489 = vst.msk [vmem:[#allocation4 + $0x30] sm:$0xff] %vm485, -inf
        %vm490 = vcmask 15368
        %491 = vst.msk [vmem:[#allocation4 + $0x8] sm:$0xff] %vm490, -inf
        %492 = vst.msk [vmem:[#allocation4 + $0x18] sm:$0xff] %vm490, -inf
        %493 = vst.msk [vmem:[#allocation4 + $0x28] sm:$0xff] %vm490, -inf
        %494 = vst.msk [vmem:[#allocation4 + $0x38] sm:$0xff] %vm490, -inf
        %v495 = vld [vmem:[%s424] sm:$0xff]
        %v496 = vld [vmem:[#allocation8] sm:$0xff]
        %vm497 = vcmask 64512
        %v499 = vsel %vm497, %v496, 0
        %501 = vmatprep.subr.mxu0 0.0
        %502 = vmatpush1.msra.mxu0 %v495
        %503 = vmatprep.subr.mxu0 0.0
        %504 = vmatpush1.msra.mxu0 0.0
        %505 = vmatprep.subr.mxu0 0.0
        %506 = vmatpush1.msra.mxu0 0.0
        %507 = vmatprep.subr.mxu0 0.0
        %508 = vmatpush1.msra.mxu0 0.0
        %509 = vmatprep.subr.mxu0 0.0
        %510 = vmatpush1.msra.mxu0 0.0
        %511 = vmatprep.subr.mxu0 0.0
        %512 = vmatpush1.msra.mxu0 0.0
        %513 = vmatprep.subr.mxu0 0.0
        %514 = vmatpush1.msra.mxu0 0.0
        %515 = vmatprep.subr.mxu0 0.0
        %516 = vmatpush1.msra.mxu0 0.0
        %517 = vmatprep.subr.mxu0 0.0
        %518 = vmatpush1.msra.mxu0 0.0
        %519 = vmatprep.subr.mxu0 0.0
        %520 = vmatpush1.msra.mxu0 0.0
        %521 = vmatprep.subr.mxu0 0.0
        %522 = vmatpush1.msra.mxu0 0.0
        %523 = vmatprep.subr.mxu0 0.0
        %524 = vmatpush1.msra.mxu0 0.0
        %525 = vmatprep.subr.mxu0 0.0
        %526 = vmatpush1.msra.mxu0 0.0
        %527 = vmatprep.subr.mxu0 0.0
        %528 = vmatpush1.msra.mxu0 0.0
        %529 = vmatprep.subr.mxu0 0.0
        %530 = vmatpush1.msra.mxu0 0.0
        %531 = vmatprep.subr.mxu0 0.0
        %532 = vmatpush1.msra.mxu0 0.0
        %533 = vmatprep.subr.mxu0 0.0
        %534 = vmatpush1.msra.mxu0 0.0
        %535 = vmatprep.subr.mxu0 0.0
        %536 = vmatpush1.msra.mxu0 0.0
        %537 = vmatprep.subr.mxu0 0.0
        %538 = vmatpush1.msra.mxu0 0.0
        %539 = vmatprep.subr.mxu0 0.0
        %540 = vmatpush1.msra.mxu0 0.0
        %541 = vmatprep.subr.mxu0 0.0
        %542 = vmatpush1.msra.mxu0 0.0
        %543 = vmatprep.subr.mxu0 0.0
        %544 = vmatpush1.msra.mxu0 0.0
        %545 = vmatprep.subr.mxu0 0.0
        %546 = vmatpush1.msra.mxu0 0.0
        %547 = vmatprep.subr.mxu0 0.0
        %548 = vmatpush1.msra.mxu0 0.0
        %549 = vmatprep.subr.mxu0 0.0
        %550 = vmatpush1.msra.mxu0 0.0
        %551 = vmatprep.subr.mxu0 0.0
        %552 = vmatpush1.msra.mxu0 0.0
        %553 = vmatprep.subr.mxu0 0.0
        %554 = vmatpush1.msra.mxu0 0.0
        %555 = vmatprep.subr.mxu0 0.0
        %556 = vmatpush1.msra.mxu0 0.0
        %557 = vmatprep.subr.mxu0 0.0
        %558 = vmatpush1.msra.mxu0 0.0
        %559 = vmatprep.subr.mxu0 0.0
        %560 = vmatpush1.msra.mxu0 0.0
        %561 = vmatprep.subr.mxu0 0.0
        %562 = vmatpush1.msra.mxu0 0.0
        %563 = vmatprep.subr.mxu0 0.0
        %564 = vmatpush1.msra.mxu0 0.0
        %565 = vmatprep.mubr.f32.mxu0 0.0
        %566 = vmatmul.mubr.f32.gmra.mrb[0].mxu0 %v499
        %v567 = vpop.f32.mrb[0].mxu0
        %v568 = vadd.f32 0.0, %v567
        %v569 = vpop.f32.mrb[0].mxu0
        %570 = vdwg.mxu0
        %572 = vrot.lane.b32.xlu0 %v568, 19
        %v573 = vpop.permute.xlu0 %572
        %vm575 = vcmask 1047704
        %576 = vst.msk [vmem:[#allocation2] sm:$0xff] %vm575, %v573
        %577 = vst.msk [vmem:[#allocation2 + $0x8] sm:$0xff] %vm481, %v573
        %v578 = vld [vmem:[#allocation2] sm:$0xff]
        %579 = vst [vmem:[#allocation3] sm:$0xff] %v578
        %v580 = vld [vmem:[#allocation2] sm:$0xff]
        %v581 = vld [vmem:[#allocation2 + $0x8] sm:$0xff]
        %584 = vrot.lane.b32.xlu0 %v580, 127
        %v585 = vpop.permute.xlu0 %584
        %586 = vrot.lane.b32.xlu0 %v581, 127
        %v587 = vpop.permute.xlu0 %586
        %vm588 = vcmask 1039360
        %v589 = vsel %vm588, %v585, %v587
        %591 = vst [vmem:[#allocation3 + $0x8] sm:$0xff] %v589
        %v592 = vld [vmem:[#allocation2] sm:$0xff]
        %v593 = vld [vmem:[#allocation2 + $0x8] sm:$0xff]
        %596 = vrot.lane.b32.xlu0 %v592, 126
        %v597 = vpop.permute.xlu0 %596
        %598 = vrot.lane.b32.xlu0 %v593, 126
        %v599 = vpop.permute.xlu0 %598
        %vm600 = vcmask 1031168
        %v601 = vsel %vm600, %v597, %v599
        %603 = vst [vmem:[#allocation3 + $0x10] sm:$0xff] %v601
        %v604 = vld [vmem:[#allocation2] sm:$0xff]
        %v605 = vld [vmem:[#allocation2 + $0x8] sm:$0xff]
        %608 = vrot.lane.b32.xlu0 %v604, 125
        %v609 = vpop.permute.xlu0 %608
        %610 = vrot.lane.b32.xlu0 %v605, 125
        %v611 = vpop.permute.xlu0 %610
        %vm612 = vcmask 1022976
        %v613 = vsel %vm612, %v609, %v611
        %615 = vst [vmem:[#allocation3 + $0x18] sm:$0xff] %v613
        %v616 = vld [vmem:[#allocation2] sm:$0xff]
        %v617 = vld [vmem:[#allocation2 + $0x8] sm:$0xff]
        %620 = vrot.lane.b32.xlu0 %v616, 124
        %v621 = vpop.permute.xlu0 %620
        %622 = vrot.lane.b32.xlu0 %v617, 124
        %v623 = vpop.permute.xlu0 %622
        %vm624 = vcmask 1014784
        %v625 = vsel %vm624, %v621, %v623
        %627 = vst [vmem:[#allocation3 + $0x20] sm:$0xff] %v625
        %v628 = vld [vmem:[#allocation2] sm:$0xff]
        %v629 = vld [vmem:[#allocation2 + $0x8] sm:$0xff]
        %632 = vrot.lane.b32.xlu0 %v628, 123
        %v633 = vpop.permute.xlu0 %632
        %634 = vrot.lane.b32.xlu0 %v629, 123
        %v635 = vpop.permute.xlu0 %634
        %vm636 = vcmask 1006592
        %v637 = vsel %vm636, %v633, %v635
        %639 = vst [vmem:[#allocation3 + $0x28] sm:$0xff] %v637
        %v640 = vld [vmem:[#allocation2] sm:$0xff]
        %v641 = vld [vmem:[#allocation2 + $0x8] sm:$0xff]
        %644 = vrot.lane.b32.xlu0 %v640, 122
        %v645 = vpop.permute.xlu0 %644
        %646 = vrot.lane.b32.xlu0 %v641, 122
        %v647 = vpop.permute.xlu0 %646
        %vm648 = vcmask 998400
        %v649 = vsel %vm648, %v645, %v647
        %651 = vst [vmem:[#allocation3 + $0x30] sm:$0xff] %v649
        %v652 = vld [vmem:[#allocation2] sm:$0xff]
        %v653 = vld [vmem:[#allocation2 + $0x8] sm:$0xff]
        %656 = vrot.lane.b32.xlu0 %v652, 121
        %v657 = vpop.permute.xlu0 %656
        %658 = vrot.lane.b32.xlu0 %v653, 121
        %v659 = vpop.permute.xlu0 %658
        %vm660 = vcmask 990208
        %v661 = vsel %vm660, %v657, %v659
        %663 = vst [vmem:[#allocation3 + $0x38] sm:$0xff] %v661
        %v664 = vld [vmem:[#allocation2] sm:$0xff]
        %v665 = vld [vmem:[#allocation2 + $0x8] sm:$0xff]
        %668 = vrot.lane.b32.xlu0 %v664, 120
        %v669 = vpop.permute.xlu0 %668
        %670 = vrot.lane.b32.xlu0 %v665, 120
        %v671 = vpop.permute.xlu0 %670
        %vm672 = vcmask 982016
        %v673 = vsel %vm672, %v669, %v671
        %675 = vst [vmem:[#allocation3 + $0x40] sm:$0xff] %v673
        %v676 = vld [vmem:[#allocation2] sm:$0xff]
        %v677 = vld [vmem:[#allocation2 + $0x8] sm:$0xff]
        %680 = vrot.lane.b32.xlu0 %v676, 119
        %v681 = vpop.permute.xlu0 %680
        %682 = vrot.lane.b32.xlu0 %v677, 119
        %v683 = vpop.permute.xlu0 %682
        %vm684 = vcmask 973824
        %v685 = vsel %vm684, %v681, %v683
        %687 = vst [vmem:[#allocation3 + $0x48] sm:$0xff] %v685
        %v688 = vld [vmem:[#allocation2] sm:$0xff]
        %v689 = vld [vmem:[#allocation2 + $0x8] sm:$0xff]
        %692 = vrot.lane.b32.xlu0 %v688, 118
        %v693 = vpop.permute.xlu0 %692
        %694 = vrot.lane.b32.xlu0 %v689, 118
        %v695 = vpop.permute.xlu0 %694
        %vm696 = vcmask 965632
        %v697 = vsel %vm696, %v693, %v695
        %699 = vst [vmem:[#allocation3 + $0x50] sm:$0xff] %v697
        %v700 = vld [vmem:[#allocation2] sm:$0xff]
        %v701 = vld [vmem:[#allocation2 + $0x8] sm:$0xff]
        %704 = vrot.lane.b32.xlu0 %v700, 117
        %v705 = vpop.permute.xlu0 %704
        %706 = vrot.lane.b32.xlu0 %v701, 117
        %v707 = vpop.permute.xlu0 %706
        %vm708 = vcmask 957440
        %v709 = vsel %vm708, %v705, %v707
        %711 = vst [vmem:[#allocation3 + $0x58] sm:$0xff] %v709
        %v712 = vld [vmem:[#allocation2] sm:$0xff]
        %v713 = vld [vmem:[#allocation2 + $0x8] sm:$0xff]
        %716 = vrot.lane.b32.xlu0 %v712, 116
        %v717 = vpop.permute.xlu0 %716
        %718 = vrot.lane.b32.xlu0 %v713, 116
        %v719 = vpop.permute.xlu0 %718
        %vm720 = vcmask 949248
        %v721 = vsel %vm720, %v717, %v719
        %723 = vst [vmem:[#allocation3 + $0x60] sm:$0xff] %v721
        %v724 = vld [vmem:[#allocation2] sm:$0xff]
        %v725 = vld [vmem:[#allocation2 + $0x8] sm:$0xff]
        %728 = vrot.lane.b32.xlu0 %v724, 115
        %v729 = vpop.permute.xlu0 %728
        %730 = vrot.lane.b32.xlu0 %v725, 115
        %v731 = vpop.permute.xlu0 %730
        %vm732 = vcmask 941056
        %v733 = vsel %vm732, %v729, %v731
        %735 = vst [vmem:[#allocation3 + $0x68] sm:$0xff] %v733
        %v736 = vld [vmem:[#allocation2] sm:$0xff]
        %v737 = vld [vmem:[#allocation2 + $0x8] sm:$0xff]
        %740 = vrot.lane.b32.xlu0 %v736, 114
        %v741 = vpop.permute.xlu0 %740
        %742 = vrot.lane.b32.xlu0 %v737, 114
        %v743 = vpop.permute.xlu0 %742
        %vm744 = vcmask 932864
        %v745 = vsel %vm744, %v741, %v743
        %747 = vst [vmem:[#allocation3 + $0x70] sm:$0xff] %v745
        %v748 = vld [vmem:[#allocation2] sm:$0xff]
        %v749 = vld [vmem:[#allocation2 + $0x8] sm:$0xff]
        %752 = vrot.lane.b32.xlu0 %v748, 113
        %v753 = vpop.permute.xlu0 %752
        %754 = vrot.lane.b32.xlu0 %v749, 113
        %v755 = vpop.permute.xlu0 %754
        %vm756 = vcmask 924672
        %v757 = vsel %vm756, %v753, %v755
        %759 = vst [vmem:[#allocation3 + $0x78] sm:$0xff] %v757
        %v760 = vld [vmem:[#allocation2] sm:$0xff]
        %v761 = vld [vmem:[#allocation2 + $0x8] sm:$0xff]
        %764 = vrot.lane.b32.xlu0 %v760, 112
        %v765 = vpop.permute.xlu0 %764
        %766 = vrot.lane.b32.xlu0 %v761, 112
        %v767 = vpop.permute.xlu0 %766
        %vm768 = vcmask 916480
        %v769 = vsel %vm768, %v765, %v767
        %771 = vst [vmem:[#allocation3 + $0x80] sm:$0xff] %v769
        %v772 = vld [vmem:[#allocation2] sm:$0xff]
        %v773 = vld [vmem:[#allocation2 + $0x8] sm:$0xff]
        %776 = vrot.lane.b32.xlu0 %v772, 111
        %v777 = vpop.permute.xlu0 %776
        %778 = vrot.lane.b32.xlu0 %v773, 111
        %v779 = vpop.permute.xlu0 %778
        %vm780 = vcmask 908288
        %v781 = vsel %vm780, %v777, %v779
        %783 = vst [vmem:[#allocation3 + $0x88] sm:$0xff] %v781
        %v784 = vld [vmem:[#allocation2] sm:$0xff]
        %v785 = vld [vmem:[#allocation2 + $0x8] sm:$0xff]
        %788 = vrot.lane.b32.xlu0 %v784, 110
        %v789 = vpop.permute.xlu0 %788
        %790 = vrot.lane.b32.xlu0 %v785, 110
        %v791 = vpop.permute.xlu0 %790
        %vm792 = vcmask 900096
        %v793 = vsel %vm792, %v789, %v791
        %795 = vst [vmem:[#allocation3 + $0x90] sm:$0xff] %v793
        %v796 = vld [vmem:[#allocation2] sm:$0xff]
        %v797 = vld [vmem:[#allocation2 + $0x8] sm:$0xff]
        %800 = vrot.lane.b32.xlu0 %v796, 109
        %v801 = vpop.permute.xlu0 %800
        %802 = vrot.lane.b32.xlu0 %v797, 109
        %v803 = vpop.permute.xlu0 %802
        %vm804 = vcmask 891904
        %v805 = vsel %vm804, %v801, %v803
        %807 = vst [vmem:[#allocation3 + $0x98] sm:$0xff] %v805
        %v808 = vld [vmem:[#allocation2] sm:$0xff]
        %v809 = vld [vmem:[#allocation2 + $0x8] sm:$0xff]
        %812 = vrot.lane.b32.xlu0 %v808, 108
        %v813 = vpop.permute.xlu0 %812
        %814 = vrot.lane.b32.xlu0 %v809, 108
        %v815 = vpop.permute.xlu0 %814
        %vm816 = vcmask 883712
        %v817 = vsel %vm816, %v813, %v815
        %819 = vst [vmem:[#allocation3 + $0xa0] sm:$0xff] %v817
        %v820 = vld [vmem:[#allocation2] sm:$0xff]
        %v821 = vld [vmem:[#allocation2 + $0x8] sm:$0xff]
        %824 = vrot.lane.b32.xlu0 %v820, 107
        %v825 = vpop.permute.xlu0 %824
        %826 = vrot.lane.b32.xlu0 %v821, 107
        %v827 = vpop.permute.xlu0 %826
        %vm828 = vcmask 875520
        %v829 = vsel %vm828, %v825, %v827
        %831 = vst [vmem:[#allocation3 + $0xa8] sm:$0xff] %v829
        %v832 = vld [vmem:[#allocation2] sm:$0xff]
        %v833 = vld [vmem:[#allocation2 + $0x8] sm:$0xff]
        %836 = vrot.lane.b32.xlu0 %v832, 106
        %v837 = vpop.permute.xlu0 %836
        %838 = vrot.lane.b32.xlu0 %v833, 106
        %v839 = vpop.permute.xlu0 %838
        %vm840 = vcmask 867328
        %v841 = vsel %vm840, %v837, %v839
        %843 = vst [vmem:[#allocation3 + $0xb0] sm:$0xff] %v841
        %v844 = vld [vmem:[#allocation2] sm:$0xff]
        %v845 = vld [vmem:[#allocation2 + $0x8] sm:$0xff]
        %848 = vrot.lane.b32.xlu0 %v844, 105
        %v849 = vpop.permute.xlu0 %848
        %850 = vrot.lane.b32.xlu0 %v845, 105
        %v851 = vpop.permute.xlu0 %850
        %vm852 = vcmask 859136
        %v853 = vsel %vm852, %v849, %v851
        %855 = vst [vmem:[#allocation3 + $0xb8] sm:$0xff] %v853
        %v856 = vld [vmem:[#allocation2] sm:$0xff]
        %v857 = vld [vmem:[#allocation2 + $0x8] sm:$0xff]
        %860 = vrot.lane.b32.xlu0 %v856, 104
        %v861 = vpop.permute.xlu0 %860
        %862 = vrot.lane.b32.xlu0 %v857, 104
        %v863 = vpop.permute.xlu0 %862
        %vm864 = vcmask 850944
        %v865 = vsel %vm864, %v861, %v863
        %867 = vst [vmem:[#allocation3 + $0xc0] sm:$0xff] %v865
        %v868 = vld [vmem:[#allocation2] sm:$0xff]
        %v869 = vld [vmem:[#allocation2 + $0x8] sm:$0xff]
        %872 = vrot.lane.b32.xlu0 %v868, 103
        %v873 = vpop.permute.xlu0 %872
        %874 = vrot.lane.b32.xlu0 %v869, 103
        %v875 = vpop.permute.xlu0 %874
        %vm876 = vcmask 842752
        %v877 = vsel %vm876, %v873, %v875
        %879 = vst [vmem:[#allocation3 + $0xc8] sm:$0xff] %v877
        %v880 = vld [vmem:[#allocation2] sm:$0xff]
        %v881 = vld [vmem:[#allocation2 + $0x8] sm:$0xff]
        %884 = vrot.lane.b32.xlu0 %v880, 102
        %v885 = vpop.permute.xlu0 %884
        %886 = vrot.lane.b32.xlu0 %v881, 102
        %v887 = vpop.permute.xlu0 %886
        %vm888 = vcmask 834560
        %v889 = vsel %vm888, %v885, %v887
        %891 = vst [vmem:[#allocation3 + $0xd0] sm:$0xff] %v889
        %v892 = vld [vmem:[#allocation2] sm:$0xff]
        %v893 = vld [vmem:[#allocation2 + $0x8] sm:$0xff]
        %896 = vrot.lane.b32.xlu0 %v892, 101
        %v897 = vpop.permute.xlu0 %896
        %898 = vrot.lane.b32.xlu0 %v893, 101
        %v899 = vpop.permute.xlu0 %898
        %vm900 = vcmask 826368
        %v901 = vsel %vm900, %v897, %v899
        %903 = vst [vmem:[#allocation3 + $0xd8] sm:$0xff] %v901
        %v904 = vld [vmem:[#allocation2] sm:$0xff]
        %v905 = vld [vmem:[#allocation2 + $0x8] sm:$0xff]
        %908 = vrot.lane.b32.xlu0 %v904, 100
        %v909 = vpop.permute.xlu0 %908
        %910 = vrot.lane.b32.xlu0 %v905, 100
        %v911 = vpop.permute.xlu0 %910
        %vm912 = vcmask 818176
        %v913 = vsel %vm912, %v909, %v911
        %915 = vst [vmem:[#allocation3 + $0xe0] sm:$0xff] %v913
        %v916 = vld [vmem:[#allocation2] sm:$0xff]
        %v917 = vld [vmem:[#allocation2 + $0x8] sm:$0xff]
        %920 = vrot.lane.b32.xlu0 %v916, 99
        %v921 = vpop.permute.xlu0 %920
        %922 = vrot.lane.b32.xlu0 %v917, 99
        %v923 = vpop.permute.xlu0 %922
        %vm924 = vcmask 809984
        %v925 = vsel %vm924, %v921, %v923
        %927 = vst [vmem:[#allocation3 + $0xe8] sm:$0xff] %v925
        %v928 = vld [vmem:[#allocation2] sm:$0xff]
        %v929 = vld [vmem:[#allocation2 + $0x8] sm:$0xff]
        %932 = vrot.lane.b32.xlu0 %v928, 98
        %v933 = vpop.permute.xlu0 %932
        %934 = vrot.lane.b32.xlu0 %v929, 98
        %v935 = vpop.permute.xlu0 %934
        %vm936 = vcmask 801792
        %v937 = vsel %vm936, %v933, %v935
        %939 = vst [vmem:[#allocation3 + $0xf0] sm:$0xff] %v937
        %v940 = vld [vmem:[#allocation2] sm:$0xff]
        %v941 = vld [vmem:[#allocation2 + $0x8] sm:$0xff]
        %944 = vrot.lane.b32.xlu0 %v940, 97
        %v945 = vpop.permute.xlu0 %944
        %946 = vrot.lane.b32.xlu0 %v941, 97
        %v947 = vpop.permute.xlu0 %946
        %vm948 = vcmask 793600
        %v949 = vsel %vm948, %v945, %v947
        %951 = vst [vmem:[#allocation3 + $0xf8] sm:$0xff] %v949
        %v952 = vld [vmem:[#allocation2] sm:$0xff]
        %v953 = vld [vmem:[#allocation2 + $0x8] sm:$0xff]
        %956 = vrot.lane.b32.xlu0 %v952, 96
        %v957 = vpop.permute.xlu0 %956
        %958 = vrot.lane.b32.xlu0 %v953, 96
        %v959 = vpop.permute.xlu0 %958
        %vm960 = vcmask 785408
        %v961 = vsel %vm960, %v957, %v959
        %963 = vst [vmem:[#allocation3 + $0x100] sm:$0xff] %v961
        %v964 = vld [vmem:[#allocation2] sm:$0xff]
        %v965 = vld [vmem:[#allocation2 + $0x8] sm:$0xff]
        %968 = vrot.lane.b32.xlu0 %v964, 95
        %v969 = vpop.permute.xlu0 %968
        %970 = vrot.lane.b32.xlu0 %v965, 95
        %v971 = vpop.permute.xlu0 %970
        %vm972 = vcmask 777216
        %v973 = vsel %vm972, %v969, %v971
        %975 = vst [vmem:[#allocation3 + $0x108] sm:$0xff] %v973
        %v976 = vld [vmem:[#allocation2] sm:$0xff]
        %v977 = vld [vmem:[#allocation2 + $0x8] sm:$0xff]
        %980 = vrot.lane.b32.xlu0 %v976, 94
        %v981 = vpop.permute.xlu0 %980
        %982 = vrot.lane.b32.xlu0 %v977, 94
        %v983 = vpop.permute.xlu0 %982
        %vm984 = vcmask 769024
        %v985 = vsel %vm984, %v981, %v983
        %987 = vst [vmem:[#allocation3 + $0x110] sm:$0xff] %v985
        %v988 = vld [vmem:[#allocation2] sm:$0xff]
        %v989 = vld [vmem:[#allocation2 + $0x8] sm:$0xff]
        %992 = vrot.lane.b32.xlu0 %v988, 93
        %v993 = vpop.permute.xlu0 %992
        %994 = vrot.lane.b32.xlu0 %v989, 93
        %v995 = vpop.permute.xlu0 %994
        %vm996 = vcmask 760832
        %v997 = vsel %vm996, %v993, %v995
        %999 = vst [vmem:[#allocation3 + $0x118] sm:$0xff] %v997
        %v1000 = vld [vmem:[#allocation2] sm:$0xff]
        %v1001 = vld [vmem:[#allocation2 + $0x8] sm:$0xff]
        %1004 = vrot.lane.b32.xlu0 %v1000, 92
        %v1005 = vpop.permute.xlu0 %1004
        %1006 = vrot.lane.b32.xlu0 %v1001, 92
        %v1007 = vpop.permute.xlu0 %1006
        %vm1008 = vcmask 752640
        %v1009 = vsel %vm1008, %v1005, %v1007
        %1011 = vst [vmem:[#allocation3 + $0x120] sm:$0xff] %v1009
        %v1012 = vld [vmem:[#allocation2] sm:$0xff]
        %v1013 = vld [vmem:[#allocation2 + $0x8] sm:$0xff]
        %1016 = vrot.lane.b32.xlu0 %v1012, 91
        %v1017 = vpop.permute.xlu0 %1016
        %1018 = vrot.lane.b32.xlu0 %v1013, 91
        %v1019 = vpop.permute.xlu0 %1018
        %vm1020 = vcmask 744448
        %v1021 = vsel %vm1020, %v1017, %v1019
        %1023 = vst [vmem:[#allocation3 + $0x128] sm:$0xff] %v1021
        %v1024 = vld [vmem:[#allocation2] sm:$0xff]
        %v1025 = vld [vmem:[#allocation2 + $0x8] sm:$0xff]
        %1028 = vrot.lane.b32.xlu0 %v1024, 90
        %v1029 = vpop.permute.xlu0 %1028
        %1030 = vrot.lane.b32.xlu0 %v1025, 90
        %v1031 = vpop.permute.xlu0 %1030
        %vm1032 = vcmask 736256
        %v1033 = vsel %vm1032, %v1029, %v1031
        %1035 = vst [vmem:[#allocation3 + $0x130] sm:$0xff] %v1033
        %1037 = vrot.lane.b32.xlu0 %v495, 1
        %v1038 = vpop.permute.xlu0 %1037
        %vm1040 = vcmask 1047560
        %1041 = vst.msk [vmem:[#allocation4] sm:$0xff] %vm1040, %v1038
        %1042 = vst.msk [vmem:[#allocation4 + $0x8] sm:$0xff] %vm485, %v1038
        %v1043 = vld [vmem:[#allocation4] sm:$0xff]
        %v1044 = vld [vmem:[#allocation4 + $0x8] sm:$0xff]
        %1047 = vrot.lane.b32.xlu0 %v1043, 127
        %v1048 = vpop.permute.xlu0 %1047
        %1049 = vrot.lane.b32.xlu0 %v1044, 127
        %v1050 = vpop.permute.xlu0 %1049
        %v1051 = vsel %vm588, %v1048, %v1050
        %v1053 = vmax.f32 %v1043, %v1051
        %1054 = vrot.lane.b32.xlu0 %v1043, 126
        %v1055 = vpop.permute.xlu0 %1054
        %1056 = vrot.lane.b32.xlu0 %v1044, 126
        %v1057 = vpop.permute.xlu0 %1056
        %v1058 = vsel %vm600, %v1055, %v1057
        %v1060 = vmax.f32 %v1053, %v1058
        %1061 = vst [vmem:[#allocation3 + $0x138] sm:$0xff] %v1060
        %v1062 = vld [vmem:[%s2] sm:$0xff]
        %v1063 = vld [vmem:[%s2 + $0x8] sm:$0xff]
        %v1064 = vld [vmem:[%s2 + $0x10] sm:$0xff]
        %v1065 = vld [vmem:[%s2 + $0x18] sm:$0xff]
        %v1066 = vld [vmem:[%s2 + $0x20] sm:$0xff]
        %v1067 = vld [vmem:[%s2 + $0x28] sm:$0xff]
        %v1068 = vld [vmem:[%s2 + $0x30] sm:$0xff]
        %v1069 = vld [vmem:[%s2 + $0x38] sm:$0xff]
        %v1070 = vld [vmem:[%s2 + $0x40] sm:$0xff]
        %v1071 = vld [vmem:[%s2 + $0x48] sm:$0xff]
        %v1072 = vld [vmem:[%s2 + $0x50] sm:$0xff]
        %v1073 = vld [vmem:[%s2 + $0x58] sm:$0xff]
        %v1074 = vld [vmem:[#allocation3] sm:$0xff]
        %v1075 = vld [vmem:[#allocation3 + $0x8] sm:$0xff]
        %v1076 = vld [vmem:[#allocation3 + $0x10] sm:$0xff]
        %v1077 = vld [vmem:[#allocation3 + $0x18] sm:$0xff]
        %v1078 = vld [vmem:[#allocation3 + $0x20] sm:$0xff]
        %v1079 = vld [vmem:[#allocation3 + $0x28] sm:$0xff]
        %v1080 = vld [vmem:[#allocation3 + $0x30] sm:$0xff]
        %v1081 = vld [vmem:[#allocation3 + $0x38] sm:$0xff]
        %v1082 = vld [vmem:[#allocation3 + $0x40] sm:$0xff]
        %v1083 = vld [vmem:[#allocation3 + $0x48] sm:$0xff]
        %v1084 = vld [vmem:[#allocation3 + $0x50] sm:$0xff]
        %v1085 = vld [vmem:[#allocation3 + $0x58] sm:$0xff]
        %v1086 = vld [vmem:[#allocation3 + $0x60] sm:$0xff]
        %v1087 = vld [vmem:[#allocation3 + $0x68] sm:$0xff]
        %v1088 = vld [vmem:[#allocation3 + $0x70] sm:$0xff]
        %v1089 = vld [vmem:[#allocation3 + $0x78] sm:$0xff]
        %v1090 = vld [vmem:[#allocation3 + $0x80] sm:$0xff]
        %v1091 = vld [vmem:[#allocation3 + $0x88] sm:$0xff]
        %v1092 = vld [vmem:[#allocation3 + $0x90] sm:$0xff]
        %v1093 = vld [vmem:[#allocation3 + $0x98] sm:$0xff]
        %v1094 = vld [vmem:[#allocation3 + $0xa0] sm:$0xff]
        %v1095 = vld [vmem:[#allocation3 + $0xa8] sm:$0xff]
        %v1096 = vld [vmem:[#allocation3 + $0xb0] sm:$0xff]
        %v1097 = vld [vmem:[#allocation3 + $0xb8] sm:$0xff]
        %v1098 = vld [vmem:[#allocation3 + $0xc0] sm:$0xff]
        %v1099 = vld [vmem:[#allocation3 + $0xc8] sm:$0xff]
        %v1100 = vld [vmem:[#allocation3 + $0xd0] sm:$0xff]
        %v1101 = vld [vmem:[#allocation3 + $0xd8] sm:$0xff]
        %v1102 = vld [vmem:[#allocation3 + $0xe0] sm:$0xff]
        %v1103 = vld [vmem:[#allocation3 + $0xe8] sm:$0xff]
        %v1104 = vld [vmem:[#allocation3 + $0xf0] sm:$0xff]
        %v1105 = vld [vmem:[#allocation3 + $0xf8] sm:$0xff]
        %v1106 = vld [vmem:[#allocation3 + $0x100] sm:$0xff]
        %v1107 = vld [vmem:[#allocation3 + $0x108] sm:$0xff]
        %v1108 = vld [vmem:[#allocation3 + $0x110] sm:$0xff]
        %v1109 = vld [vmem:[#allocation3 + $0x118] sm:$0xff]
        %v1110 = vld [vmem:[#allocation3 + $0x120] sm:$0xff]
        %v1111 = vld [vmem:[#allocation3 + $0x128] sm:$0xff]
        %v1112 = vld [vmem:[#allocation3 + $0x130] sm:$0xff]
        %v1113 = vld [vmem:[#allocation3 + $0x138] sm:$0xff]
        %v1114 = vld [vmem:[%s3] sm:$0xff]
        %v1115 = vld [vmem:[%s3 + $0x8] sm:$0xff]
        %v1116 = vld [vmem:[%s3 + $0x10] sm:$0xff]
        %v1117 = vld [vmem:[%s3 + $0x18] sm:$0xff]
        %1119 = vset.pattern.permute.xlu0 0
        %1120 = vperm.xlu0 %1119, %v1114
        %v1121 = vpop.permute.xlu0 %1120
        %1124 = vset.pattern.permute.xlu0 0
        %1125 = vperm.xlu0 %1124, %v1115
        %v1126 = vpop.permute.xlu0 %1125
        %1129 = vset.pattern.permute.xlu0 0
        %1130 = vperm.xlu0 %1129, %v1116
        %v1131 = vpop.permute.xlu0 %1130
        %1134 = vset.pattern.permute.xlu0 0
        %1135 = vperm.xlu0 %1134, %v1117
        %v1136 = vpop.permute.xlu0 %1135
        %vm1138 = vcmask 523264
        %v1140 = vsel %vm1138, %v1064, 0
        %v1143 = vsel %vm1138, %v1067, 0
        %v1146 = vsel %vm1138, %v1070, 0
        %v1149 = vsel %vm1138, %v1073, 0
        %1151 = vmatprep.subr.mxu0 0.0
        %1152 = vmatpush1.msra.mxu0 %v1074
        %1153 = vmatprep.subr.mxu0 0.0
        %1154 = vmatpush1.msra.mxu0 %v1075
        %1155 = vmatprep.subr.mxu0 0.0
        %1156 = vmatpush1.msra.mxu0 %v1076
        %1157 = vmatprep.subr.mxu0 0.0
        %1158 = vmatpush1.msra.mxu0 %v1077
        %1159 = vmatprep.subr.mxu0 0.0
        %1160 = vmatpush1.msra.mxu0 %v1078
        %1161 = vmatprep.subr.mxu0 0.0
        %1162 = vmatpush1.msra.mxu0 %v1079
        %1163 = vmatprep.subr.mxu0 0.0
        %1164 = vmatpush1.msra.mxu0 %v1080
        %1165 = vmatprep.subr.mxu0 0.0
        %1166 = vmatpush1.msra.mxu0 %v1081
        %1167 = vmatprep.subr.mxu0 0.0
        %1168 = vmatpush1.msra.mxu0 %v1082
        %1169 = vmatprep.subr.mxu0 0.0
        %1170 = vmatpush1.msra.mxu0 %v1083
        %1171 = vmatprep.subr.mxu0 0.0
        %1172 = vmatpush1.msra.mxu0 %v1084
        %1173 = vmatprep.subr.mxu0 0.0
        %1174 = vmatpush1.msra.mxu0 %v1085
        %1175 = vmatprep.subr.mxu0 0.0
        %1176 = vmatpush1.msra.mxu0 %v1086
        %1177 = vmatprep.subr.mxu0 0.0
        %1178 = vmatpush1.msra.mxu0 %v1087
        %1179 = vmatprep.subr.mxu0 0.0
        %1180 = vmatpush1.msra.mxu0 %v1088
        %1181 = vmatprep.subr.mxu0 0.0
        %1182 = vmatpush1.msra.mxu0 %v1089
        %1183 = vmatprep.subr.mxu0 0.0
        %1184 = vmatpush1.msra.mxu0 %v1090
        %1185 = vmatprep.subr.mxu0 0.0
        %1186 = vmatpush1.msra.mxu0 %v1091
        %1187 = vmatprep.subr.mxu0 0.0
        %1188 = vmatpush1.msra.mxu0 %v1092
        %1189 = vmatprep.subr.mxu0 0.0
        %1190 = vmatpush1.msra.mxu0 %v1093
        %1191 = vmatprep.subr.mxu0 0.0
        %1192 = vmatpush1.msra.mxu0 %v1094
        %1193 = vmatprep.subr.mxu0 0.0
        %1194 = vmatpush1.msra.mxu0 %v1095
        %1195 = vmatprep.subr.mxu0 0.0
        %1196 = vmatpush1.msra.mxu0 %v1096
        %1197 = vmatprep.subr.mxu0 0.0
        %1198 = vmatpush1.msra.mxu0 %v1097
        %1199 = vmatprep.subr.mxu0 0.0
        %1200 = vmatpush1.msra.mxu0 %v1098
        %1201 = vmatprep.subr.mxu0 0.0
        %1202 = vmatpush1.msra.mxu0 %v1099
        %1203 = vmatprep.subr.mxu0 0.0
        %1204 = vmatpush1.msra.mxu0 %v1100
        %1205 = vmatprep.subr.mxu0 0.0
        %1206 = vmatpush1.msra.mxu0 %v1101
        %1207 = vmatprep.subr.mxu0 0.0
        %1208 = vmatpush1.msra.mxu0 %v1102
        %1209 = vmatprep.subr.mxu0 0.0
        %1210 = vmatpush1.msra.mxu0 %v1103
        %1211 = vmatprep.subr.mxu0 0.0
        %1212 = vmatpush1.msra.mxu0 %v1104
        %1213 = vmatprep.subr.mxu0 0.0
        %1214 = vmatpush1.msra.mxu0 %v1105
        %1215 = vmatprep.mubr.f32.mxu0 %v1063
        %1216 = vmatmul.mubr.f32.gmra.mrb[0].mxu0 %v1062
        %v1217 = vpop.f32.mrb[0].mxu0
        %v1218 = vadd.f32 %v1121, %v1217
        %v1219 = vpop.f32.mrb[0].mxu0
        %1220 = vmatprep.mubr.f32.mxu0 %v1066
        %1221 = vmatmul.mubr.f32.gmra.mrb[0].mxu0 %v1065
        %v1222 = vpop.f32.mrb[0].mxu0
        %v1223 = vadd.f32 %v1126, %v1222
        %v1224 = vpop.f32.mrb[0].mxu0
        %1225 = vmatprep.mubr.f32.mxu0 %v1069
        %1226 = vmatmul.mubr.f32.gmra.mrb[0].mxu0 %v1068
        %v1227 = vpop.f32.mrb[0].mxu0
        %v1228 = vadd.f32 %v1131, %v1227
        %v1229 = vpop.f32.mrb[0].mxu0
        %1230 = vmatprep.mubr.f32.mxu0 %v1072
        %1231 = vmatmul.mubr.f32.gmra.mrb[0].mxu0 %v1071
        %v1232 = vpop.f32.mrb[0].mxu0
        %v1233 = vadd.f32 %v1136, %v1232
        %v1234 = vpop.f32.mrb[0].mxu0
        %1235 = vdwg.mxu0
        %1236 = vmatprep.subr.mxu0 0.0
        %1237 = vmatpush1.msra.mxu0 %v1106
        %1238 = vmatprep.subr.mxu0 0.0
        %1239 = vmatpush1.msra.mxu0 %v1107
        %1240 = vmatprep.subr.mxu0 0.0
        %1241 = vmatpush1.msra.mxu0 %v1108
        %1242 = vmatprep.subr.mxu0 0.0
        %1243 = vmatpush1.msra.mxu0 %v1109
        %1244 = vmatprep.subr.mxu0 0.0
        %1245 = vmatpush1.msra.mxu0 %v1110
        %1246 = vmatprep.subr.mxu0 0.0
        %1247 = vmatpush1.msra.mxu0 %v1111
        %1248 = vmatprep.subr.mxu0 0.0
        %1249 = vmatpush1.msra.mxu0 %v1112
        %1250 = vmatprep.subr.mxu0 0.0
        %1251 = vmatpush1.msra.mxu0 %v1113
        %1252 = vmatprep.subr.mxu0 0.0
        %1253 = vmatpush1.msra.mxu0 0.0
        %1254 = vmatprep.subr.mxu0 0.0
        %1255 = vmatpush1.msra.mxu0 0.0
        %1256 = vmatprep.subr.mxu0 0.0
        %1257 = vmatpush1.msra.mxu0 0.0
        %1258 = vmatprep.subr.mxu0 0.0
        %1259 = vmatpush1.msra.mxu0 0.0
        %1260 = vmatprep.subr.mxu0 0.0
        %1261 = vmatpush1.msra.mxu0 0.0
        %1262 = vmatprep.subr.mxu0 0.0
        %1263 = vmatpush1.msra.mxu0 0.0
        %1264 = vmatprep.subr.mxu0 0.0
        %1265 = vmatpush1.msra.mxu0 0.0
        %1266 = vmatprep.subr.mxu0 0.0
        %1267 = vmatpush1.msra.mxu0 0.0
        %1268 = vmatprep.subr.mxu0 0.0
        %1269 = vmatpush1.msra.mxu0 0.0
        %1270 = vmatprep.subr.mxu0 0.0
        %1271 = vmatpush1.msra.mxu0 0.0
        %1272 = vmatprep.subr.mxu0 0.0
        %1273 = vmatpush1.msra.mxu0 0.0
        %1274 = vmatprep.subr.mxu0 0.0
        %1275 = vmatpush1.msra.mxu0 0.0
        %1276 = vmatprep.subr.mxu0 0.0
        %1277 = vmatpush1.msra.mxu0 0.0
        %1278 = vmatprep.subr.mxu0 0.0
        %1279 = vmatpush1.msra.mxu0 0.0
        %1280 = vmatprep.subr.mxu0 0.0
        %1281 = vmatpush1.msra.mxu0 0.0
        %1282 = vmatprep.subr.mxu0 0.0
        %1283 = vmatpush1.msra.mxu0 0.0
        %1284 = vmatprep.subr.mxu0 0.0
        %1285 = vmatpush1.msra.mxu0 0.0
        %1286 = vmatprep.subr.mxu0 0.0
        %1287 = vmatpush1.msra.mxu0 0.0
        %1288 = vmatprep.subr.mxu0 0.0
        %1289 = vmatpush1.msra.mxu0 0.0
        %1290 = vmatprep.subr.mxu0 0.0
        %1291 = vmatpush1.msra.mxu0 0.0
        %1292 = vmatprep.subr.mxu0 0.0
        %1293 = vmatpush1.msra.mxu0 0.0
        %1294 = vmatprep.subr.mxu0 0.0
        %1295 = vmatpush1.msra.mxu0 0.0
        %1296 = vmatprep.subr.mxu0 0.0
        %1297 = vmatpush1.msra.mxu0 0.0
        %1298 = vmatprep.subr.mxu0 0.0
        %1299 = vmatpush1.msra.mxu0 0.0
        %1300 = vmatprep.mubr.f32.mxu0 0.0
        %1301 = vmatmul.mubr.f32.gmra.mrb[0].mxu0 %v1140
        %v1302 = vpop.f32.mrb[0].mxu0
        %v1303 = vadd.f32 %v1218, %v1302
        %v1304 = vpop.f32.mrb[0].mxu0
        %1305 = vmatprep.mubr.f32.mxu0 0.0
        %1306 = vmatmul.mubr.f32.gmra.mrb[0].mxu0 %v1143
        %v1307 = vpop.f32.mrb[0].mxu0
        %v1308 = vadd.f32 %v1223, %v1307
        %v1309 = vpop.f32.mrb[0].mxu0
        %1310 = vmatprep.mubr.f32.mxu0 0.0
        %1311 = vmatmul.mubr.f32.gmra.mrb[0].mxu0 %v1146
        %v1312 = vpop.f32.mrb[0].mxu0
        %v1313 = vadd.f32 %v1228, %v1312
        %v1314 = vpop.f32.mrb[0].mxu0
        %1315 = vmatprep.mubr.f32.mxu0 0.0
        %1316 = vmatmul.mubr.f32.gmra.mrb[0].mxu0 %v1149
        %v1317 = vpop.f32.mrb[0].mxu0
        %v1318 = vadd.f32 %v1233, %v1317
        %v1319 = vpop.f32.mrb[0].mxu0
        %1320 = vdwg.mxu0
        %v1321 = vmax.f32 %v1303, 0.0
        %v1322 = vmax.f32 %v1308, 0.0
        %v1323 = vmax.f32 %v1313, 0.0
        %v1324 = vmax.f32 %v1318, 0.0
        %v1325 = vld [vmem:[#allocation10] sm:$0xff]
        %vm1326 = vcmask 261120
        %v1328 = vsel %vm1326, %v1325, 0
        %1330 = vmatprep.subr.mxu0 0.0
        %1331 = vmatpush1.msra.mxu0 %v1321
        %1332 = vmatprep.subr.mxu0 0.0
        %1333 = vmatpush1.msra.mxu0 %v1322
        %1334 = vmatprep.subr.mxu0 0.0
        %1335 = vmatpush1.msra.mxu0 %v1323
        %1336 = vmatprep.subr.mxu0 0.0
        %1337 = vmatpush1.msra.mxu0 %v1324
        %1338 = vmatprep.subr.mxu0 0.0
        %1339 = vmatpush1.msra.mxu0 0.0
        %1340 = vmatprep.subr.mxu0 0.0
        %1341 = vmatpush1.msra.mxu0 0.0
        %1342 = vmatprep.subr.mxu0 0.0
        %1343 = vmatpush1.msra.mxu0 0.0
        %1344 = vmatprep.subr.mxu0 0.0
        %1345 = vmatpush1.msra.mxu0 0.0
        %1346 = vmatprep.subr.mxu0 0.0
        %1347 = vmatpush1.msra.mxu0 0.0
        %1348 = vmatprep.subr.mxu0 0.0
        %1349 = vmatpush1.msra.mxu0 0.0
        %1350 = vmatprep.subr.mxu0 0.0
        %1351 = vmatpush1.msra.mxu0 0.0
        %1352 = vmatprep.subr.mxu0 0.0
        %1353 = vmatpush1.msra.mxu0 0.0
        %1354 = vmatprep.subr.mxu0 0.0
        %1355 = vmatpush1.msra.mxu0 0.0
        %1356 = vmatprep.subr.mxu0 0.0
        %1357 = vmatpush1.msra.mxu0 0.0
        %1358 = vmatprep.subr.mxu0 0.0
        %1359 = vmatpush1.msra.mxu0 0.0
        %1360 = vmatprep.subr.mxu0 0.0
        %1361 = vmatpush1.msra.mxu0 0.0
        %1362 = vmatprep.subr.mxu0 0.0
        %1363 = vmatpush1.msra.mxu0 0.0
        %1364 = vmatprep.subr.mxu0 0.0
        %1365 = vmatpush1.msra.mxu0 0.0
        %1366 = vmatprep.subr.mxu0 0.0
        %1367 = vmatpush1.msra.mxu0 0.0
        %1368 = vmatprep.subr.mxu0 0.0
        %1369 = vmatpush1.msra.mxu0 0.0
        %1370 = vmatprep.subr.mxu0 0.0
        %1371 = vmatpush1.msra.mxu0 0.0
        %1372 = vmatprep.subr.mxu0 0.0
        %1373 = vmatpush1.msra.mxu0 0.0
        %1374 = vmatprep.subr.mxu0 0.0
        %1375 = vmatpush1.msra.mxu0 0.0
        %1376 = vmatprep.subr.mxu0 0.0
        %1377 = vmatpush1.msra.mxu0 0.0
        %1378 = vmatprep.subr.mxu0 0.0
        %1379 = vmatpush1.msra.mxu0 0.0
        %1380 = vmatprep.subr.mxu0 0.0
        %1381 = vmatpush1.msra.mxu0 0.0
        %1382 = vmatprep.subr.mxu0 0.0
        %1383 = vmatpush1.msra.mxu0 0.0
        %1384 = vmatprep.subr.mxu0 0.0
        %1385 = vmatpush1.msra.mxu0 0.0
        %1386 = vmatprep.subr.mxu0 0.0
        %1387 = vmatpush1.msra.mxu0 0.0
        %1388 = vmatprep.subr.mxu0 0.0
        %1389 = vmatpush1.msra.mxu0 0.0
        %1390 = vmatprep.subr.mxu0 0.0
        %1391 = vmatpush1.msra.mxu0 0.0
        %1392 = vmatprep.subr.mxu0 0.0
        %1393 = vmatpush1.msra.mxu0 0.0
        %1394 = vmatprep.mubr.f32.mxu0 0.0
        %1395 = vmatmul.mubr.f32.gmra.mrb[0].mxu0 %v1328
        %v1396 = vpop.f32.mrb[0].mxu0
        %v1397 = vadd.f32 0.0, %v1396
        %v1398 = vpop.f32.mrb[0].mxu0
        %1399 = vdwg.mxu0
        %1401 = vrot.lane.b32.xlu0 %v1397, 19
        %v1402 = vpop.permute.xlu0 %1401
        %1404 = vst.msk [vmem:[#allocation2] sm:$0xff] %vm575, %v1402
        %1405 = vst.msk [vmem:[#allocation2 + $0x8] sm:$0xff] %vm481, %v1402
        %v1406 = vld [vmem:[#allocation2] sm:$0xff]
        %1407 = vst [vmem:[#allocation3] sm:$0xff] %v1406
        %v1408 = vld [vmem:[#allocation2] sm:$0xff]
        %v1409 = vld [vmem:[#allocation2 + $0x8] sm:$0xff]
        %1412 = vrot.lane.b32.xlu0 %v1408, 127
        %v1413 = vpop.permute.xlu0 %1412
        %1414 = vrot.lane.b32.xlu0 %v1409, 127
        %v1415 = vpop.permute.xlu0 %1414
        %v1416 = vsel %vm588, %v1413, %v1415
        %1418 = vst [vmem:[#allocation3 + $0x8] sm:$0xff] %v1416
        %v1419 = vld [vmem:[#allocation2] sm:$0xff]
        %v1420 = vld [vmem:[#allocation2 + $0x8] sm:$0xff]
        %1423 = vrot.lane.b32.xlu0 %v1419, 126
        %v1424 = vpop.permute.xlu0 %1423
        %1425 = vrot.lane.b32.xlu0 %v1420, 126
        %v1426 = vpop.permute.xlu0 %1425
        %v1427 = vsel %vm600, %v1424, %v1426
        %1429 = vst [vmem:[#allocation3 + $0x10] sm:$0xff] %v1427
        %v1430 = vld [vmem:[#allocation2] sm:$0xff]
        %v1431 = vld [vmem:[#allocation2 + $0x8] sm:$0xff]
        %1434 = vrot.lane.b32.xlu0 %v1430, 125
        %v1435 = vpop.permute.xlu0 %1434
        %1436 = vrot.lane.b32.xlu0 %v1431, 125
        %v1437 = vpop.permute.xlu0 %1436
        %v1438 = vsel %vm612, %v1435, %v1437
        %1440 = vst [vmem:[#allocation3 + $0x18] sm:$0xff] %v1438
        %v1441 = vld [vmem:[#allocation2] sm:$0xff]
        %v1442 = vld [vmem:[#allocation2 + $0x8] sm:$0xff]
        %1445 = vrot.lane.b32.xlu0 %v1441, 124
        %v1446 = vpop.permute.xlu0 %1445
        %1447 = vrot.lane.b32.xlu0 %v1442, 124
        %v1448 = vpop.permute.xlu0 %1447
        %v1449 = vsel %vm624, %v1446, %v1448
        %1451 = vst [vmem:[#allocation3 + $0x20] sm:$0xff] %v1449
        %v1452 = vld [vmem:[#allocation2] sm:$0xff]
        %v1453 = vld [vmem:[#allocation2 + $0x8] sm:$0xff]
        %1456 = vrot.lane.b32.xlu0 %v1452, 123
        %v1457 = vpop.permute.xlu0 %1456
        %1458 = vrot.lane.b32.xlu0 %v1453, 123
        %v1459 = vpop.permute.xlu0 %1458
        %v1460 = vsel %vm636, %v1457, %v1459
        %1462 = vst [vmem:[#allocation3 + $0x28] sm:$0xff] %v1460
        %v1463 = vld [vmem:[#allocation2] sm:$0xff]
        %v1464 = vld [vmem:[#allocation2 + $0x8] sm:$0xff]
        %1467 = vrot.lane.b32.xlu0 %v1463, 122
        %v1468 = vpop.permute.xlu0 %1467
        %1469 = vrot.lane.b32.xlu0 %v1464, 122
        %v1470 = vpop.permute.xlu0 %1469
        %v1471 = vsel %vm648, %v1468, %v1470
        %1473 = vst [vmem:[#allocation3 + $0x30] sm:$0xff] %v1471
        %v1474 = vld [vmem:[#allocation2] sm:$0xff]
        %v1475 = vld [vmem:[#allocation2 + $0x8] sm:$0xff]
        %1478 = vrot.lane.b32.xlu0 %v1474, 121
        %v1479 = vpop.permute.xlu0 %1478
        %1480 = vrot.lane.b32.xlu0 %v1475, 121
        %v1481 = vpop.permute.xlu0 %1480
        %v1482 = vsel %vm660, %v1479, %v1481
        %1484 = vst [vmem:[#allocation3 + $0x38] sm:$0xff] %v1482
        %v1485 = vld [vmem:[#allocation2] sm:$0xff]
        %v1486 = vld [vmem:[#allocation2 + $0x8] sm:$0xff]
        %1489 = vrot.lane.b32.xlu0 %v1485, 120
        %v1490 = vpop.permute.xlu0 %1489
        %1491 = vrot.lane.b32.xlu0 %v1486, 120
        %v1492 = vpop.permute.xlu0 %1491
        %v1493 = vsel %vm672, %v1490, %v1492
        %1495 = vst [vmem:[#allocation3 + $0x40] sm:$0xff] %v1493
        %v1496 = vld [vmem:[#allocation2] sm:$0xff]
        %v1497 = vld [vmem:[#allocation2 + $0x8] sm:$0xff]
        %1500 = vrot.lane.b32.xlu0 %v1496, 119
        %v1501 = vpop.permute.xlu0 %1500
        %1502 = vrot.lane.b32.xlu0 %v1497, 119
        %v1503 = vpop.permute.xlu0 %1502
        %v1504 = vsel %vm684, %v1501, %v1503
        %1506 = vst [vmem:[#allocation3 + $0x48] sm:$0xff] %v1504
        %v1507 = vld [vmem:[#allocation2] sm:$0xff]
        %v1508 = vld [vmem:[#allocation2 + $0x8] sm:$0xff]
        %1511 = vrot.lane.b32.xlu0 %v1507, 118
        %v1512 = vpop.permute.xlu0 %1511
        %1513 = vrot.lane.b32.xlu0 %v1508, 118
        %v1514 = vpop.permute.xlu0 %1513
        %v1515 = vsel %vm696, %v1512, %v1514
        %1517 = vst [vmem:[#allocation3 + $0x50] sm:$0xff] %v1515
        %v1518 = vld [vmem:[#allocation2] sm:$0xff]
        %v1519 = vld [vmem:[#allocation2 + $0x8] sm:$0xff]
        %1522 = vrot.lane.b32.xlu0 %v1518, 117
        %v1523 = vpop.permute.xlu0 %1522
        %1524 = vrot.lane.b32.xlu0 %v1519, 117
        %v1525 = vpop.permute.xlu0 %1524
        %v1526 = vsel %vm708, %v1523, %v1525
        %1528 = vst [vmem:[#allocation3 + $0x58] sm:$0xff] %v1526
        %v1529 = vld [vmem:[#allocation2] sm:$0xff]
        %v1530 = vld [vmem:[#allocation2 + $0x8] sm:$0xff]
        %1533 = vrot.lane.b32.xlu0 %v1529, 116
        %v1534 = vpop.permute.xlu0 %1533
        %1535 = vrot.lane.b32.xlu0 %v1530, 116
        %v1536 = vpop.permute.xlu0 %1535
        %v1537 = vsel %vm720, %v1534, %v1536
        %1539 = vst [vmem:[#allocation3 + $0x60] sm:$0xff] %v1537
        %v1540 = vld [vmem:[#allocation2] sm:$0xff]
        %v1541 = vld [vmem:[#allocation2 + $0x8] sm:$0xff]
        %1544 = vrot.lane.b32.xlu0 %v1540, 115
        %v1545 = vpop.permute.xlu0 %1544
        %1546 = vrot.lane.b32.xlu0 %v1541, 115
        %v1547 = vpop.permute.xlu0 %1546
        %v1548 = vsel %vm732, %v1545, %v1547
        %1550 = vst [vmem:[#allocation3 + $0x68] sm:$0xff] %v1548
        %v1551 = vld [vmem:[#allocation2] sm:$0xff]
        %v1552 = vld [vmem:[#allocation2 + $0x8] sm:$0xff]
        %1555 = vrot.lane.b32.xlu0 %v1551, 114
        %v1556 = vpop.permute.xlu0 %1555
        %1557 = vrot.lane.b32.xlu0 %v1552, 114
        %v1558 = vpop.permute.xlu0 %1557
        %v1559 = vsel %vm744, %v1556, %v1558
        %1561 = vst [vmem:[#allocation3 + $0x70] sm:$0xff] %v1559
        %v1562 = vld [vmem:[#allocation2] sm:$0xff]
        %v1563 = vld [vmem:[#allocation2 + $0x8] sm:$0xff]
        %1566 = vrot.lane.b32.xlu0 %v1562, 113
        %v1567 = vpop.permute.xlu0 %1566
        %1568 = vrot.lane.b32.xlu0 %v1563, 113
        %v1569 = vpop.permute.xlu0 %1568
        %v1570 = vsel %vm756, %v1567, %v1569
        %1572 = vst [vmem:[#allocation3 + $0x78] sm:$0xff] %v1570
        %v1573 = vld [vmem:[#allocation2] sm:$0xff]
        %v1574 = vld [vmem:[#allocation2 + $0x8] sm:$0xff]
        %1577 = vrot.lane.b32.xlu0 %v1573, 112
        %v1578 = vpop.permute.xlu0 %1577
        %1579 = vrot.lane.b32.xlu0 %v1574, 112
        %v1580 = vpop.permute.xlu0 %1579
        %v1581 = vsel %vm768, %v1578, %v1580
        %1583 = vst [vmem:[#allocation3 + $0x80] sm:$0xff] %v1581
        %v1584 = vld [vmem:[#allocation2] sm:$0xff]
        %v1585 = vld [vmem:[#allocation2 + $0x8] sm:$0xff]
        %1588 = vrot.lane.b32.xlu0 %v1584, 111
        %v1589 = vpop.permute.xlu0 %1588
        %1590 = vrot.lane.b32.xlu0 %v1585, 111
        %v1591 = vpop.permute.xlu0 %1590
        %v1592 = vsel %vm780, %v1589, %v1591
        %1594 = vst [vmem:[#allocation3 + $0x88] sm:$0xff] %v1592
        %v1595 = vld [vmem:[#allocation2] sm:$0xff]
        %v1596 = vld [vmem:[#allocation2 + $0x8] sm:$0xff]
        %1599 = vrot.lane.b32.xlu0 %v1595, 110
        %v1600 = vpop.permute.xlu0 %1599
        %1601 = vrot.lane.b32.xlu0 %v1596, 110
        %v1602 = vpop.permute.xlu0 %1601
        %v1603 = vsel %vm792, %v1600, %v1602
        %1605 = vst [vmem:[#allocation3 + $0x90] sm:$0xff] %v1603
        %v1606 = vld [vmem:[#allocation2] sm:$0xff]
        %v1607 = vld [vmem:[#allocation2 + $0x8] sm:$0xff]
        %1610 = vrot.lane.b32.xlu0 %v1606, 109
        %v1611 = vpop.permute.xlu0 %1610
        %1612 = vrot.lane.b32.xlu0 %v1607, 109
        %v1613 = vpop.permute.xlu0 %1612
        %v1614 = vsel %vm804, %v1611, %v1613
        %1616 = vst [vmem:[#allocation3 + $0x98] sm:$0xff] %v1614
        %v1617 = vld [vmem:[#allocation2] sm:$0xff]
        %v1618 = vld [vmem:[#allocation2 + $0x8] sm:$0xff]
        %1621 = vrot.lane.b32.xlu0 %v1617, 108
        %v1622 = vpop.permute.xlu0 %1621
        %1623 = vrot.lane.b32.xlu0 %v1618, 108
        %v1624 = vpop.permute.xlu0 %1623
        %v1625 = vsel %vm816, %v1622, %v1624
        %1627 = vst [vmem:[#allocation3 + $0xa0] sm:$0xff] %v1625
        %v1628 = vld [vmem:[#allocation2] sm:$0xff]
        %v1629 = vld [vmem:[#allocation2 + $0x8] sm:$0xff]
        %1632 = vrot.lane.b32.xlu0 %v1628, 107
        %v1633 = vpop.permute.xlu0 %1632
        %1634 = vrot.lane.b32.xlu0 %v1629, 107
        %v1635 = vpop.permute.xlu0 %1634
        %v1636 = vsel %vm828, %v1633, %v1635
        %1638 = vst [vmem:[#allocation3 + $0xa8] sm:$0xff] %v1636
        %v1639 = vld [vmem:[#allocation2] sm:$0xff]
        %v1640 = vld [vmem:[#allocation2 + $0x8] sm:$0xff]
        %1643 = vrot.lane.b32.xlu0 %v1639, 106
        %v1644 = vpop.permute.xlu0 %1643
        %1645 = vrot.lane.b32.xlu0 %v1640, 106
        %v1646 = vpop.permute.xlu0 %1645
        %v1647 = vsel %vm840, %v1644, %v1646
        %1649 = vst [vmem:[#allocation3 + $0xb0] sm:$0xff] %v1647
        %v1650 = vld [vmem:[#allocation2] sm:$0xff]
        %v1651 = vld [vmem:[#allocation2 + $0x8] sm:$0xff]
        %1654 = vrot.lane.b32.xlu0 %v1650, 105
        %v1655 = vpop.permute.xlu0 %1654
        %1656 = vrot.lane.b32.xlu0 %v1651, 105
        %v1657 = vpop.permute.xlu0 %1656
        %v1658 = vsel %vm852, %v1655, %v1657
        %1660 = vst [vmem:[#allocation3 + $0xb8] sm:$0xff] %v1658
        %v1661 = vld [vmem:[#allocation2] sm:$0xff]
        %v1662 = vld [vmem:[#allocation2 + $0x8] sm:$0xff]
        %1665 = vrot.lane.b32.xlu0 %v1661, 104
        %v1666 = vpop.permute.xlu0 %1665
        %1667 = vrot.lane.b32.xlu0 %v1662, 104
        %v1668 = vpop.permute.xlu0 %1667
        %v1669 = vsel %vm864, %v1666, %v1668
        %1671 = vst [vmem:[#allocation3 + $0xc0] sm:$0xff] %v1669
        %v1672 = vld [vmem:[#allocation2] sm:$0xff]
        %v1673 = vld [vmem:[#allocation2 + $0x8] sm:$0xff]
        %1676 = vrot.lane.b32.xlu0 %v1672, 103
        %v1677 = vpop.permute.xlu0 %1676
        %1678 = vrot.lane.b32.xlu0 %v1673, 103
        %v1679 = vpop.permute.xlu0 %1678
        %v1680 = vsel %vm876, %v1677, %v1679
        %1682 = vst [vmem:[#allocation3 + $0xc8] sm:$0xff] %v1680
        %v1683 = vld [vmem:[#allocation2] sm:$0xff]
        %v1684 = vld [vmem:[#allocation2 + $0x8] sm:$0xff]
        %1687 = vrot.lane.b32.xlu0 %v1683, 102
        %v1688 = vpop.permute.xlu0 %1687
        %1689 = vrot.lane.b32.xlu0 %v1684, 102
        %v1690 = vpop.permute.xlu0 %1689
        %v1691 = vsel %vm888, %v1688, %v1690
        %1693 = vst [vmem:[#allocation3 + $0xd0] sm:$0xff] %v1691
        %v1694 = vld [vmem:[#allocation2] sm:$0xff]
        %v1695 = vld [vmem:[#allocation2 + $0x8] sm:$0xff]
        %1698 = vrot.lane.b32.xlu0 %v1694, 101
        %v1699 = vpop.permute.xlu0 %1698
        %1700 = vrot.lane.b32.xlu0 %v1695, 101
        %v1701 = vpop.permute.xlu0 %1700
        %v1702 = vsel %vm900, %v1699, %v1701
        %1704 = vst [vmem:[#allocation3 + $0xd8] sm:$0xff] %v1702
        %v1705 = vld [vmem:[#allocation2] sm:$0xff]
        %v1706 = vld [vmem:[#allocation2 + $0x8] sm:$0xff]
        %1709 = vrot.lane.b32.xlu0 %v1705, 100
        %v1710 = vpop.permute.xlu0 %1709
        %1711 = vrot.lane.b32.xlu0 %v1706, 100
        %v1712 = vpop.permute.xlu0 %1711
        %v1713 = vsel %vm912, %v1710, %v1712
        %1715 = vst [vmem:[#allocation3 + $0xe0] sm:$0xff] %v1713
        %v1716 = vld [vmem:[#allocation2] sm:$0xff]
        %v1717 = vld [vmem:[#allocation2 + $0x8] sm:$0xff]
        %1720 = vrot.lane.b32.xlu0 %v1716, 99
        %v1721 = vpop.permute.xlu0 %1720
        %1722 = vrot.lane.b32.xlu0 %v1717, 99
        %v1723 = vpop.permute.xlu0 %1722
        %v1724 = vsel %vm924, %v1721, %v1723
        %1726 = vst [vmem:[#allocation3 + $0xe8] sm:$0xff] %v1724
        %v1727 = vld [vmem:[#allocation2] sm:$0xff]
        %v1728 = vld [vmem:[#allocation2 + $0x8] sm:$0xff]
        %1731 = vrot.lane.b32.xlu0 %v1727, 98
        %v1732 = vpop.permute.xlu0 %1731
        %1733 = vrot.lane.b32.xlu0 %v1728, 98
        %v1734 = vpop.permute.xlu0 %1733
        %v1735 = vsel %vm936, %v1732, %v1734
        %1737 = vst [vmem:[#allocation3 + $0xf0] sm:$0xff] %v1735
        %v1738 = vld [vmem:[#allocation2] sm:$0xff]
        %v1739 = vld [vmem:[#allocation2 + $0x8] sm:$0xff]
        %1742 = vrot.lane.b32.xlu0 %v1738, 97
        %v1743 = vpop.permute.xlu0 %1742
        %1744 = vrot.lane.b32.xlu0 %v1739, 97
        %v1745 = vpop.permute.xlu0 %1744
        %v1746 = vsel %vm948, %v1743, %v1745
        %1748 = vst [vmem:[#allocation3 + $0xf8] sm:$0xff] %v1746
        %v1749 = vld [vmem:[#allocation2] sm:$0xff]
        %v1750 = vld [vmem:[#allocation2 + $0x8] sm:$0xff]
        %1753 = vrot.lane.b32.xlu0 %v1749, 96
        %v1754 = vpop.permute.xlu0 %1753
        %1755 = vrot.lane.b32.xlu0 %v1750, 96
        %v1756 = vpop.permute.xlu0 %1755
        %v1757 = vsel %vm960, %v1754, %v1756
        %1759 = vst [vmem:[#allocation3 + $0x100] sm:$0xff] %v1757
        %v1760 = vld [vmem:[#allocation2] sm:$0xff]
        %v1761 = vld [vmem:[#allocation2 + $0x8] sm:$0xff]
        %1764 = vrot.lane.b32.xlu0 %v1760, 95
        %v1765 = vpop.permute.xlu0 %1764
        %1766 = vrot.lane.b32.xlu0 %v1761, 95
        %v1767 = vpop.permute.xlu0 %1766
        %v1768 = vsel %vm972, %v1765, %v1767
        %1770 = vst [vmem:[#allocation3 + $0x108] sm:$0xff] %v1768
        %v1771 = vld [vmem:[#allocation2] sm:$0xff]
        %v1772 = vld [vmem:[#allocation2 + $0x8] sm:$0xff]
        %1775 = vrot.lane.b32.xlu0 %v1771, 94
        %v1776 = vpop.permute.xlu0 %1775
        %1777 = vrot.lane.b32.xlu0 %v1772, 94
        %v1778 = vpop.permute.xlu0 %1777
        %v1779 = vsel %vm984, %v1776, %v1778
        %1781 = vst [vmem:[#allocation3 + $0x110] sm:$0xff] %v1779
        %v1782 = vld [vmem:[#allocation2] sm:$0xff]
        %v1783 = vld [vmem:[#allocation2 + $0x8] sm:$0xff]
        %1786 = vrot.lane.b32.xlu0 %v1782, 93
        %v1787 = vpop.permute.xlu0 %1786
        %1788 = vrot.lane.b32.xlu0 %v1783, 93
        %v1789 = vpop.permute.xlu0 %1788
        %v1790 = vsel %vm996, %v1787, %v1789
        %1792 = vst [vmem:[#allocation3 + $0x118] sm:$0xff] %v1790
        %v1793 = vld [vmem:[#allocation2] sm:$0xff]
        %v1794 = vld [vmem:[#allocation2 + $0x8] sm:$0xff]
        %1797 = vrot.lane.b32.xlu0 %v1793, 92
        %v1798 = vpop.permute.xlu0 %1797
        %1799 = vrot.lane.b32.xlu0 %v1794, 92
        %v1800 = vpop.permute.xlu0 %1799
        %v1801 = vsel %vm1008, %v1798, %v1800
        %1803 = vst [vmem:[#allocation3 + $0x120] sm:$0xff] %v1801
        %v1804 = vld [vmem:[#allocation2] sm:$0xff]
        %v1805 = vld [vmem:[#allocation2 + $0x8] sm:$0xff]
        %1808 = vrot.lane.b32.xlu0 %v1804, 91
        %v1809 = vpop.permute.xlu0 %1808
        %1810 = vrot.lane.b32.xlu0 %v1805, 91
        %v1811 = vpop.permute.xlu0 %1810
        %v1812 = vsel %vm1020, %v1809, %v1811
        %1814 = vst [vmem:[#allocation3 + $0x128] sm:$0xff] %v1812
        %v1815 = vld [vmem:[#allocation2] sm:$0xff]
        %v1816 = vld [vmem:[#allocation2 + $0x8] sm:$0xff]
        %1819 = vrot.lane.b32.xlu0 %v1815, 90
        %v1820 = vpop.permute.xlu0 %1819
        %1821 = vrot.lane.b32.xlu0 %v1816, 90
        %v1822 = vpop.permute.xlu0 %1821
        %v1823 = vsel %vm1032, %v1820, %v1822
        %1825 = vst [vmem:[#allocation3 + $0x130] sm:$0xff] %v1823
        %1830 = vrot.lane.b32.xlu0 %v1321, 1
        %v1831 = vpop.permute.xlu0 %1830
        %1832 = vrot.lane.b32.xlu0 %v1322, 1
        %v1833 = vpop.permute.xlu0 %1832
        %1834 = vrot.lane.b32.xlu0 %v1323, 1
        %v1835 = vpop.permute.xlu0 %1834
        %1836 = vrot.lane.b32.xlu0 %v1324, 1
        %v1837 = vpop.permute.xlu0 %1836
        %1842 = vst.msk [vmem:[#allocation4] sm:$0xff] %vm1040, %v1831
        %1843 = vst.msk [vmem:[#allocation4 + $0x8] sm:$0xff] %vm485, %v1831
        %1844 = vst.msk [vmem:[#allocation4 + $0x10] sm:$0xff] %vm1040, %v1833
        %1845 = vst.msk [vmem:[#allocation4 + $0x18] sm:$0xff] %vm485, %v1833
        %1846 = vst.msk [vmem:[#allocation4 + $0x20] sm:$0xff] %vm1040, %v1835
        %1847 = vst.msk [vmem:[#allocation4 + $0x28] sm:$0xff] %vm485, %v1835
        %1848 = vst.msk [vmem:[#allocation4 + $0x30] sm:$0xff] %vm1040, %v1837
        %1849 = vst.msk [vmem:[#allocation4 + $0x38] sm:$0xff] %vm485, %v1837
        %v1850 = vld [vmem:[#allocation4] sm:$0xff]
        %v1851 = vld [vmem:[#allocation4 + $0x10] sm:$0xff]
        %v1852 = vld [vmem:[#allocation4 + $0x20] sm:$0xff]
        %v1853 = vld [vmem:[#allocation4 + $0x30] sm:$0xff]
        %v1854 = vld [vmem:[#allocation4 + $0x8] sm:$0xff]
        %v1855 = vld [vmem:[#allocation4 + $0x18] sm:$0xff]
        %v1856 = vld [vmem:[#allocation4 + $0x28] sm:$0xff]
        %v1857 = vld [vmem:[#allocation4 + $0x38] sm:$0xff]
        %1866 = vrot.lane.b32.xlu0 %v1850, 127
        %v1867 = vpop.permute.xlu0 %1866
        %1868 = vrot.lane.b32.xlu0 %v1854, 127
        %v1869 = vpop.permute.xlu0 %1868
        %1870 = vrot.lane.b32.xlu0 %v1851, 127
        %v1871 = vpop.permute.xlu0 %1870
        %1872 = vrot.lane.b32.xlu0 %v1855, 127
        %v1873 = vpop.permute.xlu0 %1872
        %1874 = vrot.lane.b32.xlu0 %v1852, 127
        %v1875 = vpop.permute.xlu0 %1874
        %1876 = vrot.lane.b32.xlu0 %v1856, 127
        %v1877 = vpop.permute.xlu0 %1876
        %1878 = vrot.lane.b32.xlu0 %v1853, 127
        %v1879 = vpop.permute.xlu0 %1878
        %1880 = vrot.lane.b32.xlu0 %v1857, 127
        %v1881 = vpop.permute.xlu0 %1880
        %v1882 = vsel %vm588, %v1867, %v1869
        %v1883 = vsel %vm588, %v1871, %v1873
        %v1884 = vsel %vm588, %v1875, %v1877
        %v1885 = vsel %vm588, %v1879, %v1881
        %v1890 = vmax.f32 %v1850, %v1882
        %v1891 = vmax.f32 %v1851, %v1883
        %v1892 = vmax.f32 %v1852, %v1884
        %v1893 = vmax.f32 %v1853, %v1885
        %1894 = vrot.lane.b32.xlu0 %v1850, 126
        %v1895 = vpop.permute.xlu0 %1894
        %1896 = vrot.lane.b32.xlu0 %v1854, 126
        %v1897 = vpop.permute.xlu0 %1896
        %1898 = vrot.lane.b32.xlu0 %v1851, 126
        %v1899 = vpop.permute.xlu0 %1898
        %1900 = vrot.lane.b32.xlu0 %v1855, 126
        %v1901 = vpop.permute.xlu0 %1900
        %1902 = vrot.lane.b32.xlu0 %v1852, 126
        %v1903 = vpop.permute.xlu0 %1902
        %1904 = vrot.lane.b32.xlu0 %v1856, 126
        %v1905 = vpop.permute.xlu0 %1904
        %1906 = vrot.lane.b32.xlu0 %v1853, 126
        %v1907 = vpop.permute.xlu0 %1906
        %1908 = vrot.lane.b32.xlu0 %v1857, 126
        %v1909 = vpop.permute.xlu0 %1908
        %v1910 = vsel %vm600, %v1895, %v1897
        %v1911 = vsel %vm600, %v1899, %v1901
        %v1912 = vsel %vm600, %v1903, %v1905
        %v1913 = vsel %vm600, %v1907, %v1909
        %v1918 = vmax.f32 %v1890, %v1910
        %v1919 = vmax.f32 %v1891, %v1911
        %v1920 = vmax.f32 %v1892, %v1912
        %v1921 = vmax.f32 %v1893, %v1913
        %1922 = vst [vmem:[#allocation3 + $0x138] sm:$0xff] %v1918
        %1923 = vst [vmem:[#allocation3 + $0x140] sm:$0xff] %v1919
        %1924 = vst [vmem:[#allocation3 + $0x148] sm:$0xff] %v1920
        %1925 = vst [vmem:[#allocation3 + $0x150] sm:$0xff] %v1921
        %v1926 = vld [vmem:[#allocation11] sm:$0xff]
        %v1927 = vld [vmem:[#allocation11 + $0x8] sm:$0xff]
        %v1928 = vld [vmem:[#allocation11 + $0x10] sm:$0xff]
        %v1929 = vld [vmem:[#allocation11 + $0x18] sm:$0xff]
        %v1930 = vld [vmem:[#allocation11 + $0x20] sm:$0xff]
        %v1931 = vld [vmem:[#allocation11 + $0x28] sm:$0xff]
        %v1932 = vld [vmem:[#allocation11 + $0x30] sm:$0xff]
        %v1933 = vld [vmem:[#allocation11 + $0x38] sm:$0xff]
        %v1934 = vld [vmem:[#allocation11 + $0x40] sm:$0xff]
        %v1935 = vld [vmem:[#allocation11 + $0x48] sm:$0xff]
        %v1936 = vld [vmem:[#allocation11 + $0x50] sm:$0xff]
        %v1937 = vld [vmem:[#allocation11 + $0x58] sm:$0xff]
        %v1938 = vld [vmem:[#allocation3] sm:$0xff]
        %v1939 = vld [vmem:[#allocation3 + $0x8] sm:$0xff]
        %v1940 = vld [vmem:[#allocation3 + $0x10] sm:$0xff]
        %v1941 = vld [vmem:[#allocation3 + $0x18] sm:$0xff]
        %v1942 = vld [vmem:[#allocation3 + $0x20] sm:$0xff]
        %v1943 = vld [vmem:[#allocation3 + $0x28] sm:$0xff]
        %v1944 = vld [vmem:[#allocation3 + $0x30] sm:$0xff]
        %v1945 = vld [vmem:[#allocation3 + $0x38] sm:$0xff]
        %v1946 = vld [vmem:[#allocation3 + $0x40] sm:$0xff]
        %v1947 = vld [vmem:[#allocation3 + $0x48] sm:$0xff]
        %v1948 = vld [vmem:[#allocation3 + $0x50] sm:$0xff]
        %v1949 = vld [vmem:[#allocation3 + $0x58] sm:$0xff]
        %v1950 = vld [vmem:[#allocation3 + $0x60] sm:$0xff]
        %v1951 = vld [vmem:[#allocation3 + $0x68] sm:$0xff]
        %v1952 = vld [vmem:[#allocation3 + $0x70] sm:$0xff]
        %v1953 = vld [vmem:[#allocation3 + $0x78] sm:$0xff]
        %v1954 = vld [vmem:[#allocation3 + $0x80] sm:$0xff]
        %v1955 = vld [vmem:[#allocation3 + $0x88] sm:$0xff]
        %v1956 = vld [vmem:[#allocation3 + $0x90] sm:$0xff]
        %v1957 = vld [vmem:[#allocation3 + $0x98] sm:$0xff]
        %v1958 = vld [vmem:[#allocation3 + $0xa0] sm:$0xff]
        %v1959 = vld [vmem:[#allocation3 + $0xa8] sm:$0xff]
        %v1960 = vld [vmem:[#allocation3 + $0xb0] sm:$0xff]
        %v1961 = vld [vmem:[#allocation3 + $0xb8] sm:$0xff]
        %v1962 = vld [vmem:[#allocation3 + $0xc0] sm:$0xff]
        %v1963 = vld [vmem:[#allocation3 + $0xc8] sm:$0xff]
        %v1964 = vld [vmem:[#allocation3 + $0xd0] sm:$0xff]
        %v1965 = vld [vmem:[#allocation3 + $0xd8] sm:$0xff]
        %v1966 = vld [vmem:[#allocation3 + $0xe0] sm:$0xff]
        %v1967 = vld [vmem:[#allocation3 + $0xe8] sm:$0xff]
        %v1968 = vld [vmem:[#allocation3 + $0xf0] sm:$0xff]
        %v1969 = vld [vmem:[#allocation3 + $0xf8] sm:$0xff]
        %v1970 = vld [vmem:[#allocation3 + $0x100] sm:$0xff]
        %v1971 = vld [vmem:[#allocation3 + $0x108] sm:$0xff]
        %v1972 = vld [vmem:[#allocation3 + $0x110] sm:$0xff]
        %v1973 = vld [vmem:[#allocation3 + $0x118] sm:$0xff]
        %v1974 = vld [vmem:[#allocation3 + $0x120] sm:$0xff]
        %v1975 = vld [vmem:[#allocation3 + $0x128] sm:$0xff]
        %v1976 = vld [vmem:[#allocation3 + $0x130] sm:$0xff]
        %v1977 = vld [vmem:[#allocation3 + $0x138] sm:$0xff]
        %v1978 = vld [vmem:[#allocation3 + $0x140] sm:$0xff]
        %v1979 = vld [vmem:[#allocation3 + $0x148] sm:$0xff]
        %v1980 = vld [vmem:[#allocation3 + $0x150] sm:$0xff]
        %v1981 = vld [vmem:[%s6] sm:$0xff]
        %v1982 = vld [vmem:[%s6 + $0x8] sm:$0xff]
        %v1983 = vld [vmem:[%s6 + $0x10] sm:$0xff]
        %v1984 = vld [vmem:[%s6 + $0x18] sm:$0xff]
        %1986 = vset.pattern.permute.xlu0 0
        %1987 = vperm.xlu0 %1986, %v1981
        %v1988 = vpop.permute.xlu0 %1987
        %1991 = vset.pattern.permute.xlu0 0
        %1992 = vperm.xlu0 %1991, %v1982
        %v1993 = vpop.permute.xlu0 %1992
        %1996 = vset.pattern.permute.xlu0 0
        %1997 = vperm.xlu0 %1996, %v1983
        %v1998 = vpop.permute.xlu0 %1997
        %2001 = vset.pattern.permute.xlu0 0
        %2002 = vperm.xlu0 %2001, %v1984
        %v2003 = vpop.permute.xlu0 %2002
        %vm2005 = vcmask 719872
        %v2007 = vsel %vm2005, %v1928, 0
        %v2010 = vsel %vm2005, %v1931, 0
        %v2013 = vsel %vm2005, %v1934, 0
        %v2016 = vsel %vm2005, %v1937, 0
        %2018 = vmatprep.subr.mxu0 0.0
        %2019 = vmatpush1.msra.mxu0 %v1938
        %2020 = vmatprep.subr.mxu0 0.0
        %2021 = vmatpush1.msra.mxu0 %v1939
        %2022 = vmatprep.subr.mxu0 0.0
        %2023 = vmatpush1.msra.mxu0 %v1940
        %2024 = vmatprep.subr.mxu0 0.0
        %2025 = vmatpush1.msra.mxu0 %v1941
        %2026 = vmatprep.subr.mxu0 0.0
        %2027 = vmatpush1.msra.mxu0 %v1942
        %2028 = vmatprep.subr.mxu0 0.0
        %2029 = vmatpush1.msra.mxu0 %v1943
        %2030 = vmatprep.subr.mxu0 0.0
        %2031 = vmatpush1.msra.mxu0 %v1944
        %2032 = vmatprep.subr.mxu0 0.0
        %2033 = vmatpush1.msra.mxu0 %v1945
        %2034 = vmatprep.subr.mxu0 0.0
        %2035 = vmatpush1.msra.mxu0 %v1946
        %2036 = vmatprep.subr.mxu0 0.0
        %2037 = vmatpush1.msra.mxu0 %v1947
        %2038 = vmatprep.subr.mxu0 0.0
        %2039 = vmatpush1.msra.mxu0 %v1948
        %2040 = vmatprep.subr.mxu0 0.0
        %2041 = vmatpush1.msra.mxu0 %v1949
        %2042 = vmatprep.subr.mxu0 0.0
        %2043 = vmatpush1.msra.mxu0 %v1950
        %2044 = vmatprep.subr.mxu0 0.0
        %2045 = vmatpush1.msra.mxu0 %v1951
        %2046 = vmatprep.subr.mxu0 0.0
        %2047 = vmatpush1.msra.mxu0 %v1952
        %2048 = vmatprep.subr.mxu0 0.0
        %2049 = vmatpush1.msra.mxu0 %v1953
        %2050 = vmatprep.subr.mxu0 0.0
        %2051 = vmatpush1.msra.mxu0 %v1954
        %2052 = vmatprep.subr.mxu0 0.0
        %2053 = vmatpush1.msra.mxu0 %v1955
        %2054 = vmatprep.subr.mxu0 0.0
        %2055 = vmatpush1.msra.mxu0 %v1956
        %2056 = vmatprep.subr.mxu0 0.0
        %2057 = vmatpush1.msra.mxu0 %v1957
        %2058 = vmatprep.subr.mxu0 0.0
        %2059 = vmatpush1.msra.mxu0 %v1958
        %2060 = vmatprep.subr.mxu0 0.0
        %2061 = vmatpush1.msra.mxu0 %v1959
        %2062 = vmatprep.subr.mxu0 0.0
        %2063 = vmatpush1.msra.mxu0 %v1960
        %2064 = vmatprep.subr.mxu0 0.0
        %2065 = vmatpush1.msra.mxu0 %v1961
        %2066 = vmatprep.subr.mxu0 0.0
        %2067 = vmatpush1.msra.mxu0 %v1962
        %2068 = vmatprep.subr.mxu0 0.0
        %2069 = vmatpush1.msra.mxu0 %v1963
        %2070 = vmatprep.subr.mxu0 0.0
        %2071 = vmatpush1.msra.mxu0 %v1964
        %2072 = vmatprep.subr.mxu0 0.0
        %2073 = vmatpush1.msra.mxu0 %v1965
        %2074 = vmatprep.subr.mxu0 0.0
        %2075 = vmatpush1.msra.mxu0 %v1966
        %2076 = vmatprep.subr.mxu0 0.0
        %2077 = vmatpush1.msra.mxu0 %v1967
        %2078 = vmatprep.subr.mxu0 0.0
        %2079 = vmatpush1.msra.mxu0 %v1968
        %2080 = vmatprep.subr.mxu0 0.0
        %2081 = vmatpush1.msra.mxu0 %v1969
        %2082 = vmatprep.mubr.f32.mxu0 %v1927
        %2083 = vmatmul.mubr.f32.gmra.mrb[0].mxu0 %v1926
        %v2084 = vpop.f32.mrb[0].mxu0
        %v2085 = vadd.f32 %v1988, %v2084
        %v2086 = vpop.f32.mrb[0].mxu0
        %2087 = vmatprep.mubr.f32.mxu0 %v1930
        %2088 = vmatmul.mubr.f32.gmra.mrb[0].mxu0 %v1929
        %v2089 = vpop.f32.mrb[0].mxu0
        %v2090 = vadd.f32 %v1993, %v2089
        %v2091 = vpop.f32.mrb[0].mxu0
        %2092 = vmatprep.mubr.f32.mxu0 %v1933
        %2093 = vmatmul.mubr.f32.gmra.mrb[0].mxu0 %v1932
        %v2094 = vpop.f32.mrb[0].mxu0
        %v2095 = vadd.f32 %v1998, %v2094
        %v2096 = vpop.f32.mrb[0].mxu0
        %2097 = vmatprep.mubr.f32.mxu0 %v1936
        %2098 = vmatmul.mubr.f32.gmra.mrb[0].mxu0 %v1935
        %v2099 = vpop.f32.mrb[0].mxu0
        %v2100 = vadd.f32 %v2003, %v2099
        %v2101 = vpop.f32.mrb[0].mxu0
        %2102 = vdwg.mxu0
        %2103 = vmatprep.subr.mxu0 0.0
        %2104 = vmatpush1.msra.mxu0 %v1970
        %2105 = vmatprep.subr.mxu0 0.0
        %2106 = vmatpush1.msra.mxu0 %v1971
        %2107 = vmatprep.subr.mxu0 0.0
        %2108 = vmatpush1.msra.mxu0 %v1972
        %2109 = vmatprep.subr.mxu0 0.0
        %2110 = vmatpush1.msra.mxu0 %v1973
        %2111 = vmatprep.subr.mxu0 0.0
        %2112 = vmatpush1.msra.mxu0 %v1974
        %2113 = vmatprep.subr.mxu0 0.0
        %2114 = vmatpush1.msra.mxu0 %v1975
        %2115 = vmatprep.subr.mxu0 0.0
        %2116 = vmatpush1.msra.mxu0 %v1976
        %2117 = vmatprep.subr.mxu0 0.0
        %2118 = vmatpush1.msra.mxu0 %v1977
        %2119 = vmatprep.subr.mxu0 0.0
        %2120 = vmatpush1.msra.mxu0 %v1978
        %2121 = vmatprep.subr.mxu0 0.0
        %2122 = vmatpush1.msra.mxu0 %v1979
        %2123 = vmatprep.subr.mxu0 0.0
        %2124 = vmatpush1.msra.mxu0 %v1980
        %2125 = vmatprep.subr.mxu0 0.0
        %2126 = vmatpush1.msra.mxu0 0.0
        %2127 = vmatprep.subr.mxu0 0.0
        %2128 = vmatpush1.msra.mxu0 0.0
        %2129 = vmatprep.subr.mxu0 0.0
        %2130 = vmatpush1.msra.mxu0 0.0
        %2131 = vmatprep.subr.mxu0 0.0
        %2132 = vmatpush1.msra.mxu0 0.0
        %2133 = vmatprep.subr.mxu0 0.0
        %2134 = vmatpush1.msra.mxu0 0.0
        %2135 = vmatprep.subr.mxu0 0.0
        %2136 = vmatpush1.msra.mxu0 0.0
        %2137 = vmatprep.subr.mxu0 0.0
        %2138 = vmatpush1.msra.mxu0 0.0
        %2139 = vmatprep.subr.mxu0 0.0
        %2140 = vmatpush1.msra.mxu0 0.0
        %2141 = vmatprep.subr.mxu0 0.0
        %2142 = vmatpush1.msra.mxu0 0.0
        %2143 = vmatprep.subr.mxu0 0.0
        %2144 = vmatpush1.msra.mxu0 0.0
        %2145 = vmatprep.subr.mxu0 0.0
        %2146 = vmatpush1.msra.mxu0 0.0
        %2147 = vmatprep.subr.mxu0 0.0
        %2148 = vmatpush1.msra.mxu0 0.0
        %2149 = vmatprep.subr.mxu0 0.0
        %2150 = vmatpush1.msra.mxu0 0.0
        %2151 = vmatprep.subr.mxu0 0.0
        %2152 = vmatpush1.msra.mxu0 0.0
        %2153 = vmatprep.subr.mxu0 0.0
        %2154 = vmatpush1.msra.mxu0 0.0
        %2155 = vmatprep.subr.mxu0 0.0
        %2156 = vmatpush1.msra.mxu0 0.0
        %2157 = vmatprep.subr.mxu0 0.0
        %2158 = vmatpush1.msra.mxu0 0.0
        %2159 = vmatprep.subr.mxu0 0.0
        %2160 = vmatpush1.msra.mxu0 0.0
        %2161 = vmatprep.subr.mxu0 0.0
        %2162 = vmatpush1.msra.mxu0 0.0
        %2163 = vmatprep.subr.mxu0 0.0
        %2164 = vmatpush1.msra.mxu0 0.0
        %2165 = vmatprep.subr.mxu0 0.0
        %2166 = vmatpush1.msra.mxu0 0.0
        %2167 = vmatprep.mubr.f32.mxu0 0.0
        %2168 = vmatmul.mubr.f32.gmra.mrb[0].mxu0 %v2007
        %v2169 = vpop.f32.mrb[0].mxu0
        %v2170 = vadd.f32 %v2085, %v2169
        %v2171 = vpop.f32.mrb[0].mxu0
        %2172 = vmatprep.mubr.f32.mxu0 0.0
        %2173 = vmatmul.mubr.f32.gmra.mrb[0].mxu0 %v2010
        %v2174 = vpop.f32.mrb[0].mxu0
        %v2175 = vadd.f32 %v2090, %v2174
        %v2176 = vpop.f32.mrb[0].mxu0
        %2177 = vmatprep.mubr.f32.mxu0 0.0
        %2178 = vmatmul.mubr.f32.gmra.mrb[0].mxu0 %v2013
        %v2179 = vpop.f32.mrb[0].mxu0
        %v2180 = vadd.f32 %v2095, %v2179
        %v2181 = vpop.f32.mrb[0].mxu0
        %2182 = vmatprep.mubr.f32.mxu0 0.0
        %2183 = vmatmul.mubr.f32.gmra.mrb[0].mxu0 %v2016
        %v2184 = vpop.f32.mrb[0].mxu0
        %v2185 = vadd.f32 %v2100, %v2184
        %v2186 = vpop.f32.mrb[0].mxu0
        %2187 = vdwg.mxu0
        %v2188 = vmax.f32 %v2170, 0.0
        %v2189 = vmax.f32 %v2175, 0.0
        %v2190 = vmax.f32 %v2180, 0.0
        %v2191 = vmax.f32 %v2185, 0.0
        %v2192 = vld [vmem:[#allocation13] sm:$0xff]
        %v2194 = vsel %vm1326, %v2192, 0
        %2196 = vmatprep.subr.mxu0 0.0
        %2197 = vmatpush1.msra.mxu0 %v2188
        %2198 = vmatprep.subr.mxu0 0.0
        %2199 = vmatpush1.msra.mxu0 %v2189
        %2200 = vmatprep.subr.mxu0 0.0
        %2201 = vmatpush1.msra.mxu0 %v2190
        %2202 = vmatprep.subr.mxu0 0.0
        %2203 = vmatpush1.msra.mxu0 %v2191
        %2204 = vmatprep.subr.mxu0 0.0
        %2205 = vmatpush1.msra.mxu0 0.0
        %2206 = vmatprep.subr.mxu0 0.0
        %2207 = vmatpush1.msra.mxu0 0.0
        %2208 = vmatprep.subr.mxu0 0.0
        %2209 = vmatpush1.msra.mxu0 0.0
        %2210 = vmatprep.subr.mxu0 0.0
        %2211 = vmatpush1.msra.mxu0 0.0
        %2212 = vmatprep.subr.mxu0 0.0
        %2213 = vmatpush1.msra.mxu0 0.0
        %2214 = vmatprep.subr.mxu0 0.0
        %2215 = vmatpush1.msra.mxu0 0.0
        %2216 = vmatprep.subr.mxu0 0.0
        %2217 = vmatpush1.msra.mxu0 0.0
        %2218 = vmatprep.subr.mxu0 0.0
        %2219 = vmatpush1.msra.mxu0 0.0
        %2220 = vmatprep.subr.mxu0 0.0
        %2221 = vmatpush1.msra.mxu0 0.0
        %2222 = vmatprep.subr.mxu0 0.0
        %2223 = vmatpush1.msra.mxu0 0.0
        %2224 = vmatprep.subr.mxu0 0.0
        %2225 = vmatpush1.msra.mxu0 0.0
        %2226 = vmatprep.subr.mxu0 0.0
        %2227 = vmatpush1.msra.mxu0 0.0
        %2228 = vmatprep.subr.mxu0 0.0
        %2229 = vmatpush1.msra.mxu0 0.0
        %2230 = vmatprep.subr.mxu0 0.0
        %2231 = vmatpush1.msra.mxu0 0.0
        %2232 = vmatprep.subr.mxu0 0.0
        %2233 = vmatpush1.msra.mxu0 0.0
        %2234 = vmatprep.subr.mxu0 0.0
        %2235 = vmatpush1.msra.mxu0 0.0
        %2236 = vmatprep.subr.mxu0 0.0
        %2237 = vmatpush1.msra.mxu0 0.0
        %2238 = vmatprep.subr.mxu0 0.0
        %2239 = vmatpush1.msra.mxu0 0.0
        %2240 = vmatprep.subr.mxu0 0.0
        %2241 = vmatpush1.msra.mxu0 0.0
        %2242 = vmatprep.subr.mxu0 0.0
        %2243 = vmatpush1.msra.mxu0 0.0
        %2244 = vmatprep.subr.mxu0 0.0
        %2245 = vmatpush1.msra.mxu0 0.0
        %2246 = vmatprep.subr.mxu0 0.0
        %2247 = vmatpush1.msra.mxu0 0.0
        %2248 = vmatprep.subr.mxu0 0.0
        %2249 = vmatpush1.msra.mxu0 0.0
        %2250 = vmatprep.subr.mxu0 0.0
        %2251 = vmatpush1.msra.mxu0 0.0
        %2252 = vmatprep.subr.mxu0 0.0
        %2253 = vmatpush1.msra.mxu0 0.0
        %2254 = vmatprep.subr.mxu0 0.0
        %2255 = vmatpush1.msra.mxu0 0.0
        %2256 = vmatprep.subr.mxu0 0.0
        %2257 = vmatpush1.msra.mxu0 0.0
        %2258 = vmatprep.subr.mxu0 0.0
        %2259 = vmatpush1.msra.mxu0 0.0
        %2260 = vmatprep.mubr.f32.mxu0 0.0
        %2261 = vmatmul.mubr.f32.gmra.mrb[0].mxu0 %v2194
        %v2262 = vpop.f32.mrb[0].mxu0
        %v2263 = vadd.f32 0.0, %v2262
        %v2264 = vpop.f32.mrb[0].mxu0
        %2265 = vdwg.mxu0
        %2267 = vrot.lane.b32.xlu0 %v2263, 19
        %v2268 = vpop.permute.xlu0 %2267
        %2270 = vst.msk [vmem:[#allocation2] sm:$0xff] %vm575, %v2268
        %2271 = vst.msk [vmem:[#allocation2 + $0x8] sm:$0xff] %vm481, %v2268
        %v2272 = vld [vmem:[#allocation2] sm:$0xff]
        %2273 = vst [vmem:[#allocation3] sm:$0xff] %v2272
        %v2274 = vld [vmem:[#allocation2] sm:$0xff]
        %v2275 = vld [vmem:[#allocation2 + $0x8] sm:$0xff]
        %2278 = vrot.lane.b32.xlu0 %v2274, 127
        %v2279 = vpop.permute.xlu0 %2278
        %2280 = vrot.lane.b32.xlu0 %v2275, 127
        %v2281 = vpop.permute.xlu0 %2280
        %v2282 = vsel %vm588, %v2279, %v2281
        %2284 = vst [vmem:[#allocation3 + $0x8] sm:$0xff] %v2282
        %v2285 = vld [vmem:[#allocation2] sm:$0xff]
        %v2286 = vld [vmem:[#allocation2 + $0x8] sm:$0xff]
        %2289 = vrot.lane.b32.xlu0 %v2285, 126
        %v2290 = vpop.permute.xlu0 %2289
        %2291 = vrot.lane.b32.xlu0 %v2286, 126
        %v2292 = vpop.permute.xlu0 %2291
        %v2293 = vsel %vm600, %v2290, %v2292
        %2295 = vst [vmem:[#allocation3 + $0x10] sm:$0xff] %v2293
        %v2296 = vld [vmem:[#allocation2] sm:$0xff]
        %v2297 = vld [vmem:[#allocation2 + $0x8] sm:$0xff]
        %2300 = vrot.lane.b32.xlu0 %v2296, 125
        %v2301 = vpop.permute.xlu0 %2300
        %2302 = vrot.lane.b32.xlu0 %v2297, 125
        %v2303 = vpop.permute.xlu0 %2302
        %v2304 = vsel %vm612, %v2301, %v2303
        %2306 = vst [vmem:[#allocation3 + $0x18] sm:$0xff] %v2304
        %v2307 = vld [vmem:[#allocation2] sm:$0xff]
        %v2308 = vld [vmem:[#allocation2 + $0x8] sm:$0xff]
        %2311 = vrot.lane.b32.xlu0 %v2307, 124
        %v2312 = vpop.permute.xlu0 %2311
        %2313 = vrot.lane.b32.xlu0 %v2308, 124
        %v2314 = vpop.permute.xlu0 %2313
        %v2315 = vsel %vm624, %v2312, %v2314
        %2317 = vst [vmem:[#allocation3 + $0x20] sm:$0xff] %v2315
        %v2318 = vld [vmem:[#allocation2] sm:$0xff]
        %v2319 = vld [vmem:[#allocation2 + $0x8] sm:$0xff]
        %2322 = vrot.lane.b32.xlu0 %v2318, 123
        %v2323 = vpop.permute.xlu0 %2322
        %2324 = vrot.lane.b32.xlu0 %v2319, 123
        %v2325 = vpop.permute.xlu0 %2324
        %v2326 = vsel %vm636, %v2323, %v2325
        %2328 = vst [vmem:[#allocation3 + $0x28] sm:$0xff] %v2326
        %v2329 = vld [vmem:[#allocation2] sm:$0xff]
        %v2330 = vld [vmem:[#allocation2 + $0x8] sm:$0xff]
        %2333 = vrot.lane.b32.xlu0 %v2329, 122
        %v2334 = vpop.permute.xlu0 %2333
        %2335 = vrot.lane.b32.xlu0 %v2330, 122
        %v2336 = vpop.permute.xlu0 %2335
        %v2337 = vsel %vm648, %v2334, %v2336
        %2339 = vst [vmem:[#allocation3 + $0x30] sm:$0xff] %v2337
        %v2340 = vld [vmem:[#allocation2] sm:$0xff]
        %v2341 = vld [vmem:[#allocation2 + $0x8] sm:$0xff]
        %2344 = vrot.lane.b32.xlu0 %v2340, 121
        %v2345 = vpop.permute.xlu0 %2344
        %2346 = vrot.lane.b32.xlu0 %v2341, 121
        %v2347 = vpop.permute.xlu0 %2346
        %v2348 = vsel %vm660, %v2345, %v2347
        %2350 = vst [vmem:[#allocation3 + $0x38] sm:$0xff] %v2348
        %v2351 = vld [vmem:[#allocation2] sm:$0xff]
        %v2352 = vld [vmem:[#allocation2 + $0x8] sm:$0xff]
        %2355 = vrot.lane.b32.xlu0 %v2351, 120
        %v2356 = vpop.permute.xlu0 %2355
        %2357 = vrot.lane.b32.xlu0 %v2352, 120
        %v2358 = vpop.permute.xlu0 %2357
        %v2359 = vsel %vm672, %v2356, %v2358
        %2361 = vst [vmem:[#allocation3 + $0x40] sm:$0xff] %v2359
        %v2362 = vld [vmem:[#allocation2] sm:$0xff]
        %v2363 = vld [vmem:[#allocation2 + $0x8] sm:$0xff]
        %2366 = vrot.lane.b32.xlu0 %v2362, 119
        %v2367 = vpop.permute.xlu0 %2366
        %2368 = vrot.lane.b32.xlu0 %v2363, 119
        %v2369 = vpop.permute.xlu0 %2368
        %v2370 = vsel %vm684, %v2367, %v2369
        %2372 = vst [vmem:[#allocation3 + $0x48] sm:$0xff] %v2370
        %v2373 = vld [vmem:[#allocation2] sm:$0xff]
        %v2374 = vld [vmem:[#allocation2 + $0x8] sm:$0xff]
        %2377 = vrot.lane.b32.xlu0 %v2373, 118
        %v2378 = vpop.permute.xlu0 %2377
        %2379 = vrot.lane.b32.xlu0 %v2374, 118
        %v2380 = vpop.permute.xlu0 %2379
        %v2381 = vsel %vm696, %v2378, %v2380
        %2383 = vst [vmem:[#allocation3 + $0x50] sm:$0xff] %v2381
        %v2384 = vld [vmem:[#allocation2] sm:$0xff]
        %v2385 = vld [vmem:[#allocation2 + $0x8] sm:$0xff]
        %2388 = vrot.lane.b32.xlu0 %v2384, 117
        %v2389 = vpop.permute.xlu0 %2388
        %2390 = vrot.lane.b32.xlu0 %v2385, 117
        %v2391 = vpop.permute.xlu0 %2390
        %v2392 = vsel %vm708, %v2389, %v2391
        %2394 = vst [vmem:[#allocation3 + $0x58] sm:$0xff] %v2392
        %v2395 = vld [vmem:[#allocation2] sm:$0xff]
        %v2396 = vld [vmem:[#allocation2 + $0x8] sm:$0xff]
        %2399 = vrot.lane.b32.xlu0 %v2395, 116
        %v2400 = vpop.permute.xlu0 %2399
        %2401 = vrot.lane.b32.xlu0 %v2396, 116
        %v2402 = vpop.permute.xlu0 %2401
        %v2403 = vsel %vm720, %v2400, %v2402
        %2405 = vst [vmem:[#allocation3 + $0x60] sm:$0xff] %v2403
        %v2406 = vld [vmem:[#allocation2] sm:$0xff]
        %v2407 = vld [vmem:[#allocation2 + $0x8] sm:$0xff]
        %2410 = vrot.lane.b32.xlu0 %v2406, 115
        %v2411 = vpop.permute.xlu0 %2410
        %2412 = vrot.lane.b32.xlu0 %v2407, 115
        %v2413 = vpop.permute.xlu0 %2412
        %v2414 = vsel %vm732, %v2411, %v2413
        %2416 = vst [vmem:[#allocation3 + $0x68] sm:$0xff] %v2414
        %v2417 = vld [vmem:[#allocation2] sm:$0xff]
        %v2418 = vld [vmem:[#allocation2 + $0x8] sm:$0xff]
        %2421 = vrot.lane.b32.xlu0 %v2417, 114
        %v2422 = vpop.permute.xlu0 %2421
        %2423 = vrot.lane.b32.xlu0 %v2418, 114
        %v2424 = vpop.permute.xlu0 %2423
        %v2425 = vsel %vm744, %v2422, %v2424
        %2427 = vst [vmem:[#allocation3 + $0x70] sm:$0xff] %v2425
        %v2428 = vld [vmem:[#allocation2] sm:$0xff]
        %v2429 = vld [vmem:[#allocation2 + $0x8] sm:$0xff]
        %2432 = vrot.lane.b32.xlu0 %v2428, 113
        %v2433 = vpop.permute.xlu0 %2432
        %2434 = vrot.lane.b32.xlu0 %v2429, 113
        %v2435 = vpop.permute.xlu0 %2434
        %v2436 = vsel %vm756, %v2433, %v2435
        %2438 = vst [vmem:[#allocation3 + $0x78] sm:$0xff] %v2436
        %v2439 = vld [vmem:[#allocation2] sm:$0xff]
        %v2440 = vld [vmem:[#allocation2 + $0x8] sm:$0xff]
        %2443 = vrot.lane.b32.xlu0 %v2439, 112
        %v2444 = vpop.permute.xlu0 %2443
        %2445 = vrot.lane.b32.xlu0 %v2440, 112
        %v2446 = vpop.permute.xlu0 %2445
        %v2447 = vsel %vm768, %v2444, %v2446
        %2449 = vst [vmem:[#allocation3 + $0x80] sm:$0xff] %v2447
        %v2450 = vld [vmem:[#allocation2] sm:$0xff]
        %v2451 = vld [vmem:[#allocation2 + $0x8] sm:$0xff]
        %2454 = vrot.lane.b32.xlu0 %v2450, 111
        %v2455 = vpop.permute.xlu0 %2454
        %2456 = vrot.lane.b32.xlu0 %v2451, 111
        %v2457 = vpop.permute.xlu0 %2456
        %v2458 = vsel %vm780, %v2455, %v2457
        %2460 = vst [vmem:[#allocation3 + $0x88] sm:$0xff] %v2458
        %v2461 = vld [vmem:[#allocation2] sm:$0xff]
        %v2462 = vld [vmem:[#allocation2 + $0x8] sm:$0xff]
        %2465 = vrot.lane.b32.xlu0 %v2461, 110
        %v2466 = vpop.permute.xlu0 %2465
        %2467 = vrot.lane.b32.xlu0 %v2462, 110
        %v2468 = vpop.permute.xlu0 %2467
        %v2469 = vsel %vm792, %v2466, %v2468
        %2471 = vst [vmem:[#allocation3 + $0x90] sm:$0xff] %v2469
        %v2472 = vld [vmem:[#allocation2] sm:$0xff]
        %v2473 = vld [vmem:[#allocation2 + $0x8] sm:$0xff]
        %2476 = vrot.lane.b32.xlu0 %v2472, 109
        %v2477 = vpop.permute.xlu0 %2476
        %2478 = vrot.lane.b32.xlu0 %v2473, 109
        %v2479 = vpop.permute.xlu0 %2478
        %v2480 = vsel %vm804, %v2477, %v2479
        %2482 = vst [vmem:[#allocation3 + $0x98] sm:$0xff] %v2480
        %v2483 = vld [vmem:[#allocation2] sm:$0xff]
        %v2484 = vld [vmem:[#allocation2 + $0x8] sm:$0xff]
        %2487 = vrot.lane.b32.xlu0 %v2483, 108
        %v2488 = vpop.permute.xlu0 %2487
        %2489 = vrot.lane.b32.xlu0 %v2484, 108
        %v2490 = vpop.permute.xlu0 %2489
        %v2491 = vsel %vm816, %v2488, %v2490
        %2493 = vst [vmem:[#allocation3 + $0xa0] sm:$0xff] %v2491
        %v2494 = vld [vmem:[#allocation2] sm:$0xff]
        %v2495 = vld [vmem:[#allocation2 + $0x8] sm:$0xff]
        %2498 = vrot.lane.b32.xlu0 %v2494, 107
        %v2499 = vpop.permute.xlu0 %2498
        %2500 = vrot.lane.b32.xlu0 %v2495, 107
        %v2501 = vpop.permute.xlu0 %2500
        %v2502 = vsel %vm828, %v2499, %v2501
        %2504 = vst [vmem:[#allocation3 + $0xa8] sm:$0xff] %v2502
        %v2505 = vld [vmem:[#allocation2] sm:$0xff]
        %v2506 = vld [vmem:[#allocation2 + $0x8] sm:$0xff]
        %2509 = vrot.lane.b32.xlu0 %v2505, 106
        %v2510 = vpop.permute.xlu0 %2509
        %2511 = vrot.lane.b32.xlu0 %v2506, 106
        %v2512 = vpop.permute.xlu0 %2511
        %v2513 = vsel %vm840, %v2510, %v2512
        %2515 = vst [vmem:[#allocation3 + $0xb0] sm:$0xff] %v2513
        %v2516 = vld [vmem:[#allocation2] sm:$0xff]
        %v2517 = vld [vmem:[#allocation2 + $0x8] sm:$0xff]
        %2520 = vrot.lane.b32.xlu0 %v2516, 105
        %v2521 = vpop.permute.xlu0 %2520
        %2522 = vrot.lane.b32.xlu0 %v2517, 105
        %v2523 = vpop.permute.xlu0 %2522
        %v2524 = vsel %vm852, %v2521, %v2523
        %2526 = vst [vmem:[#allocation3 + $0xb8] sm:$0xff] %v2524
        %v2527 = vld [vmem:[#allocation2] sm:$0xff]
        %v2528 = vld [vmem:[#allocation2 + $0x8] sm:$0xff]
        %2531 = vrot.lane.b32.xlu0 %v2527, 104
        %v2532 = vpop.permute.xlu0 %2531
        %2533 = vrot.lane.b32.xlu0 %v2528, 104
        %v2534 = vpop.permute.xlu0 %2533
        %v2535 = vsel %vm864, %v2532, %v2534
        %2537 = vst [vmem:[#allocation3 + $0xc0] sm:$0xff] %v2535
        %v2538 = vld [vmem:[#allocation2] sm:$0xff]
        %v2539 = vld [vmem:[#allocation2 + $0x8] sm:$0xff]
        %2542 = vrot.lane.b32.xlu0 %v2538, 103
        %v2543 = vpop.permute.xlu0 %2542
        %2544 = vrot.lane.b32.xlu0 %v2539, 103
        %v2545 = vpop.permute.xlu0 %2544
        %v2546 = vsel %vm876, %v2543, %v2545
        %2548 = vst [vmem:[#allocation3 + $0xc8] sm:$0xff] %v2546
        %v2549 = vld [vmem:[#allocation2] sm:$0xff]
        %v2550 = vld [vmem:[#allocation2 + $0x8] sm:$0xff]
        %2553 = vrot.lane.b32.xlu0 %v2549, 102
        %v2554 = vpop.permute.xlu0 %2553
        %2555 = vrot.lane.b32.xlu0 %v2550, 102
        %v2556 = vpop.permute.xlu0 %2555
        %v2557 = vsel %vm888, %v2554, %v2556
        %2559 = vst [vmem:[#allocation3 + $0xd0] sm:$0xff] %v2557
        %v2560 = vld [vmem:[#allocation2] sm:$0xff]
        %v2561 = vld [vmem:[#allocation2 + $0x8] sm:$0xff]
        %2564 = vrot.lane.b32.xlu0 %v2560, 101
        %v2565 = vpop.permute.xlu0 %2564
        %2566 = vrot.lane.b32.xlu0 %v2561, 101
        %v2567 = vpop.permute.xlu0 %2566
        %v2568 = vsel %vm900, %v2565, %v2567
        %2570 = vst [vmem:[#allocation3 + $0xd8] sm:$0xff] %v2568
        %v2571 = vld [vmem:[#allocation2] sm:$0xff]
        %v2572 = vld [vmem:[#allocation2 + $0x8] sm:$0xff]
        %2575 = vrot.lane.b32.xlu0 %v2571, 100
        %v2576 = vpop.permute.xlu0 %2575
        %2577 = vrot.lane.b32.xlu0 %v2572, 100
        %v2578 = vpop.permute.xlu0 %2577
        %v2579 = vsel %vm912, %v2576, %v2578
        %2581 = vst [vmem:[#allocation3 + $0xe0] sm:$0xff] %v2579
        %v2582 = vld [vmem:[#allocation2] sm:$0xff]
        %v2583 = vld [vmem:[#allocation2 + $0x8] sm:$0xff]
        %2586 = vrot.lane.b32.xlu0 %v2582, 99
        %v2587 = vpop.permute.xlu0 %2586
        %2588 = vrot.lane.b32.xlu0 %v2583, 99
        %v2589 = vpop.permute.xlu0 %2588
        %v2590 = vsel %vm924, %v2587, %v2589
        %2592 = vst [vmem:[#allocation3 + $0xe8] sm:$0xff] %v2590
        %v2593 = vld [vmem:[#allocation2] sm:$0xff]
        %v2594 = vld [vmem:[#allocation2 + $0x8] sm:$0xff]
        %2597 = vrot.lane.b32.xlu0 %v2593, 98
        %v2598 = vpop.permute.xlu0 %2597
        %2599 = vrot.lane.b32.xlu0 %v2594, 98
        %v2600 = vpop.permute.xlu0 %2599
        %v2601 = vsel %vm936, %v2598, %v2600
        %2603 = vst [vmem:[#allocation3 + $0xf0] sm:$0xff] %v2601
        %v2604 = vld [vmem:[#allocation2] sm:$0xff]
        %v2605 = vld [vmem:[#allocation2 + $0x8] sm:$0xff]
        %2608 = vrot.lane.b32.xlu0 %v2604, 97
        %v2609 = vpop.permute.xlu0 %2608
        %2610 = vrot.lane.b32.xlu0 %v2605, 97
        %v2611 = vpop.permute.xlu0 %2610
        %v2612 = vsel %vm948, %v2609, %v2611
        %2614 = vst [vmem:[#allocation3 + $0xf8] sm:$0xff] %v2612
        %v2615 = vld [vmem:[#allocation2] sm:$0xff]
        %v2616 = vld [vmem:[#allocation2 + $0x8] sm:$0xff]
        %2619 = vrot.lane.b32.xlu0 %v2615, 96
        %v2620 = vpop.permute.xlu0 %2619
        %2621 = vrot.lane.b32.xlu0 %v2616, 96
        %v2622 = vpop.permute.xlu0 %2621
        %v2623 = vsel %vm960, %v2620, %v2622
        %2625 = vst [vmem:[#allocation3 + $0x100] sm:$0xff] %v2623
        %v2626 = vld [vmem:[#allocation2] sm:$0xff]
        %v2627 = vld [vmem:[#allocation2 + $0x8] sm:$0xff]
        %2630 = vrot.lane.b32.xlu0 %v2626, 95
        %v2631 = vpop.permute.xlu0 %2630
        %2632 = vrot.lane.b32.xlu0 %v2627, 95
        %v2633 = vpop.permute.xlu0 %2632
        %v2634 = vsel %vm972, %v2631, %v2633
        %2636 = vst [vmem:[#allocation3 + $0x108] sm:$0xff] %v2634
        %v2637 = vld [vmem:[#allocation2] sm:$0xff]
        %v2638 = vld [vmem:[#allocation2 + $0x8] sm:$0xff]
        %2641 = vrot.lane.b32.xlu0 %v2637, 94
        %v2642 = vpop.permute.xlu0 %2641
        %2643 = vrot.lane.b32.xlu0 %v2638, 94
        %v2644 = vpop.permute.xlu0 %2643
        %v2645 = vsel %vm984, %v2642, %v2644
        %2647 = vst [vmem:[#allocation3 + $0x110] sm:$0xff] %v2645
        %v2648 = vld [vmem:[#allocation2] sm:$0xff]
        %v2649 = vld [vmem:[#allocation2 + $0x8] sm:$0xff]
        %2652 = vrot.lane.b32.xlu0 %v2648, 93
        %v2653 = vpop.permute.xlu0 %2652
        %2654 = vrot.lane.b32.xlu0 %v2649, 93
        %v2655 = vpop.permute.xlu0 %2654
        %v2656 = vsel %vm996, %v2653, %v2655
        %2658 = vst [vmem:[#allocation3 + $0x118] sm:$0xff] %v2656
        %v2659 = vld [vmem:[#allocation2] sm:$0xff]
        %v2660 = vld [vmem:[#allocation2 + $0x8] sm:$0xff]
        %2663 = vrot.lane.b32.xlu0 %v2659, 92
        %v2664 = vpop.permute.xlu0 %2663
        %2665 = vrot.lane.b32.xlu0 %v2660, 92
        %v2666 = vpop.permute.xlu0 %2665
        %v2667 = vsel %vm1008, %v2664, %v2666
        %2669 = vst [vmem:[#allocation3 + $0x120] sm:$0xff] %v2667
        %v2670 = vld [vmem:[#allocation2] sm:$0xff]
        %v2671 = vld [vmem:[#allocation2 + $0x8] sm:$0xff]
        %2674 = vrot.lane.b32.xlu0 %v2670, 91
        %v2675 = vpop.permute.xlu0 %2674
        %2676 = vrot.lane.b32.xlu0 %v2671, 91
        %v2677 = vpop.permute.xlu0 %2676
        %v2678 = vsel %vm1020, %v2675, %v2677
        %2680 = vst [vmem:[#allocation3 + $0x128] sm:$0xff] %v2678
        %v2681 = vld [vmem:[#allocation2] sm:$0xff]
        %v2682 = vld [vmem:[#allocation2 + $0x8] sm:$0xff]
        %2685 = vrot.lane.b32.xlu0 %v2681, 90
        %v2686 = vpop.permute.xlu0 %2685
        %2687 = vrot.lane.b32.xlu0 %v2682, 90
        %v2688 = vpop.permute.xlu0 %2687
        %v2689 = vsel %vm1032, %v2686, %v2688
        %2691 = vst [vmem:[#allocation3 + $0x130] sm:$0xff] %v2689
        %2696 = vrot.lane.b32.xlu0 %v2188, 1
        %v2697 = vpop.permute.xlu0 %2696
        %2698 = vrot.lane.b32.xlu0 %v2189, 1
        %v2699 = vpop.permute.xlu0 %2698
        %2700 = vrot.lane.b32.xlu0 %v2190, 1
        %v2701 = vpop.permute.xlu0 %2700
        %2702 = vrot.lane.b32.xlu0 %v2191, 1
        %v2703 = vpop.permute.xlu0 %2702
        %2708 = vst.msk [vmem:[#allocation4] sm:$0xff] %vm1040, %v2697
        %2709 = vst.msk [vmem:[#allocation4 + $0x8] sm:$0xff] %vm485, %v2697
        %2710 = vst.msk [vmem:[#allocation4 + $0x10] sm:$0xff] %vm1040, %v2699
        %2711 = vst.msk [vmem:[#allocation4 + $0x18] sm:$0xff] %vm485, %v2699
        %2712 = vst.msk [vmem:[#allocation4 + $0x20] sm:$0xff] %vm1040, %v2701
        %2713 = vst.msk [vmem:[#allocation4 + $0x28] sm:$0xff] %vm485, %v2701
        %2714 = vst.msk [vmem:[#allocation4 + $0x30] sm:$0xff] %vm1040, %v2703
        %2715 = vst.msk [vmem:[#allocation4 + $0x38] sm:$0xff] %vm485, %v2703
        %v2716 = vld [vmem:[#allocation4] sm:$0xff]
        %v2717 = vld [vmem:[#allocation4 + $0x10] sm:$0xff]
        %v2718 = vld [vmem:[#allocation4 + $0x20] sm:$0xff]
        %v2719 = vld [vmem:[#allocation4 + $0x30] sm:$0xff]
        %v2720 = vld [vmem:[#allocation4 + $0x8] sm:$0xff]
        %v2721 = vld [vmem:[#allocation4 + $0x18] sm:$0xff]
        %v2722 = vld [vmem:[#allocation4 + $0x28] sm:$0xff]
        %v2723 = vld [vmem:[#allocation4 + $0x38] sm:$0xff]
        %2732 = vrot.lane.b32.xlu0 %v2716, 127
        %v2733 = vpop.permute.xlu0 %2732
        %2734 = vrot.lane.b32.xlu0 %v2720, 127
        %v2735 = vpop.permute.xlu0 %2734
        %2736 = vrot.lane.b32.xlu0 %v2717, 127
        %v2737 = vpop.permute.xlu0 %2736
        %2738 = vrot.lane.b32.xlu0 %v2721, 127
        %v2739 = vpop.permute.xlu0 %2738
        %2740 = vrot.lane.b32.xlu0 %v2718, 127
        %v2741 = vpop.permute.xlu0 %2740
        %2742 = vrot.lane.b32.xlu0 %v2722, 127
        %v2743 = vpop.permute.xlu0 %2742
        %2744 = vrot.lane.b32.xlu0 %v2719, 127
        %v2745 = vpop.permute.xlu0 %2744
        %2746 = vrot.lane.b32.xlu0 %v2723, 127
        %v2747 = vpop.permute.xlu0 %2746
        %v2748 = vsel %vm588, %v2733, %v2735
        %v2749 = vsel %vm588, %v2737, %v2739
        %v2750 = vsel %vm588, %v2741, %v2743
        %v2751 = vsel %vm588, %v2745, %v2747
        %v2756 = vmax.f32 %v2716, %v2748
        %v2757 = vmax.f32 %v2717, %v2749
        %v2758 = vmax.f32 %v2718, %v2750
        %v2759 = vmax.f32 %v2719, %v2751
        %2760 = vrot.lane.b32.xlu0 %v2716, 126
        %v2761 = vpop.permute.xlu0 %2760
        %2762 = vrot.lane.b32.xlu0 %v2720, 126
        %v2763 = vpop.permute.xlu0 %2762
        %2764 = vrot.lane.b32.xlu0 %v2717, 126
        %v2765 = vpop.permute.xlu0 %2764
        %2766 = vrot.lane.b32.xlu0 %v2721, 126
        %v2767 = vpop.permute.xlu0 %2766
        %2768 = vrot.lane.b32.xlu0 %v2718, 126
        %v2769 = vpop.permute.xlu0 %2768
        %2770 = vrot.lane.b32.xlu0 %v2722, 126
        %v2771 = vpop.permute.xlu0 %2770
        %2772 = vrot.lane.b32.xlu0 %v2719, 126
        %v2773 = vpop.permute.xlu0 %2772
        %2774 = vrot.lane.b32.xlu0 %v2723, 126
        %v2775 = vpop.permute.xlu0 %2774
        %v2776 = vsel %vm600, %v2761, %v2763
        %v2777 = vsel %vm600, %v2765, %v2767
        %v2778 = vsel %vm600, %v2769, %v2771
        %v2779 = vsel %vm600, %v2773, %v2775
        %v2784 = vmax.f32 %v2756, %v2776
        %v2785 = vmax.f32 %v2757, %v2777
        %v2786 = vmax.f32 %v2758, %v2778
        %v2787 = vmax.f32 %v2759, %v2779
        %2788 = vst [vmem:[#allocation3 + $0x138] sm:$0xff] %v2784
        %2789 = vst [vmem:[#allocation3 + $0x140] sm:$0xff] %v2785
        %2790 = vst [vmem:[#allocation3 + $0x148] sm:$0xff] %v2786
        %2791 = vst [vmem:[#allocation3 + $0x150] sm:$0xff] %v2787
        %v2792 = vld [vmem:[%s8] sm:$0xff]
        %v2793 = vld [vmem:[%s8 + $0x8] sm:$0xff]
        %v2794 = vld [vmem:[%s8 + $0x10] sm:$0xff]
        %v2795 = vld [vmem:[%s8 + $0x18] sm:$0xff]
        %v2796 = vld [vmem:[%s8 + $0x20] sm:$0xff]
        %v2797 = vld [vmem:[%s8 + $0x28] sm:$0xff]
        %v2798 = vld [vmem:[%s8 + $0x30] sm:$0xff]
        %v2799 = vld [vmem:[%s8 + $0x38] sm:$0xff]
        %v2800 = vld [vmem:[%s8 + $0x40] sm:$0xff]
        %v2801 = vld [vmem:[%s8 + $0x48] sm:$0xff]
        %v2802 = vld [vmem:[%s8 + $0x50] sm:$0xff]
        %v2803 = vld [vmem:[%s8 + $0x58] sm:$0xff]
        %v2804 = vld [vmem:[#allocation3] sm:$0xff]
        %v2805 = vld [vmem:[#allocation3 + $0x8] sm:$0xff]
        %v2806 = vld [vmem:[#allocation3 + $0x10] sm:$0xff]
        %v2807 = vld [vmem:[#allocation3 + $0x18] sm:$0xff]
        %v2808 = vld [vmem:[#allocation3 + $0x20] sm:$0xff]
        %v2809 = vld [vmem:[#allocation3 + $0x28] sm:$0xff]
        %v2810 = vld [vmem:[#allocation3 + $0x30] sm:$0xff]
        %v2811 = vld [vmem:[#allocation3 + $0x38] sm:$0xff]
        %v2812 = vld [vmem:[#allocation3 + $0x40] sm:$0xff]
        %v2813 = vld [vmem:[#allocation3 + $0x48] sm:$0xff]
        %v2814 = vld [vmem:[#allocation3 + $0x50] sm:$0xff]
        %v2815 = vld [vmem:[#allocation3 + $0x58] sm:$0xff]
        %v2816 = vld [vmem:[#allocation3 + $0x60] sm:$0xff]
        %v2817 = vld [vmem:[#allocation3 + $0x68] sm:$0xff]
        %v2818 = vld [vmem:[#allocation3 + $0x70] sm:$0xff]
        %v2819 = vld [vmem:[#allocation3 + $0x78] sm:$0xff]
        %v2820 = vld [vmem:[#allocation3 + $0x80] sm:$0xff]
        %v2821 = vld [vmem:[#allocation3 + $0x88] sm:$0xff]
        %v2822 = vld [vmem:[#allocation3 + $0x90] sm:$0xff]
        %v2823 = vld [vmem:[#allocation3 + $0x98] sm:$0xff]
        %v2824 = vld [vmem:[#allocation3 + $0xa0] sm:$0xff]
        %v2825 = vld [vmem:[#allocation3 + $0xa8] sm:$0xff]
        %v2826 = vld [vmem:[#allocation3 + $0xb0] sm:$0xff]
        %v2827 = vld [vmem:[#allocation3 + $0xb8] sm:$0xff]
        %v2828 = vld [vmem:[#allocation3 + $0xc0] sm:$0xff]
        %v2829 = vld [vmem:[#allocation3 + $0xc8] sm:$0xff]
        %v2830 = vld [vmem:[#allocation3 + $0xd0] sm:$0xff]
        %v2831 = vld [vmem:[#allocation3 + $0xd8] sm:$0xff]
        %v2832 = vld [vmem:[#allocation3 + $0xe0] sm:$0xff]
        %v2833 = vld [vmem:[#allocation3 + $0xe8] sm:$0xff]
        %v2834 = vld [vmem:[#allocation3 + $0xf0] sm:$0xff]
        %v2835 = vld [vmem:[#allocation3 + $0xf8] sm:$0xff]
        %v2836 = vld [vmem:[#allocation3 + $0x100] sm:$0xff]
        %v2837 = vld [vmem:[#allocation3 + $0x108] sm:$0xff]
        %v2838 = vld [vmem:[#allocation3 + $0x110] sm:$0xff]
        %v2839 = vld [vmem:[#allocation3 + $0x118] sm:$0xff]
        %v2840 = vld [vmem:[#allocation3 + $0x120] sm:$0xff]
        %v2841 = vld [vmem:[#allocation3 + $0x128] sm:$0xff]
        %v2842 = vld [vmem:[#allocation3 + $0x130] sm:$0xff]
        %v2843 = vld [vmem:[#allocation3 + $0x138] sm:$0xff]
        %v2844 = vld [vmem:[#allocation3 + $0x140] sm:$0xff]
        %v2845 = vld [vmem:[#allocation3 + $0x148] sm:$0xff]
        %v2846 = vld [vmem:[#allocation3 + $0x150] sm:$0xff]
        %v2847 = vld [vmem:[%s9] sm:$0xff]
        %v2848 = vld [vmem:[%s9 + $0x8] sm:$0xff]
        %v2849 = vld [vmem:[%s9 + $0x10] sm:$0xff]
        %v2850 = vld [vmem:[%s9 + $0x18] sm:$0xff]
        %2852 = vset.pattern.permute.xlu0 0
        %2853 = vperm.xlu0 %2852, %v2847
        %v2854 = vpop.permute.xlu0 %2853
        %2857 = vset.pattern.permute.xlu0 0
        %2858 = vperm.xlu0 %2857, %v2848
        %v2859 = vpop.permute.xlu0 %2858
        %2862 = vset.pattern.permute.xlu0 0
        %2863 = vperm.xlu0 %2862, %v2849
        %v2864 = vpop.permute.xlu0 %2863
        %2867 = vset.pattern.permute.xlu0 0
        %2868 = vperm.xlu0 %2867, %v2850
        %v2869 = vpop.permute.xlu0 %2868
        %v2872 = vsel %vm2005, %v2794, 0
        %v2875 = vsel %vm2005, %v2797, 0
        %v2878 = vsel %vm2005, %v2800, 0
        %v2881 = vsel %vm2005, %v2803, 0
        %2883 = vmatprep.subr.mxu0 0.0
        %2884 = vmatpush1.msra.mxu0 %v2804
        %2885 = vmatprep.subr.mxu0 0.0
        %2886 = vmatpush1.msra.mxu0 %v2805
        %2887 = vmatprep.subr.mxu0 0.0
        %2888 = vmatpush1.msra.mxu0 %v2806
        %2889 = vmatprep.subr.mxu0 0.0
        %2890 = vmatpush1.msra.mxu0 %v2807
        %2891 = vmatprep.subr.mxu0 0.0
        %2892 = vmatpush1.msra.mxu0 %v2808
        %2893 = vmatprep.subr.mxu0 0.0
        %2894 = vmatpush1.msra.mxu0 %v2809
        %2895 = vmatprep.subr.mxu0 0.0
        %2896 = vmatpush1.msra.mxu0 %v2810
        %2897 = vmatprep.subr.mxu0 0.0
        %2898 = vmatpush1.msra.mxu0 %v2811
        %2899 = vmatprep.subr.mxu0 0.0
        %2900 = vmatpush1.msra.mxu0 %v2812
        %2901 = vmatprep.subr.mxu0 0.0
        %2902 = vmatpush1.msra.mxu0 %v2813
        %2903 = vmatprep.subr.mxu0 0.0
        %2904 = vmatpush1.msra.mxu0 %v2814
        %2905 = vmatprep.subr.mxu0 0.0
        %2906 = vmatpush1.msra.mxu0 %v2815
        %2907 = vmatprep.subr.mxu0 0.0
        %2908 = vmatpush1.msra.mxu0 %v2816
        %2909 = vmatprep.subr.mxu0 0.0
        %2910 = vmatpush1.msra.mxu0 %v2817
        %2911 = vmatprep.subr.mxu0 0.0
        %2912 = vmatpush1.msra.mxu0 %v2818
        %2913 = vmatprep.subr.mxu0 0.0
        %2914 = vmatpush1.msra.mxu0 %v2819
        %2915 = vmatprep.subr.mxu0 0.0
        %2916 = vmatpush1.msra.mxu0 %v2820
        %2917 = vmatprep.subr.mxu0 0.0
        %2918 = vmatpush1.msra.mxu0 %v2821
        %2919 = vmatprep.subr.mxu0 0.0
        %2920 = vmatpush1.msra.mxu0 %v2822
        %2921 = vmatprep.subr.mxu0 0.0
        %2922 = vmatpush1.msra.mxu0 %v2823
        %2923 = vmatprep.subr.mxu0 0.0
        %2924 = vmatpush1.msra.mxu0 %v2824
        %2925 = vmatprep.subr.mxu0 0.0
        %2926 = vmatpush1.msra.mxu0 %v2825
        %2927 = vmatprep.subr.mxu0 0.0
        %2928 = vmatpush1.msra.mxu0 %v2826
        %2929 = vmatprep.subr.mxu0 0.0
        %2930 = vmatpush1.msra.mxu0 %v2827
        %2931 = vmatprep.subr.mxu0 0.0
        %2932 = vmatpush1.msra.mxu0 %v2828
        %2933 = vmatprep.subr.mxu0 0.0
        %2934 = vmatpush1.msra.mxu0 %v2829
        %2935 = vmatprep.subr.mxu0 0.0
        %2936 = vmatpush1.msra.mxu0 %v2830
        %2937 = vmatprep.subr.mxu0 0.0
        %2938 = vmatpush1.msra.mxu0 %v2831
        %2939 = vmatprep.subr.mxu0 0.0
        %2940 = vmatpush1.msra.mxu0 %v2832
        %2941 = vmatprep.subr.mxu0 0.0
        %2942 = vmatpush1.msra.mxu0 %v2833
        %2943 = vmatprep.subr.mxu0 0.0
        %2944 = vmatpush1.msra.mxu0 %v2834
        %2945 = vmatprep.subr.mxu0 0.0
        %2946 = vmatpush1.msra.mxu0 %v2835
        %2947 = vmatprep.mubr.f32.mxu0 %v2793
        %2948 = vmatmul.mubr.f32.gmra.mrb[0].mxu0 %v2792
        %v2949 = vpop.f32.mrb[0].mxu0
        %v2950 = vadd.f32 %v2854, %v2949
        %v2951 = vpop.f32.mrb[0].mxu0
        %2952 = vmatprep.mubr.f32.mxu0 %v2796
        %2953 = vmatmul.mubr.f32.gmra.mrb[0].mxu0 %v2795
        %v2954 = vpop.f32.mrb[0].mxu0
        %v2955 = vadd.f32 %v2859, %v2954
        %v2956 = vpop.f32.mrb[0].mxu0
        %2957 = vmatprep.mubr.f32.mxu0 %v2799
        %2958 = vmatmul.mubr.f32.gmra.mrb[0].mxu0 %v2798
        %v2959 = vpop.f32.mrb[0].mxu0
        %v2960 = vadd.f32 %v2864, %v2959
        %v2961 = vpop.f32.mrb[0].mxu0
        %2962 = vmatprep.mubr.f32.mxu0 %v2802
        %2963 = vmatmul.mubr.f32.gmra.mrb[0].mxu0 %v2801
        %v2964 = vpop.f32.mrb[0].mxu0
        %v2965 = vadd.f32 %v2869, %v2964
        %v2966 = vpop.f32.mrb[0].mxu0
        %2967 = vdwg.mxu0
        %2968 = vmatprep.subr.mxu0 0.0
        %2969 = vmatpush1.msra.mxu0 %v2836
        %2970 = vmatprep.subr.mxu0 0.0
        %2971 = vmatpush1.msra.mxu0 %v2837
        %2972 = vmatprep.subr.mxu0 0.0
        %2973 = vmatpush1.msra.mxu0 %v2838
        %2974 = vmatprep.subr.mxu0 0.0
        %2975 = vmatpush1.msra.mxu0 %v2839
        %2976 = vmatprep.subr.mxu0 0.0
        %2977 = vmatpush1.msra.mxu0 %v2840
        %2978 = vmatprep.subr.mxu0 0.0
        %2979 = vmatpush1.msra.mxu0 %v2841
        %2980 = vmatprep.subr.mxu0 0.0
        %2981 = vmatpush1.msra.mxu0 %v2842
        %2982 = vmatprep.subr.mxu0 0.0
        %2983 = vmatpush1.msra.mxu0 %v2843
        %2984 = vmatprep.subr.mxu0 0.0
        %2985 = vmatpush1.msra.mxu0 %v2844
        %2986 = vmatprep.subr.mxu0 0.0
        %2987 = vmatpush1.msra.mxu0 %v2845
        %2988 = vmatprep.subr.mxu0 0.0
        %2989 = vmatpush1.msra.mxu0 %v2846
        %2990 = vmatprep.subr.mxu0 0.0
        %2991 = vmatpush1.msra.mxu0 0.0
        %2992 = vmatprep.subr.mxu0 0.0
        %2993 = vmatpush1.msra.mxu0 0.0
        %2994 = vmatprep.subr.mxu0 0.0
        %2995 = vmatpush1.msra.mxu0 0.0
        %2996 = vmatprep.subr.mxu0 0.0
        %2997 = vmatpush1.msra.mxu0 0.0
        %2998 = vmatprep.subr.mxu0 0.0
        %2999 = vmatpush1.msra.mxu0 0.0
        %3000 = vmatprep.subr.mxu0 0.0
        %3001 = vmatpush1.msra.mxu0 0.0
        %3002 = vmatprep.subr.mxu0 0.0
        %3003 = vmatpush1.msra.mxu0 0.0
        %3004 = vmatprep.subr.mxu0 0.0
        %3005 = vmatpush1.msra.mxu0 0.0
        %3006 = vmatprep.subr.mxu0 0.0
        %3007 = vmatpush1.msra.mxu0 0.0
        %3008 = vmatprep.subr.mxu0 0.0
        %3009 = vmatpush1.msra.mxu0 0.0
        %3010 = vmatprep.subr.mxu0 0.0
        %3011 = vmatpush1.msra.mxu0 0.0
        %3012 = vmatprep.subr.mxu0 0.0
        %3013 = vmatpush1.msra.mxu0 0.0
        %3014 = vmatprep.subr.mxu0 0.0
        %3015 = vmatpush1.msra.mxu0 0.0
        %3016 = vmatprep.subr.mxu0 0.0
        %3017 = vmatpush1.msra.mxu0 0.0
        %3018 = vmatprep.subr.mxu0 0.0
        %3019 = vmatpush1.msra.mxu0 0.0
        %3020 = vmatprep.subr.mxu0 0.0
        %3021 = vmatpush1.msra.mxu0 0.0
        %3022 = vmatprep.subr.mxu0 0.0
        %3023 = vmatpush1.msra.mxu0 0.0
        %3024 = vmatprep.subr.mxu0 0.0
        %3025 = vmatpush1.msra.mxu0 0.0
        %3026 = vmatprep.subr.mxu0 0.0
        %3027 = vmatpush1.msra.mxu0 0.0
        %3028 = vmatprep.subr.mxu0 0.0
        %3029 = vmatpush1.msra.mxu0 0.0
        %3030 = vmatprep.subr.mxu0 0.0
        %3031 = vmatpush1.msra.mxu0 0.0
        %3032 = vmatprep.mubr.f32.mxu0 0.0
        %3033 = vmatmul.mubr.f32.gmra.mrb[0].mxu0 %v2872
        %v3034 = vpop.f32.mrb[0].mxu0
        %v3035 = vadd.f32 %v2950, %v3034
        %v3036 = vpop.f32.mrb[0].mxu0
        %3037 = vmatprep.mubr.f32.mxu0 0.0
        %3038 = vmatmul.mubr.f32.gmra.mrb[0].mxu0 %v2875
        %v3039 = vpop.f32.mrb[0].mxu0
        %v3040 = vadd.f32 %v2955, %v3039
        %v3041 = vpop.f32.mrb[0].mxu0
        %3042 = vmatprep.mubr.f32.mxu0 0.0
        %3043 = vmatmul.mubr.f32.gmra.mrb[0].mxu0 %v2878
        %v3044 = vpop.f32.mrb[0].mxu0
        %v3045 = vadd.f32 %v2960, %v3044
        %v3046 = vpop.f32.mrb[0].mxu0
        %3047 = vmatprep.mubr.f32.mxu0 0.0
        %3048 = vmatmul.mubr.f32.gmra.mrb[0].mxu0 %v2881
        %v3049 = vpop.f32.mrb[0].mxu0
        %v3050 = vadd.f32 %v2965, %v3049
        %v3051 = vpop.f32.mrb[0].mxu0
        %3052 = vdwg.mxu0
        %v3053 = vmax.f32 %v3035, 0.0
        %v3054 = vmax.f32 %v3040, 0.0
        %v3055 = vmax.f32 %v3045, 0.0
        %v3056 = vmax.f32 %v3050, 0.0
        %v3057 = vld [vmem:[%s10] sm:$0xff]
        %v3058 = vld [vmem:[%s10 + $0x8] sm:$0xff]
        %v3059 = vld [vmem:[%s10 + $0x10] sm:$0xff]
        %v3060 = vld [vmem:[%s10 + $0x18] sm:$0xff]
        %v3062 = vsel %vm497, %v3057, 0
        %v3065 = vsel %vm497, %v3058, 0
        %v3068 = vsel %vm497, %v3059, 0
        %v3071 = vsel %vm497, %v3060, 0
        %3073 = vmatprep.subr.mxu0 0.0
        %3074 = vmatpush1.msra.mxu0 %v495
        %3075 = vmatprep.subr.mxu0 0.0
        %3076 = vmatpush1.msra.mxu0 0.0
        %3077 = vmatprep.subr.mxu0 0.0
        %3078 = vmatpush1.msra.mxu0 0.0
        %3079 = vmatprep.subr.mxu0 0.0
        %3080 = vmatpush1.msra.mxu0 0.0
        %3081 = vmatprep.subr.mxu0 0.0
        %3082 = vmatpush1.msra.mxu0 0.0
        %3083 = vmatprep.subr.mxu0 0.0
        %3084 = vmatpush1.msra.mxu0 0.0
        %3085 = vmatprep.subr.mxu0 0.0
        %3086 = vmatpush1.msra.mxu0 0.0
        %3087 = vmatprep.subr.mxu0 0.0
        %3088 = vmatpush1.msra.mxu0 0.0
        %3089 = vmatprep.subr.mxu0 0.0
        %3090 = vmatpush1.msra.mxu0 0.0
        %3091 = vmatprep.subr.mxu0 0.0
        %3092 = vmatpush1.msra.mxu0 0.0
        %3093 = vmatprep.subr.mxu0 0.0
        %3094 = vmatpush1.msra.mxu0 0.0
        %3095 = vmatprep.subr.mxu0 0.0
        %3096 = vmatpush1.msra.mxu0 0.0
        %3097 = vmatprep.subr.mxu0 0.0
        %3098 = vmatpush1.msra.mxu0 0.0
        %3099 = vmatprep.subr.mxu0 0.0
        %3100 = vmatpush1.msra.mxu0 0.0
        %3101 = vmatprep.subr.mxu0 0.0
        %3102 = vmatpush1.msra.mxu0 0.0
        %3103 = vmatprep.subr.mxu0 0.0
        %3104 = vmatpush1.msra.mxu0 0.0
        %3105 = vmatprep.subr.mxu0 0.0
        %3106 = vmatpush1.msra.mxu0 0.0
        %3107 = vmatprep.subr.mxu0 0.0
        %3108 = vmatpush1.msra.mxu0 0.0
        %3109 = vmatprep.subr.mxu0 0.0
        %3110 = vmatpush1.msra.mxu0 0.0
        %3111 = vmatprep.subr.mxu0 0.0
        %3112 = vmatpush1.msra.mxu0 0.0
        %3113 = vmatprep.subr.mxu0 0.0
        %3114 = vmatpush1.msra.mxu0 0.0
        %3115 = vmatprep.subr.mxu0 0.0
        %3116 = vmatpush1.msra.mxu0 0.0
        %3117 = vmatprep.subr.mxu0 0.0
        %3118 = vmatpush1.msra.mxu0 0.0
        %3119 = vmatprep.subr.mxu0 0.0
        %3120 = vmatpush1.msra.mxu0 0.0
        %3121 = vmatprep.subr.mxu0 0.0
        %3122 = vmatpush1.msra.mxu0 0.0
        %3123 = vmatprep.subr.mxu0 0.0
        %3124 = vmatpush1.msra.mxu0 0.0
        %3125 = vmatprep.subr.mxu0 0.0
        %3126 = vmatpush1.msra.mxu0 0.0
        %3127 = vmatprep.subr.mxu0 0.0
        %3128 = vmatpush1.msra.mxu0 0.0
        %3129 = vmatprep.subr.mxu0 0.0
        %3130 = vmatpush1.msra.mxu0 0.0
        %3131 = vmatprep.subr.mxu0 0.0
        %3132 = vmatpush1.msra.mxu0 0.0
        %3133 = vmatprep.subr.mxu0 0.0
        %3134 = vmatpush1.msra.mxu0 0.0
        %3135 = vmatprep.subr.mxu0 0.0
        %3136 = vmatpush1.msra.mxu0 0.0
        %3137 = vmatprep.mubr.f32.mxu0 0.0
        %3138 = vmatmul.mubr.f32.gmra.mrb[0].mxu0 %v3062
        %v3139 = vpop.f32.mrb[0].mxu0
        %v3140 = vadd.f32 0.0, %v3139
        %v3141 = vpop.f32.mrb[0].mxu0
        %3142 = vmatprep.mubr.f32.mxu0 0.0
        %3143 = vmatmul.mubr.f32.gmra.mrb[0].mxu0 %v3065
        %v3144 = vpop.f32.mrb[0].mxu0
        %v3145 = vadd.f32 0.0, %v3144
        %v3146 = vpop.f32.mrb[0].mxu0
        %3147 = vmatprep.mubr.f32.mxu0 0.0
        %3148 = vmatmul.mubr.f32.gmra.mrb[0].mxu0 %v3068
        %v3149 = vpop.f32.mrb[0].mxu0
        %v3150 = vadd.f32 0.0, %v3149
        %v3151 = vpop.f32.mrb[0].mxu0
        %3152 = vmatprep.mubr.f32.mxu0 0.0
        %3153 = vmatmul.mubr.f32.gmra.mrb[0].mxu0 %v3071
        %v3154 = vpop.f32.mrb[0].mxu0
        %v3155 = vadd.f32 0.0, %v3154
        %v3156 = vpop.f32.mrb[0].mxu0
        %3157 = vdwg.mxu0
        %v3158 = vadd.f32 %v3053, %v3140
        %v3159 = vadd.f32 %v3054, %v3145
        %v3160 = vadd.f32 %v3055, %v3150
        %v3161 = vadd.f32 %v3056, %v3155
        %v3162 = vld [vmem:[%s11] sm:$0xff]
        %v3163 = vld [vmem:[%s11 + $0x8] sm:$0xff]
        %v3164 = vld [vmem:[%s11 + $0x10] sm:$0xff]
        %v3165 = vld [vmem:[%s11 + $0x18] sm:$0xff]
        %3167 = vset.pattern.permute.xlu0 0
        %3168 = vperm.xlu0 %3167, %v3162
        %v3169 = vpop.permute.xlu0 %3168
        %3172 = vset.pattern.permute.xlu0 0
        %3173 = vperm.xlu0 %3172, %v3163
        %v3174 = vpop.permute.xlu0 %3173
        %3177 = vset.pattern.permute.xlu0 0
        %3178 = vperm.xlu0 %3177, %v3164
        %v3179 = vpop.permute.xlu0 %3178
        %3182 = vset.pattern.permute.xlu0 0
        %3183 = vperm.xlu0 %3182, %v3165
        %v3184 = vpop.permute.xlu0 %3183
        %v3186 = vadd.f32 %v3158, %v3169
        %v3187 = vadd.f32 %v3159, %v3174
        %v3188 = vadd.f32 %v3160, %v3179
        %v3189 = vadd.f32 %v3161, %v3184
        %v3190 = vmax.f32 %v3186, 0.0
        %v3191 = vmax.f32 %v3187, 0.0
        %v3192 = vmax.f32 %v3188, 0.0
        %v3193 = vmax.f32 %v3189, 0.0
        %3194 = vst [vmem:[%s480] sm:$0xff] %v3190
        %3195 = vst [vmem:[%s480 + $0x8] sm:$0xff] %v3191
        %3196 = vst [vmem:[%s480 + $0x10] sm:$0xff] %v3192
        %3197 = vst [vmem:[%s480 + $0x18] sm:$0xff] %v3193
        %s3198 = sand.u32 %s296, 1
        %s3199 = scalar_lea.sflag [#allocation7], %s3198
        %s3200 = sand.u32 %s296, 1
        %s3201 = smul.addr %s3200, 32
        %s3202 = scalar_lea.vmem [#allocation14], %s3201
        // Predicated region
        $region89: #{tpu_custom_call.1} parent=67 // pred_check
          %p3203 = pneg %p306
        $region90: #{tpu_custom_call.1} parent=67 // pred_check_branch
          %3205 = sbr.rel (%p3203) target = $region92
        $region91: #{tpu_custom_call.1} parent=67 // pred_region
          %s3207 = ssub.s32 512, 512
          %3208 = vsyncadd %s3199, %s3207
          %s3209 = smul.addr %s31, 4
          %s3210 = smul.addr %s3209, 128
          %s3211 = scalar_lea.hbm %s12, %s3210
          %s3212 = sshll.u32 %s3202, 4
          %s3213 = int_to_ptr.vmem [resolvable:$true] %s3212
          %3218 = dma.vmem_to_hbm [thread:$0]  %s3213, 512, %s3211, %s3199, 128, 128, 8
        $region92: #{tpu_custom_call.1} parent=67 // pred_fallthru
          _
      $region68: #{tpu_custom_call.1} parent=5 // pred_fallthru
        _
      %p3219 = scmp.le.s32.totalorder 2, %s26
      // Predicated region
      $region93: #{tpu_custom_call.1} parent=5 // pred_check
        %p3220 = pneg %p3219
      $region94: #{tpu_custom_call.1} parent=5 // pred_check_branch
        %3222 = sbr.rel (%p3220) target = $region96
      $region95: #{tpu_custom_call.1} parent=5 // pred_region
        %s3223 = ssub.s32 %s26, 2
        // Predicated region
        $region97: #{tpu_custom_call.1} parent=95 // pred_check
          %p3224 = pneg %p312
        $region98: #{tpu_custom_call.1} parent=95 // pred_check_branch
          %3226 = sbr.rel (%p3224) target = $region100
        $region99: #{tpu_custom_call.1} parent=95 // pred_region
          %s3227 = sand.u32 %s297, 1
          %s3228 = scalar_lea.sflag [#allocation7], %s3227
          %s3229 = sand.u32 %s297, 1
          %s3230 = smul.addr %s3229, 32
          %s3231 = scalar_lea.vmem [#allocation14], %s3230
          %3232 = dma.done %s3228, 512
        $region100: #{tpu_custom_call.1} parent=95 // pred_fallthru
          _
      $region96: #{tpu_custom_call.1} parent=5 // pred_fallthru
        _
    $region6: #{tpu_custom_call.1} parent=1 // loop_footer
      %s30 = sadd.s32 1, %s26
    $region7: #{tpu_custom_call.1} parent=1 // loop_footer_branch
      %25 = sbr.rel target = $region3
    $region8: #{tpu_custom_call.1} parent=1 // loop_exit
      _
    %3233 = vsyncpa [#allocation6], 1
    %s3234 = scalar_lea.sflag [#allocation6], 1
    %3235 = vsyncpa %s3234, 1
    %3236 = vsyncpa [#allocation9], 1
    %3237 = vsyncpa [#allocation12], 1
    %3238 = vsyncpa [#allocation7], 1
    %s3239 = scalar_lea.sflag [#allocation7], 1
    %3240 = vsyncpa %s3239, 1

</llo_original>
